<compile_context>
chip_gen: v7x
topology: tpu7x:2x2x1
jax: 0.10.0
libtpu: 0.0.40
codegen_flags: <defaults>
</compile_context>

<pallas_src>
import math

import numpy as np
import jax
import jax.numpy as jnp
from jax.experimental import pallas as pl
from jax.experimental.pallas import tpu as pltpu

# Stand-ins for the globals used by the PyTorch module.
VOCAB = 32        # len(chatbot_ws_input)
PAD = 0           # chatbot_ws_input.PAD  (padding_idx and padding_value)
EMBED_DIM = 32    # chatbot_embedding_dim
HIDDEN = 32       # hidden_size
NUM_LAYERS = 1    # num_layers
# TODO(synk): num_layers > 1 would stack another recurrence over the layer-1
# outputs; kept at 1 here.

_LANE = 128
_SUBLANE = 8


def _round_up(x, m):
    return (x + m - 1) // m * m


def encoder_kernel(tokens_ref, lengths_ref, wx_ref, whh_ref, bx_ref, bhn_ref,
                   out_ref, hidden_ref, gx_ref, mask_ref):
    """Batched input projection + unrolled, length-masked GRU recurrence.

    tokens_ref:  (T*Bp, 1)    int32  time-major token ids (batch padded to Bp)
    lengths_ref: (Bp, 1)      int32  valid lengths (0 for padded batch rows)
    wx_ref:      (Vp, 3*Hp)   f32    emb @ W_ih^T (vocab padded to Vp=128),
                                     gate g in cols [g*Hp, g*Hp+H)
    whh_ref:     (Hp, 3*Hp)   f32    W_hh^T, same padded per-gate layout
    bx_ref:      (1, 3*Hp)    f32    [b_ir+b_hr, b_iz+b_hz, b_in] (padded)
    bhn_ref:     (1, Hp)      f32    b_hn (must stay inside the r*(...) term)
    out_ref:     (T, Bp, Hp)  f32    per-step outputs (PAD at invalid steps)
    hidden_ref:  (Bp, Hp)     f32    final hidden state (last valid step)
    gx_ref:      (T*Bp, 3*Hp) f32    VMEM scratch: precomputed input projection
    mask_ref:    (T, Bp, Hp)  f32    VMEM scratch: precomputed validity masks
    """
    T, Bp, Hp = out_ref.shape
    Vp = wx_ref.shape[0]
    TB = tokens_ref.shape[0]

    # ---- Leading non-recurrent block: input projection for ALL timesteps. ----
    # Vp == 128: lane-full one-hot compare, no masked-lane handling; K < 128
    # would cost a full MXU pass anyway.
    tok = tokens_ref[...]                                             # (T*Bp, 1)
    vocab_iota = jax.lax.broadcasted_iota(jnp.int32, (TB, Vp), 1)
    onehot = (tok == vocab_iota).astype(jnp.float32)                  # (T*Bp, Vp)
    gx_ref[...] = (jnp.dot(onehot, wx_ref[...],
                           preferred_element_type=jnp.float32)
                   + bx_ref[...])                                     # (T*Bp, 3*Hp)

    # ---- Precompute length masks for all timesteps (off the serial path). ----
    t_iota = jax.lax.broadcasted_iota(jnp.int32, (T, Bp, Hp), 0)
    mask_ref[...] = (t_iota < lengths_ref[...].reshape(1, Bp, 1)
                     ).astype(jnp.float32)                            # 1.0 = valid

    # Hoisted loop invariants (JAX does not CSE broadcast_in_dim inside loops).
    bhn = jnp.broadcast_to(bhn_ref[...], (Bp, Hp))                    # (Bp, Hp)
    pad_val = jnp.float32(PAD)

    def sigmoid_eup(x):
        # sigmoid(x) == 0.5*tanh(0.5*x) + 0.5: stays entirely on the EUP slot
        # (no VPU divide on the serialized recurrence path).
        return 0.5 * jnp.tanh(0.5 * x) + 0.5

    def step(t, h):
        row = pl.multiple_of(t * Bp, Bp)
        gx = gx_ref[pl.ds(row, Bp), :]                                # (Bp, 3*Hp)
        gh = jnp.dot(h, whh_ref[...],
                     preferred_element_type=jnp.float32)              # (Bp, 3*Hp)
        # Gate tiles start on 128-lane boundaries: pure vreg selects, no
        # cross-lane relayout inside the serial loop.
        r = sigmoid_eup(gx[:, 0 * Hp:1 * Hp] + gh[:, 0 * Hp:1 * Hp])
        z = sigmoid_eup(gx[:, 1 * Hp:2 * Hp] + gh[:, 1 * Hp:2 * Hp])
        n = jnp.tanh(gx[:, 2 * Hp:3 * Hp] + r * (gh[:, 2 * Hp:3 * Hp] + bhn))
        h_new = (1.0 - z) * n + z * h

        m = mask_ref[t]                                               # (Bp, Hp)
        out_ref[t] = m * h_new + (1.0 - m) * pad_val                  # dense (8,128) store
        return h + m * (h_new - h)                                    # freeze after length

    h0 = jnp.zeros((Bp, Hp), jnp.float32)
    unroll = True if T <= 16 else 8          # cap unroll: bound vreg pressure
    h_final = jax.lax.fori_loop(0, T, step, h0, unroll=unroll)
    hidden_ref[...] = h_final


def init_params(key):
    """Parameters in torch layout (nn.Embedding + nn.GRU default init)."""
    k_emb, k_wih, k_whh, k_bih, k_bhh = jax.random.split(key, 5)
    emb = jax.random.normal(k_emb, (VOCAB, EMBED_DIM), jnp.float32)
    emb = emb.at[PAD].set(0.0)                       # padding_idx=PAD row is zero
    bound = 1.0 / math.sqrt(HIDDEN)
    w_ih = jax.random.uniform(k_wih, (3 * HIDDEN, EMBED_DIM), jnp.float32, -bound, bound)
    w_hh = jax.random.uniform(k_whh, (3 * HIDDEN, HIDDEN), jnp.float32, -bound, bound)
    b_ih = jax.random.uniform(k_bih, (3 * HIDDEN,), jnp.float32, -bound, bound)
    b_hh = jax.random.uniform(k_bhh, (3 * HIDDEN,), jnp.float32, -bound, bound)
    return dict(emb=emb, w_ih=w_ih, w_hh=w_hh, b_ih=b_ih, b_hh=b_hh)


def pack_params(raw):
    """Fold the embedding into W_ih, pad vocab to a full lane (Vp=128) and pad
    every gate to a 128-lane block."""
    H, Hp = HIDDEN, _round_up(HIDDEN, _LANE)
    Vp = _round_up(VOCAB, _LANE)
    emb, w_ih, w_hh = raw["emb"], raw["w_ih"], raw["w_hh"]
    b_ih, b_hh = raw["b_ih"], raw["b_hh"]

    wx_full = emb @ w_ih.T                           # (V, 3H): x @ W_ih^T per token id
    whh_full = w_hh.T                                # (H, 3H)

    wx = jnp.zeros((Vp, 3 * Hp), jnp.float32)        # zero rows for ids >= VOCAB
    whh = jnp.zeros((Hp, 3 * Hp), jnp.float32)
    bx = jnp.zeros((1, 3 * Hp), jnp.float32)
    bhn = jnp.zeros((1, Hp), jnp.float32)
    for g in range(3):                               # gate order [r, z, n]
        wx = wx.at[:VOCAB, g * Hp:g * Hp + H].set(wx_full[:, g * H:(g + 1) * H])
        whh = whh.at[:H, g * Hp:g * Hp + H].set(whh_full[:, g * H:(g + 1) * H])
    # b_ih + b_hh fold additively into gx for r and z; b_hh_n must stay inside
    # the r * (...) term (torch GRU), so only b_ih_n goes into gx.
    bx = bx.at[:, 0 * Hp:0 * Hp + H].set(b_ih[0:H] + b_hh[0:H])
    bx = bx.at[:, 1 * Hp:1 * Hp + H].set(b_ih[H:2 * H] + b_hh[H:2 * H])
    bx = bx.at[:, 2 * Hp:2 * Hp + H].set(b_ih[2 * H:3 * H])
    bhn = bhn.at[:, :H].set(b_hh[2 * H:3 * H])
    return dict(wx=wx, whh=whh, bx=bx, bhn=bhn)


def encoder_forward(packed, tokens, lengths, max_len=None):
    """Mirrors Encoder.forward(input, input_length).

    tokens:  (B, T) int32 batch-first token ids (padded with PAD)
    lengths: (B,)   int32 valid lengths (sorted descending, as torch expects)
    returns: (out (B, max_len, H), hidden (num_layers, B, H), out_length (B,))

    max_len defaults to T (no device->host sync, jit-friendly);
    pad_packed_sequence would trim to max(lengths) — pass it statically if
    trimming is wanted.
    """
    B, T = tokens.shape
    H = HIDDEN
    Hp = packed["whh"].shape[0]
    Bp = _round_up(B, _SUBLANE)

    # Pad batch to a sublane multiple; padded rows get length 0 (fully masked).
    tok_p = jnp.full((Bp, T), PAD, jnp.int32).at[:B].set(tokens.astype(jnp.int32))
    len_p = jnp.zeros((Bp,), jnp.int32).at[:B].set(lengths.astype(jnp.int32))
    tokens_tm = jnp.transpose(tok_p, (1, 0)).reshape(T * Bp, 1)    # time-major
    lengths2d = len_p.reshape(Bp, 1)

    out_tm, hidden = pl.pallas_call(
        encoder_kernel,
        out_shape=(jax.ShapeDtypeStruct((T, Bp, Hp), jnp.float32),
                   jax.ShapeDtypeStruct((Bp, Hp), jnp.float32)),
        in_specs=[pl.BlockSpec(memory_space=pltpu.MemorySpace.VMEM)] * 6,
        out_specs=(pl.BlockSpec(memory_space=pltpu.MemorySpace.VMEM),
                   pl.BlockSpec(memory_space=pltpu.MemorySpace.VMEM)),
        scratch_shapes=[pltpu.VMEM((T * Bp, 3 * Hp), jnp.float32),   # gx
                        pltpu.VMEM((T, Bp, Hp), jnp.float32)],       # masks
    )(tokens_tm, lengths2d, packed["wx"], packed["whh"], packed["bx"],
      packed["bhn"])
    # TODO(synk): for large B/T, add a batch "parallel" grid axis (v7x second
    # TensorCore) and a T-chunk "arbitrary" axis so gx/out stream instead of
    # being fully VMEM-resident; unnecessary at these sizes.

    out = jnp.transpose(out_tm, (1, 0, 2))[:B, :, :H]     # (B, T, H) batch_first
    if max_len is None:
        max_len = T
    out = out[:, :max_len, :]
    hidden = hidden[:B, :H].reshape(NUM_LAYERS, B, H)
    return out, hidden, lengths


def encoder_reference(raw, tokens, lengths):
    """Pure-JAX mirror of the PyTorch Encoder (for correctness checking)."""
    H = HIDDEN
    B, T = tokens.shape
    x = raw["emb"][tokens]                                 # (B, T, E)
    w_ih, w_hh, b_ih, b_hh = raw["w_ih"], raw["w_hh"], raw["b_ih"], raw["b_hh"]
    h = jnp.zeros((B, H), jnp.float32)
    outs = []
    for t in range(T):
        gx = x[:, t] @ w_ih.T + b_ih
        gh = h @ w_hh.T + b_hh
        r = jax.nn.sigmoid(gx[:, :H] + gh[:, :H])
        z = jax.nn.sigmoid(gx[:, H:2 * H] + gh[:, H:2 * H])
        n = jnp.tanh(gx[:, 2 * H:] + r * gh[:, 2 * H:])
        h_new = (1.0 - z) * n + z * h
        valid = (t < lengths)[:, None]
        outs.append(jnp.where(valid, h_new, jnp.float32(PAD)))
        h = jnp.where(valid, h_new, h)
    return jnp.stack(outs, axis=1), h.reshape(NUM_LAYERS, B, H)


if __name__ == "__main__":
    B, T = 4, 8
    key = jax.random.PRNGKey(0)
    pkey, tkey = jax.random.split(key)
    raw = init_params(pkey)
    packed = pack_params(raw)

    # Lengths sorted descending (pack_padded_sequence's enforce_sorted default).
    lengths = jnp.array([8, 6, 5, 3], dtype=jnp.int32)
    tokens = jax.random.randint(tkey, (B, T), 1, VOCAB, dtype=jnp.int32)
    pos = jnp.arange(T)[None, :]
    tokens = jnp.where(pos < lengths[:, None], tokens, PAD)   # pad tail with PAD

    fwd = jax.jit(encoder_forward)            # no host readback -> jit-friendly
    out, hidden, out_len = fwd(packed, tokens, lengths)
    jax.block_until_ready((out, hidden))

    assert out.shape == (B, T, HIDDEN)        # max(lengths) == T in this example
    assert hidden.shape == (NUM_LAYERS, B, HIDDEN)

    out_want, hidden_want = encoder_reference(raw, tokens, lengths)
    np.testing.assert_allclose(np.asarray(out), np.asarray(out_want),
                               rtol=1e-3, atol=1e-3)
    np.testing.assert_allclose(np.asarray(hidden), np.asarray(hidden_want),
                               rtol=1e-3, atol=1e-3)
    print("KERNEL_OK")
</pallas_src>

<mosaic_0001>
module attributes {stable_mosaic.version = 11 : i64} {
  func.func @encoder_kernel(%arg0: memref<64x1xi32, #tpu.memory_space<vmem>>, %arg1: memref<8x1xi32, #tpu.memory_space<vmem>>, %arg2: memref<128x384xf32, #tpu.memory_space<vmem>>, %arg3: memref<128x384xf32, #tpu.memory_space<vmem>>, %arg4: memref<1x384xf32, #tpu.memory_space<vmem>>, %arg5: memref<1x128xf32, #tpu.memory_space<vmem>>, %arg6: memref<8x8x128xf32, #tpu.memory_space<vmem>>, %arg7: memref<8x128xf32, #tpu.memory_space<vmem>>, %arg8: memref<64x384xf32, #tpu.memory_space<vmem>>, %arg9: memref<8x8x128xf32, #tpu.memory_space<vmem>>) attributes {dimension_semantics = [], scalar_prefetch = 0 : i64, scratch_operands = 2 : i64, tpu.core_type = #tpu.core_type<tc>} {
    %c0 = arith.constant 0 : index
    %c0_0 = arith.constant 0 : index
    %0 = vector.load %arg0[%c0, %c0_0] : memref<64x1xi32, #tpu.memory_space<vmem>>, vector<64x1xi32>
    %1 = tpu.iota {dimensions = array<i32: 1>} : vector<64x128xi32>
    %2 = vector.broadcast %0 : vector<64x1xi32> to vector<64x128xi32>
    %3 = arith.cmpi eq, %2, %1 : vector<64x128xi32>
    %4 = arith.extui %3 : vector<64x128xi1> to vector<64x128xi32>
    %5 = arith.sitofp %4 : vector<64x128xi32> to vector<64x128xf32>
    %c0_1 = arith.constant 0 : index
    %c0_2 = arith.constant 0 : index
    %6 = vector.load %arg2[%c0_1, %c0_2] : memref<128x384xf32, #tpu.memory_space<vmem>>, vector<128x384xf32>
    %cst = arith.constant dense<0.000000e+00> : vector<64x384xf32>
    %7 = tpu.matmul %5, %6, %cst {dimension_numbers = #tpu.dot_dimension_numbers<[1], [0], [0], [1], [0, 0, 1, 1], [], []>} : vector<64x128xf32>, vector<128x384xf32>, vector<64x384xf32> -> vector<64x384xf32>
    %c0_3 = arith.constant 0 : index
    %c0_4 = arith.constant 0 : index
    %8 = vector.load %arg4[%c0_3, %c0_4] : memref<1x384xf32, #tpu.memory_space<vmem>>, vector<1x384xf32>
    %9 = vector.broadcast %8 : vector<1x384xf32> to vector<64x384xf32>
    %10 = arith.addf %7, %9 : vector<64x384xf32>
    %c0_5 = arith.constant 0 : index
    %c0_6 = arith.constant 0 : index
    %11 = vector.load %arg8[%c0_5, %c0_6] : memref<64x384xf32, #tpu.memory_space<vmem>>, vector<64x384xf32>
    tpu.vector_store %arg8[%c0_5, %c0_6], %10 {strides = array<i32>} : memref<64x384xf32, #tpu.memory_space<vmem>>, vector<64x384xf32>,
    %12 = tpu.iota {dimensions = array<i32: 0>} : vector<8x8x128xi32>
    %c0_7 = arith.constant 0 : index
    %c0_8 = arith.constant 0 : index
    %13 = vector.load %arg1[%c0_7, %c0_8] : memref<8x1xi32, #tpu.memory_space<vmem>>, vector<8x1xi32>
    %14 = vector.shape_cast %13 : vector<8x1xi32> to vector<1x8x1xi32>
    %15 = vector.broadcast %14 : vector<1x8x1xi32> to vector<8x8x128xi32>
    %16 = arith.cmpi slt, %12, %15 : vector<8x8x128xi32>
    %17 = arith.extui %16 : vector<8x8x128xi1> to vector<8x8x128xi32>
    %18 = arith.sitofp %17 : vector<8x8x128xi32> to vector<8x8x128xf32>
    %c0_9 = arith.constant 0 : index
    %c0_10 = arith.constant 0 : index
    %c0_11 = arith.constant 0 : index
    %19 = vector.load %arg9[%c0_9, %c0_10, %c0_11] : memref<8x8x128xf32, #tpu.memory_space<vmem>>, vector<8x8x128xf32>
    tpu.vector_store %arg9[%c0_9, %c0_10, %c0_11], %18 {strides = array<i32>} : memref<8x8x128xf32, #tpu.memory_space<vmem>>, vector<8x8x128xf32>,
    %c0_12 = arith.constant 0 : index
    %c0_13 = arith.constant 0 : index
    %20 = vector.load %arg5[%c0_12, %c0_13] : memref<1x128xf32, #tpu.memory_space<vmem>>, vector<1x128xf32>
    %21 = vector.shape_cast %20 : vector<1x128xf32> to vector<1x128xf32>
    %22 = vector.broadcast %21 : vector<1x128xf32> to vector<8x128xf32>
    %cst_14 = arith.constant 0.000000e+00 : f32
    %23 = vector.broadcast %cst_14 : f32 to vector<8x128xf32>
    %cst_15 = arith.constant 0.000000e+00 : f32
    %c0_i32 = arith.constant 0 : i32
    %c8_i32 = arith.constant 8 : i32
    %24 = arith.muli %c0_i32, %c8_i32 : i32
    %25 = tpu.assume_multiple %24, 8 : i32
    %26 = arith.index_cast %25 : i32 to index
    %c0_16 = arith.constant 0 : index
    %27 = vector.load %arg8[%26, %c0_16] : memref<64x384xf32, #tpu.memory_space<vmem>>, vector<8x384xf32>
    %c0_17 = arith.constant 0 : index
    %c0_18 = arith.constant 0 : index
    %28 = vector.load %arg3[%c0_17, %c0_18] : memref<128x384xf32, #tpu.memory_space<vmem>>, vector<128x384xf32>
    %cst_19 = arith.constant dense<0.000000e+00> : vector<8x384xf32>
    %29 = tpu.matmul %23, %28, %cst_19 {dimension_numbers = #tpu.dot_dimension_numbers<[1], [0], [0], [1], [0, 0, 1, 1], [], []>} : vector<8x128xf32>, vector<128x384xf32>, vector<8x384xf32> -> vector<8x384xf32>
    %30 = vector.extract_strided_slice %27 {offsets = [0, 0], sizes = [8, 128], strides = [1, 1]} : vector<8x384xf32> to vector<8x128xf32>
    %31 = vector.extract_strided_slice %29 {offsets = [0, 0], sizes = [8, 128], strides = [1, 1]} : vector<8x384xf32> to vector<8x128xf32>
    %32 = arith.addf %30, %31 : vector<8x128xf32>
    %cst_20 = arith.constant 5.000000e-01 : f32
    %33 = vector.broadcast %cst_20 : f32 to vector<8x128xf32>
    %34 = arith.mulf %33, %32 : vector<8x128xf32>
    %35 = math.tanh %34 : vector<8x128xf32>
    %cst_21 = arith.constant 5.000000e-01 : f32
    %36 = vector.broadcast %cst_21 : f32 to vector<8x128xf32>
    %37 = arith.mulf %36, %35 : vector<8x128xf32>
    %cst_22 = arith.constant 5.000000e-01 : f32
    %38 = vector.broadcast %cst_22 : f32 to vector<8x128xf32>
    %39 = arith.addf %37, %38 : vector<8x128xf32>
    %40 = vector.extract_strided_slice %27 {offsets = [0, 128], sizes = [8, 128], strides = [1, 1]} : vector<8x384xf32> to vector<8x128xf32>
    %41 = vector.extract_strided_slice %29 {offsets = [0, 128], sizes = [8, 128], strides = [1, 1]} : vector<8x384xf32> to vector<8x128xf32>
    %42 = arith.addf %40, %41 : vector<8x128xf32>
    %cst_23 = arith.constant 5.000000e-01 : f32
    %43 = vector.broadcast %cst_23 : f32 to vector<8x128xf32>
    %44 = arith.mulf %43, %42 : vector<8x128xf32>
    %45 = math.tanh %44 : vector<8x128xf32>
    %cst_24 = arith.constant 5.000000e-01 : f32
    %46 = vector.broadcast %cst_24 : f32 to vector<8x128xf32>
    %47 = arith.mulf %46, %45 : vector<8x128xf32>
    %cst_25 = arith.constant 5.000000e-01 : f32
    %48 = vector.broadcast %cst_25 : f32 to vector<8x128xf32>
    %49 = arith.addf %47, %48 : vector<8x128xf32>
    %50 = vector.extract_strided_slice %27 {offsets = [0, 256], sizes = [8, 128], strides = [1, 1]} : vector<8x384xf32> to vector<8x128xf32>
    %51 = vector.extract_strided_slice %29 {offsets = [0, 256], sizes = [8, 128], strides = [1, 1]} : vector<8x384xf32> to vector<8x128xf32>
    %52 = arith.addf %51, %22 : vector<8x128xf32>
    %53 = arith.mulf %39, %52 : vector<8x128xf32>
    %54 = arith.addf %50, %53 : vector<8x128xf32>
    %55 = math.tanh %54 : vector<8x128xf32>
    %cst_26 = arith.constant 1.000000e+00 : f32
    %56 = vector.broadcast %cst_26 : f32 to vector<8x128xf32>
    %57 = arith.subf %56, %49 : vector<8x128xf32>
    %58 = arith.mulf %57, %55 : vector<8x128xf32>
    %59 = arith.mulf %49, %23 : vector<8x128xf32>
    %60 = arith.addf %58, %59 : vector<8x128xf32>
    %61 = arith.index_cast %c0_i32 : i32 to index
    %c0_27 = arith.constant 0 : index
    %c0_28 = arith.constant 0 : index
    %62 = vector.load %arg9[%61, %c0_27, %c0_28] : memref<8x8x128xf32, #tpu.memory_space<vmem>>, vector<1x8x128xf32>
    %63 = vector.shape_cast %62 : vector<1x8x128xf32> to vector<8x128xf32>
    %64 = arith.mulf %63, %60 : vector<8x128xf32>
    %cst_29 = arith.constant 1.000000e+00 : f32
    %65 = vector.broadcast %cst_29 : f32 to vector<8x128xf32>
    %66 = arith.subf %65, %63 : vector<8x128xf32>
    %67 = vector.broadcast %cst_15 : f32 to vector<8x128xf32>
    %68 = arith.mulf %66, %67 : vector<8x128xf32>
    %69 = arith.addf %64, %68 : vector<8x128xf32>
    %70 = arith.index_cast %c0_i32 : i32 to index
    %c0_30 = arith.constant 0 : index
    %c0_31 = arith.constant 0 : index
    %71 = vector.load %arg6[%70, %c0_30, %c0_31] : memref<8x8x128xf32, #tpu.memory_space<vmem>>, vector<1x8x128xf32>
    %72 = vector.shape_cast %71 : vector<1x8x128xf32> to vector<8x128xf32>
    %73 = vector.shape_cast %69 : vector<8x128xf32> to vector<1x8x128xf32>
    tpu.vector_store %arg6[%70, %c0_30, %c0_31], %73 {strides = array<i32>} : memref<8x8x128xf32, #tpu.memory_space<vmem>>, vector<1x8x128xf32>,
    %74 = arith.subf %60, %23 : vector<8x128xf32>
    %75 = arith.mulf %63, %74 : vector<8x128xf32>
    %76 = arith.addf %23, %75 : vector<8x128xf32>
    %c1_i32 = arith.constant 1 : i32
    %c8_i32_32 = arith.constant 8 : i32
    %77 = arith.muli %c1_i32, %c8_i32_32 : i32
    %78 = tpu.assume_multiple %77, 8 : i32
    %79 = arith.index_cast %78 : i32 to index
    %c0_33 = arith.constant 0 : index
    %80 = vector.load %arg8[%79, %c0_33] : memref<64x384xf32, #tpu.memory_space<vmem>>, vector<8x384xf32>
    %c0_34 = arith.constant 0 : index
    %c0_35 = arith.constant 0 : index
    %81 = vector.load %arg3[%c0_34, %c0_35] : memref<128x384xf32, #tpu.memory_space<vmem>>, vector<128x384xf32>
    %cst_36 = arith.constant dense<0.000000e+00> : vector<8x384xf32>
    %82 = tpu.matmul %76, %81, %cst_36 {dimension_numbers = #tpu.dot_dimension_numbers<[1], [0], [0], [1], [0, 0, 1, 1], [], []>} : vector<8x128xf32>, vector<128x384xf32>, vector<8x384xf32> -> vector<8x384xf32>
    %83 = vector.extract_strided_slice %80 {offsets = [0, 0], sizes = [8, 128], strides = [1, 1]} : vector<8x384xf32> to vector<8x128xf32>
    %84 = vector.extract_strided_slice %82 {offsets = [0, 0], sizes = [8, 128], strides = [1, 1]} : vector<8x384xf32> to vector<8x128xf32>
    %85 = arith.addf %83, %84 : vector<8x128xf32>
    %cst_37 = arith.constant 5.000000e-01 : f32
    %86 = vector.broadcast %cst_37 : f32 to vector<8x128xf32>
    %87 = arith.mulf %86, %85 : vector<8x128xf32>
    %88 = math.tanh %87 : vector<8x128xf32>
    %cst_38 = arith.constant 5.000000e-01 : f32
    %89 = vector.broadcast %cst_38 : f32 to vector<8x128xf32>
    %90 = arith.mulf %89, %88 : vector<8x128xf32>
    %cst_39 = arith.constant 5.000000e-01 : f32
    %91 = vector.broadcast %cst_39 : f32 to vector<8x128xf32>
    %92 = arith.addf %90, %91 : vector<8x128xf32>
    %93 = vector.extract_strided_slice %80 {offsets = [0, 128], sizes = [8, 128], strides = [1, 1]} : vector<8x384xf32> to vector<8x128xf32>
    %94 = vector.extract_strided_slice %82 {offsets = [0, 128], sizes = [8, 128], strides = [1, 1]} : vector<8x384xf32> to vector<8x128xf32>
    %95 = arith.addf %93, %94 : vector<8x128xf32>
    %cst_40 = arith.constant 5.000000e-01 : f32
    %96 = vector.broadcast %cst_40 : f32 to vector<8x128xf32>
    %97 = arith.mulf %96, %95 : vector<8x128xf32>
    %98 = math.tanh %97 : vector<8x128xf32>
    %cst_41 = arith.constant 5.000000e-01 : f32
    %99 = vector.broadcast %cst_41 : f32 to vector<8x128xf32>
    %100 = arith.mulf %99, %98 : vector<8x128xf32>
    %cst_42 = arith.constant 5.000000e-01 : f32
    %101 = vector.broadcast %cst_42 : f32 to vector<8x128xf32>
    %102 = arith.addf %100, %101 : vector<8x128xf32>
    %103 = vector.extract_strided_slice %80 {offsets = [0, 256], sizes = [8, 128], strides = [1, 1]} : vector<8x384xf32> to vector<8x128xf32>
    %104 = vector.extract_strided_slice %82 {offsets = [0, 256], sizes = [8, 128], strides = [1, 1]} : vector<8x384xf32> to vector<8x128xf32>
    %105 = arith.addf %104, %22 : vector<8x128xf32>
    %106 = arith.mulf %92, %105 : vector<8x128xf32>
    %107 = arith.addf %103, %106 : vector<8x128xf32>
    %108 = math.tanh %107 : vector<8x128xf32>
    %cst_43 = arith.constant 1.000000e+00 : f32
    %109 = vector.broadcast %cst_43 : f32 to vector<8x128xf32>
    %110 = arith.subf %109, %102 : vector<8x128xf32>
    %111 = arith.mulf %110, %108 : vector<8x128xf32>
    %112 = arith.mulf %102, %76 : vector<8x128xf32>
    %113 = arith.addf %111, %112 : vector<8x128xf32>
    %114 = arith.index_cast %c1_i32 : i32 to index
    %c0_44 = arith.constant 0 : index
    %c0_45 = arith.constant 0 : index
    %115 = vector.load %arg9[%114, %c0_44, %c0_45] : memref<8x8x128xf32, #tpu.memory_space<vmem>>, vector<1x8x128xf32>
    %116 = vector.shape_cast %115 : vector<1x8x128xf32> to vector<8x128xf32>
    %117 = arith.mulf %116, %113 : vector<8x128xf32>
    %cst_46 = arith.constant 1.000000e+00 : f32
    %118 = vector.broadcast %cst_46 : f32 to vector<8x128xf32>
    %119 = arith.subf %118, %116 : vector<8x128xf32>
    %120 = vector.broadcast %cst_15 : f32 to vector<8x128xf32>
    %121 = arith.mulf %119, %120 : vector<8x128xf32>
    %122 = arith.addf %117, %121 : vector<8x128xf32>
    %123 = arith.index_cast %c1_i32 : i32 to index
    %c0_47 = arith.constant 0 : index
    %c0_48 = arith.constant 0 : index
    %124 = vector.load %arg6[%123, %c0_47, %c0_48] : memref<8x8x128xf32, #tpu.memory_space<vmem>>, vector<1x8x128xf32>
    %125 = vector.shape_cast %124 : vector<1x8x128xf32> to vector<8x128xf32>
    %126 = vector.shape_cast %122 : vector<8x128xf32> to vector<1x8x128xf32>
    tpu.vector_store %arg6[%123, %c0_47, %c0_48], %126 {strides = array<i32>} : memref<8x8x128xf32, #tpu.memory_space<vmem>>, vector<1x8x128xf32>,
    %127 = arith.subf %113, %76 : vector<8x128xf32>
    %128 = arith.mulf %116, %127 : vector<8x128xf32>
    %129 = arith.addf %76, %128 : vector<8x128xf32>
    %c2_i32 = arith.constant 2 : i32
    %c8_i32_49 = arith.constant 8 : i32
    %130 = arith.muli %c2_i32, %c8_i32_49 : i32
    %131 = tpu.assume_multiple %130, 8 : i32
    %132 = arith.index_cast %131 : i32 to index
    %c0_50 = arith.constant 0 : index
    %133 = vector.load %arg8[%132, %c0_50] : memref<64x384xf32, #tpu.memory_space<vmem>>, vector<8x384xf32>
    %c0_51 = arith.constant 0 : index
    %c0_52 = arith.constant 0 : index
    %134 = vector.load %arg3[%c0_51, %c0_52] : memref<128x384xf32, #tpu.memory_space<vmem>>, vector<128x384xf32>
    %cst_53 = arith.constant dense<0.000000e+00> : vector<8x384xf32>
    %135 = tpu.matmul %129, %134, %cst_53 {dimension_numbers = #tpu.dot_dimension_numbers<[1], [0], [0], [1], [0, 0, 1, 1], [], []>} : vector<8x128xf32>, vector<128x384xf32>, vector<8x384xf32> -> vector<8x384xf32>
    %136 = vector.extract_strided_slice %133 {offsets = [0, 0], sizes = [8, 128], strides = [1, 1]} : vector<8x384xf32> to vector<8x128xf32>
    %137 = vector.extract_strided_slice %135 {offsets = [0, 0], sizes = [8, 128], strides = [1, 1]} : vector<8x384xf32> to vector<8x128xf32>
    %138 = arith.addf %136, %137 : vector<8x128xf32>
    %cst_54 = arith.constant 5.000000e-01 : f32
    %139 = vector.broadcast %cst_54 : f32 to vector<8x128xf32>
    %140 = arith.mulf %139, %138 : vector<8x128xf32>
    %141 = math.tanh %140 : vector<8x128xf32>
    %cst_55 = arith.constant 5.000000e-01 : f32
    %142 = vector.broadcast %cst_55 : f32 to vector<8x128xf32>
    %143 = arith.mulf %142, %141 : vector<8x128xf32>
    %cst_56 = arith.constant 5.000000e-01 : f32
    %144 = vector.broadcast %cst_56 : f32 to vector<8x128xf32>
    %145 = arith.addf %143, %144 : vector<8x128xf32>
    %146 = vector.extract_strided_slice %133 {offsets = [0, 128], sizes = [8, 128], strides = [1, 1]} : vector<8x384xf32> to vector<8x128xf32>
    %147 = vector.extract_strided_slice %135 {offsets = [0, 128], sizes = [8, 128], strides = [1, 1]} : vector<8x384xf32> to vector<8x128xf32>
    %148 = arith.addf %146, %147 : vector<8x128xf32>
    %cst_57 = arith.constant 5.000000e-01 : f32
    %149 = vector.broadcast %cst_57 : f32 to vector<8x128xf32>
    %150 = arith.mulf %149, %148 : vector<8x128xf32>
    %151 = math.tanh %150 : vector<8x128xf32>
    %cst_58 = arith.constant 5.000000e-01 : f32
    %152 = vector.broadcast %cst_58 : f32 to vector<8x128xf32>
    %153 = arith.mulf %152, %151 : vector<8x128xf32>
    %cst_59 = arith.constant 5.000000e-01 : f32
    %154 = vector.broadcast %cst_59 : f32 to vector<8x128xf32>
    %155 = arith.addf %153, %154 : vector<8x128xf32>
    %156 = vector.extract_strided_slice %133 {offsets = [0, 256], sizes = [8, 128], strides = [1, 1]} : vector<8x384xf32> to vector<8x128xf32>
    %157 = vector.extract_strided_slice %135 {offsets = [0, 256], sizes = [8, 128], strides = [1, 1]} : vector<8x384xf32> to vector<8x128xf32>
    %158 = arith.addf %157, %22 : vector<8x128xf32>
    %159 = arith.mulf %145, %158 : vector<8x128xf32>
    %160 = arith.addf %156, %159 : vector<8x128xf32>
    %161 = math.tanh %160 : vector<8x128xf32>
    %cst_60 = arith.constant 1.000000e+00 : f32
    %162 = vector.broadcast %cst_60 : f32 to vector<8x128xf32>
    %163 = arith.subf %162, %155 : vector<8x128xf32>
    %164 = arith.mulf %163, %161 : vector<8x128xf32>
    %165 = arith.mulf %155, %129 : vector<8x128xf32>
    %166 = arith.addf %164, %165 : vector<8x128xf32>
    %167 = arith.index_cast %c2_i32 : i32 to index
    %c0_61 = arith.constant 0 : index
    %c0_62 = arith.constant 0 : index
    %168 = vector.load %arg9[%167, %c0_61, %c0_62] : memref<8x8x128xf32, #tpu.memory_space<vmem>>, vector<1x8x128xf32>
    %169 = vector.shape_cast %168 : vector<1x8x128xf32> to vector<8x128xf32>
    %170 = arith.mulf %169, %166 : vector<8x128xf32>
    %cst_63 = arith.constant 1.000000e+00 : f32
    %171 = vector.broadcast %cst_63 : f32 to vector<8x128xf32>
    %172 = arith.subf %171, %169 : vector<8x128xf32>
    %173 = vector.broadcast %cst_15 : f32 to vector<8x128xf32>
    %174 = arith.mulf %172, %173 : vector<8x128xf32>
    %175 = arith.addf %170, %174 : vector<8x128xf32>
    %176 = arith.index_cast %c2_i32 : i32 to index
    %c0_64 = arith.constant 0 : index
    %c0_65 = arith.constant 0 : index
    %177 = vector.load %arg6[%176, %c0_64, %c0_65] : memref<8x8x128xf32, #tpu.memory_space<vmem>>, vector<1x8x128xf32>
    %178 = vector.shape_cast %177 : vector<1x8x128xf32> to vector<8x128xf32>
    %179 = vector.shape_cast %175 : vector<8x128xf32> to vector<1x8x128xf32>
    tpu.vector_store %arg6[%176, %c0_64, %c0_65], %179 {strides = array<i32>} : memref<8x8x128xf32, #tpu.memory_space<vmem>>, vector<1x8x128xf32>,
    %180 = arith.subf %166, %129 : vector<8x128xf32>
    %181 = arith.mulf %169, %180 : vector<8x128xf32>
    %182 = arith.addf %129, %181 : vector<8x128xf32>
    %c3_i32 = arith.constant 3 : i32
    %c8_i32_66 = arith.constant 8 : i32
    %183 = arith.muli %c3_i32, %c8_i32_66 : i32
    %184 = tpu.assume_multiple %183, 8 : i32
    %185 = arith.index_cast %184 : i32 to index
    %c0_67 = arith.constant 0 : index
    %186 = vector.load %arg8[%185, %c0_67] : memref<64x384xf32, #tpu.memory_space<vmem>>, vector<8x384xf32>
    %c0_68 = arith.constant 0 : index
    %c0_69 = arith.constant 0 : index
    %187 = vector.load %arg3[%c0_68, %c0_69] : memref<128x384xf32, #tpu.memory_space<vmem>>, vector<128x384xf32>
    %cst_70 = arith.constant dense<0.000000e+00> : vector<8x384xf32>
    %188 = tpu.matmul %182, %187, %cst_70 {dimension_numbers = #tpu.dot_dimension_numbers<[1], [0], [0], [1], [0, 0, 1, 1], [], []>} : vector<8x128xf32>, vector<128x384xf32>, vector<8x384xf32> -> vector<8x384xf32>
    %189 = vector.extract_strided_slice %186 {offsets = [0, 0], sizes = [8, 128], strides = [1, 1]} : vector<8x384xf32> to vector<8x128xf32>
    %190 = vector.extract_strided_slice %188 {offsets = [0, 0], sizes = [8, 128], strides = [1, 1]} : vector<8x384xf32> to vector<8x128xf32>
    %191 = arith.addf %189, %190 : vector<8x128xf32>
    %cst_71 = arith.constant 5.000000e-01 : f32
    %192 = vector.broadcast %cst_71 : f32 to vector<8x128xf32>
    %193 = arith.mulf %192, %191 : vector<8x128xf32>
    %194 = math.tanh %193 : vector<8x128xf32>
    %cst_72 = arith.constant 5.000000e-01 : f32
    %195 = vector.broadcast %cst_72 : f32 to vector<8x128xf32>
    %196 = arith.mulf %195, %194 : vector<8x128xf32>
    %cst_73 = arith.constant 5.000000e-01 : f32
    %197 = vector.broadcast %cst_73 : f32 to vector<8x128xf32>
    %198 = arith.addf %196, %197 : vector<8x128xf32>
    %199 = vector.extract_strided_slice %186 {offsets = [0, 128], sizes = [8, 128], strides = [1, 1]} : vector<8x384xf32> to vector<8x128xf32>
    %200 = vector.extract_strided_slice %188 {offsets = [0, 128], sizes = [8, 128], strides = [1, 1]} : vector<8x384xf32> to vector<8x128xf32>
    %201 = arith.addf %199, %200 : vector<8x128xf32>
    %cst_74 = arith.constant 5.000000e-01 : f32
    %202 = vector.broadcast %cst_74 : f32 to vector<8x128xf32>
    %203 = arith.mulf %202, %201 : vector<8x128xf32>
    %204 = math.tanh %203 : vector<8x128xf32>
    %cst_75 = arith.constant 5.000000e-01 : f32
    %205 = vector.broadcast %cst_75 : f32 to vector<8x128xf32>
    %206 = arith.mulf %205, %204 : vector<8x128xf32>
    %cst_76 = arith.constant 5.000000e-01 : f32
    %207 = vector.broadcast %cst_76 : f32 to vector<8x128xf32>
    %208 = arith.addf %206, %207 : vector<8x128xf32>
    %209 = vector.extract_strided_slice %186 {offsets = [0, 256], sizes = [8, 128], strides = [1, 1]} : vector<8x384xf32> to vector<8x128xf32>
    %210 = vector.extract_strided_slice %188 {offsets = [0, 256], sizes = [8, 128], strides = [1, 1]} : vector<8x384xf32> to vector<8x128xf32>
    %211 = arith.addf %210, %22 : vector<8x128xf32>
    %212 = arith.mulf %198, %211 : vector<8x128xf32>
    %213 = arith.addf %209, %212 : vector<8x128xf32>
    %214 = math.tanh %213 : vector<8x128xf32>
    %cst_77 = arith.constant 1.000000e+00 : f32
    %215 = vector.broadcast %cst_77 : f32 to vector<8x128xf32>
    %216 = arith.subf %215, %208 : vector<8x128xf32>
    %217 = arith.mulf %216, %214 : vector<8x128xf32>
    %218 = arith.mulf %208, %182 : vector<8x128xf32>
    %219 = arith.addf %217, %218 : vector<8x128xf32>
    %220 = arith.index_cast %c3_i32 : i32 to index
    %c0_78 = arith.constant 0 : index
    %c0_79 = arith.constant 0 : index
    %221 = vector.load %arg9[%220, %c0_78, %c0_79] : memref<8x8x128xf32, #tpu.memory_space<vmem>>, vector<1x8x128xf32>
    %222 = vector.shape_cast %221 : vector<1x8x128xf32> to vector<8x128xf32>
    %223 = arith.mulf %222, %219 : vector<8x128xf32>
    %cst_80 = arith.constant 1.000000e+00 : f32
    %224 = vector.broadcast %cst_80 : f32 to vector<8x128xf32>
    %225 = arith.subf %224, %222 : vector<8x128xf32>
    %226 = vector.broadcast %cst_15 : f32 to vector<8x128xf32>
    %227 = arith.mulf %225, %226 : vector<8x128xf32>
    %228 = arith.addf %223, %227 : vector<8x128xf32>
    %229 = arith.index_cast %c3_i32 : i32 to index
    %c0_81 = arith.constant 0 : index
    %c0_82 = arith.constant 0 : index
    %230 = vector.load %arg6[%229, %c0_81, %c0_82] : memref<8x8x128xf32, #tpu.memory_space<vmem>>, vector<1x8x128xf32>
    %231 = vector.shape_cast %230 : vector<1x8x128xf32> to vector<8x128xf32>
    %232 = vector.shape_cast %228 : vector<8x128xf32> to vector<1x8x128xf32>
    tpu.vector_store %arg6[%229, %c0_81, %c0_82], %232 {strides = array<i32>} : memref<8x8x128xf32, #tpu.memory_space<vmem>>, vector<1x8x128xf32>,
    %233 = arith.subf %219, %182 : vector<8x128xf32>
    %234 = arith.mulf %222, %233 : vector<8x128xf32>
    %235 = arith.addf %182, %234 : vector<8x128xf32>
    %c4_i32 = arith.constant 4 : i32
    %c8_i32_83 = arith.constant 8 : i32
    %236 = arith.muli %c4_i32, %c8_i32_83 : i32
    %237 = tpu.assume_multiple %236, 8 : i32
    %238 = arith.index_cast %237 : i32 to index
    %c0_84 = arith.constant 0 : index
    %239 = vector.load %arg8[%238, %c0_84] : memref<64x384xf32, #tpu.memory_space<vmem>>, vector<8x384xf32>
    %c0_85 = arith.constant 0 : index
    %c0_86 = arith.constant 0 : index
    %240 = vector.load %arg3[%c0_85, %c0_86] : memref<128x384xf32, #tpu.memory_space<vmem>>, vector<128x384xf32>
    %cst_87 = arith.constant dense<0.000000e+00> : vector<8x384xf32>
    %241 = tpu.matmul %235, %240, %cst_87 {dimension_numbers = #tpu.dot_dimension_numbers<[1], [0], [0], [1], [0, 0, 1, 1], [], []>} : vector<8x128xf32>, vector<128x384xf32>, vector<8x384xf32> -> vector<8x384xf32>
    %242 = vector.extract_strided_slice %239 {offsets = [0, 0], sizes = [8, 128], strides = [1, 1]} : vector<8x384xf32> to vector<8x128xf32>
    %243 = vector.extract_strided_slice %241 {offsets = [0, 0], sizes = [8, 128], strides = [1, 1]} : vector<8x384xf32> to vector<8x128xf32>
    %244 = arith.addf %242, %243 : vector<8x128xf32>
    %cst_88 = arith.constant 5.000000e-01 : f32
    %245 = vector.broadcast %cst_88 : f32 to vector<8x128xf32>
    %246 = arith.mulf %245, %244 : vector<8x128xf32>
    %247 = math.tanh %246 : vector<8x128xf32>
    %cst_89 = arith.constant 5.000000e-01 : f32
    %248 = vector.broadcast %cst_89 : f32 to vector<8x128xf32>
    %249 = arith.mulf %248, %247 : vector<8x128xf32>
    %cst_90 = arith.constant 5.000000e-01 : f32
    %250 = vector.broadcast %cst_90 : f32 to vector<8x128xf32>
    %251 = arith.addf %249, %250 : vector<8x128xf32>
    %252 = vector.extract_strided_slice %239 {offsets = [0, 128], sizes = [8, 128], strides = [1, 1]} : vector<8x384xf32> to vector<8x128xf32>
    %253 = vector.extract_strided_slice %241 {offsets = [0, 128], sizes = [8, 128], strides = [1, 1]} : vector<8x384xf32> to vector<8x128xf32>
    %254 = arith.addf %252, %253 : vector<8x128xf32>
    %cst_91 = arith.constant 5.000000e-01 : f32
    %255 = vector.broadcast %cst_91 : f32 to vector<8x128xf32>
    %256 = arith.mulf %255, %254 : vector<8x128xf32>
    %257 = math.tanh %256 : vector<8x128xf32>
    %cst_92 = arith.constant 5.000000e-01 : f32
    %258 = vector.broadcast %cst_92 : f32 to vector<8x128xf32>
    %259 = arith.mulf %258, %257 : vector<8x128xf32>
    %cst_93 = arith.constant 5.000000e-01 : f32
    %260 = vector.broadcast %cst_93 : f32 to vector<8x128xf32>
    %261 = arith.addf %259, %260 : vector<8x128xf32>
    %262 = vector.extract_strided_slice %239 {offsets = [0, 256], sizes = [8, 128], strides = [1, 1]} : vector<8x384xf32> to vector<8x128xf32>
    %263 = vector.extract_strided_slice %241 {offsets = [0, 256], sizes = [8, 128], strides = [1, 1]} : vector<8x384xf32> to vector<8x128xf32>
    %264 = arith.addf %263, %22 : vector<8x128xf32>
    %265 = arith.mulf %251, %264 : vector<8x128xf32>
    %266 = arith.addf %262, %265 : vector<8x128xf32>
    %267 = math.tanh %266 : vector<8x128xf32>
    %cst_94 = arith.constant 1.000000e+00 : f32
    %268 = vector.broadcast %cst_94 : f32 to vector<8x128xf32>
    %269 = arith.subf %268, %261 : vector<8x128xf32>
    %270 = arith.mulf %269, %267 : vector<8x128xf32>
    %271 = arith.mulf %261, %235 : vector<8x128xf32>
    %272 = arith.addf %270, %271 : vector<8x128xf32>
    %273 = arith.index_cast %c4_i32 : i32 to index
    %c0_95 = arith.constant 0 : index
    %c0_96 = arith.constant 0 : index
    %274 = vector.load %arg9[%273, %c0_95, %c0_96] : memref<8x8x128xf32, #tpu.memory_space<vmem>>, vector<1x8x128xf32>
    %275 = vector.shape_cast %274 : vector<1x8x128xf32> to vector<8x128xf32>
    %276 = arith.mulf %275, %272 : vector<8x128xf32>
    %cst_97 = arith.constant 1.000000e+00 : f32
    %277 = vector.broadcast %cst_97 : f32 to vector<8x128xf32>
    %278 = arith.subf %277, %275 : vector<8x128xf32>
    %279 = vector.broadcast %cst_15 : f32 to vector<8x128xf32>
    %280 = arith.mulf %278, %279 : vector<8x128xf32>
    %281 = arith.addf %276, %280 : vector<8x128xf32>
    %282 = arith.index_cast %c4_i32 : i32 to index
    %c0_98 = arith.constant 0 : index
    %c0_99 = arith.constant 0 : index
    %283 = vector.load %arg6[%282, %c0_98, %c0_99] : memref<8x8x128xf32, #tpu.memory_space<vmem>>, vector<1x8x128xf32>
    %284 = vector.shape_cast %283 : vector<1x8x128xf32> to vector<8x128xf32>
    %285 = vector.shape_cast %281 : vector<8x128xf32> to vector<1x8x128xf32>
    tpu.vector_store %arg6[%282, %c0_98, %c0_99], %285 {strides = array<i32>} : memref<8x8x128xf32, #tpu.memory_space<vmem>>, vector<1x8x128xf32>,
    %286 = arith.subf %272, %235 : vector<8x128xf32>
    %287 = arith.mulf %275, %286 : vector<8x128xf32>
    %288 = arith.addf %235, %287 : vector<8x128xf32>
    %c5_i32 = arith.constant 5 : i32
    %c8_i32_100 = arith.constant 8 : i32
    %289 = arith.muli %c5_i32, %c8_i32_100 : i32
    %290 = tpu.assume_multiple %289, 8 : i32
    %291 = arith.index_cast %290 : i32 to index
    %c0_101 = arith.constant 0 : index
    %292 = vector.load %arg8[%291, %c0_101] : memref<64x384xf32, #tpu.memory_space<vmem>>, vector<8x384xf32>
    %c0_102 = arith.constant 0 : index
    %c0_103 = arith.constant 0 : index
    %293 = vector.load %arg3[%c0_102, %c0_103] : memref<128x384xf32, #tpu.memory_space<vmem>>, vector<128x384xf32>
    %cst_104 = arith.constant dense<0.000000e+00> : vector<8x384xf32>
    %294 = tpu.matmul %288, %293, %cst_104 {dimension_numbers = #tpu.dot_dimension_numbers<[1], [0], [0], [1], [0, 0, 1, 1], [], []>} : vector<8x128xf32>, vector<128x384xf32>, vector<8x384xf32> -> vector<8x384xf32>
    %295 = vector.extract_strided_slice %292 {offsets = [0, 0], sizes = [8, 128], strides = [1, 1]} : vector<8x384xf32> to vector<8x128xf32>
    %296 = vector.extract_strided_slice %294 {offsets = [0, 0], sizes = [8, 128], strides = [1, 1]} : vector<8x384xf32> to vector<8x128xf32>
    %297 = arith.addf %295, %296 : vector<8x128xf32>
    %cst_105 = arith.constant 5.000000e-01 : f32
    %298 = vector.broadcast %cst_105 : f32 to vector<8x128xf32>
    %299 = arith.mulf %298, %297 : vector<8x128xf32>
    %300 = math.tanh %299 : vector<8x128xf32>
    %cst_106 = arith.constant 5.000000e-01 : f32
    %301 = vector.broadcast %cst_106 : f32 to vector<8x128xf32>
    %302 = arith.mulf %301, %300 : vector<8x128xf32>
    %cst_107 = arith.constant 5.000000e-01 : f32
    %303 = vector.broadcast %cst_107 : f32 to vector<8x128xf32>
    %304 = arith.addf %302, %303 : vector<8x128xf32>
    %305 = vector.extract_strided_slice %292 {offsets = [0, 128], sizes = [8, 128], strides = [1, 1]} : vector<8x384xf32> to vector<8x128xf32>
    %306 = vector.extract_strided_slice %294 {offsets = [0, 128], sizes = [8, 128], strides = [1, 1]} : vector<8x384xf32> to vector<8x128xf32>
    %307 = arith.addf %305, %306 : vector<8x128xf32>
    %cst_108 = arith.constant 5.000000e-01 : f32
    %308 = vector.broadcast %cst_108 : f32 to vector<8x128xf32>
    %309 = arith.mulf %308, %307 : vector<8x128xf32>
    %310 = math.tanh %309 : vector<8x128xf32>
    %cst_109 = arith.constant 5.000000e-01 : f32
    %311 = vector.broadcast %cst_109 : f32 to vector<8x128xf32>
    %312 = arith.mulf %311, %310 : vector<8x128xf32>
    %cst_110 = arith.constant 5.000000e-01 : f32
    %313 = vector.broadcast %cst_110 : f32 to vector<8x128xf32>
    %314 = arith.addf %312, %313 : vector<8x128xf32>
    %315 = vector.extract_strided_slice %292 {offsets = [0, 256], sizes = [8, 128], strides = [1, 1]} : vector<8x384xf32> to vector<8x128xf32>
    %316 = vector.extract_strided_slice %294 {offsets = [0, 256], sizes = [8, 128], strides = [1, 1]} : vector<8x384xf32> to vector<8x128xf32>
    %317 = arith.addf %316, %22 : vector<8x128xf32>
    %318 = arith.mulf %304, %317 : vector<8x128xf32>
    %319 = arith.addf %315, %318 : vector<8x128xf32>
    %320 = math.tanh %319 : vector<8x128xf32>
    %cst_111 = arith.constant 1.000000e+00 : f32
    %321 = vector.broadcast %cst_111 : f32 to vector<8x128xf32>
    %322 = arith.subf %321, %314 : vector<8x128xf32>
    %323 = arith.mulf %322, %320 : vector<8x128xf32>
    %324 = arith.mulf %314, %288 : vector<8x128xf32>
    %325 = arith.addf %323, %324 : vector<8x128xf32>
    %326 = arith.index_cast %c5_i32 : i32 to index
    %c0_112 = arith.constant 0 : index
    %c0_113 = arith.constant 0 : index
    %327 = vector.load %arg9[%326, %c0_112, %c0_113] : memref<8x8x128xf32, #tpu.memory_space<vmem>>, vector<1x8x128xf32>
    %328 = vector.shape_cast %327 : vector<1x8x128xf32> to vector<8x128xf32>
    %329 = arith.mulf %328, %325 : vector<8x128xf32>
    %cst_114 = arith.constant 1.000000e+00 : f32
    %330 = vector.broadcast %cst_114 : f32 to vector<8x128xf32>
    %331 = arith.subf %330, %328 : vector<8x128xf32>
    %332 = vector.broadcast %cst_15 : f32 to vector<8x128xf32>
    %333 = arith.mulf %331, %332 : vector<8x128xf32>
    %334 = arith.addf %329, %333 : vector<8x128xf32>
    %335 = arith.index_cast %c5_i32 : i32 to index
    %c0_115 = arith.constant 0 : index
    %c0_116 = arith.constant 0 : index
    %336 = vector.load %arg6[%335, %c0_115, %c0_116] : memref<8x8x128xf32, #tpu.memory_space<vmem>>, vector<1x8x128xf32>
    %337 = vector.shape_cast %336 : vector<1x8x128xf32> to vector<8x128xf32>
    %338 = vector.shape_cast %334 : vector<8x128xf32> to vector<1x8x128xf32>
    tpu.vector_store %arg6[%335, %c0_115, %c0_116], %338 {strides = array<i32>} : memref<8x8x128xf32, #tpu.memory_space<vmem>>, vector<1x8x128xf32>,
    %339 = arith.subf %325, %288 : vector<8x128xf32>
    %340 = arith.mulf %328, %339 : vector<8x128xf32>
    %341 = arith.addf %288, %340 : vector<8x128xf32>
    %c6_i32 = arith.constant 6 : i32
    %c8_i32_117 = arith.constant 8 : i32
    %342 = arith.muli %c6_i32, %c8_i32_117 : i32
    %343 = tpu.assume_multiple %342, 8 : i32
    %344 = arith.index_cast %343 : i32 to index
    %c0_118 = arith.constant 0 : index
    %345 = vector.load %arg8[%344, %c0_118] : memref<64x384xf32, #tpu.memory_space<vmem>>, vector<8x384xf32>
    %c0_119 = arith.constant 0 : index
    %c0_120 = arith.constant 0 : index
    %346 = vector.load %arg3[%c0_119, %c0_120] : memref<128x384xf32, #tpu.memory_space<vmem>>, vector<128x384xf32>
    %cst_121 = arith.constant dense<0.000000e+00> : vector<8x384xf32>
    %347 = tpu.matmul %341, %346, %cst_121 {dimension_numbers = #tpu.dot_dimension_numbers<[1], [0], [0], [1], [0, 0, 1, 1], [], []>} : vector<8x128xf32>, vector<128x384xf32>, vector<8x384xf32> -> vector<8x384xf32>
    %348 = vector.extract_strided_slice %345 {offsets = [0, 0], sizes = [8, 128], strides = [1, 1]} : vector<8x384xf32> to vector<8x128xf32>
    %349 = vector.extract_strided_slice %347 {offsets = [0, 0], sizes = [8, 128], strides = [1, 1]} : vector<8x384xf32> to vector<8x128xf32>
    %350 = arith.addf %348, %349 : vector<8x128xf32>
    %cst_122 = arith.constant 5.000000e-01 : f32
    %351 = vector.broadcast %cst_122 : f32 to vector<8x128xf32>
    %352 = arith.mulf %351, %350 : vector<8x128xf32>
    %353 = math.tanh %352 : vector<8x128xf32>
    %cst_123 = arith.constant 5.000000e-01 : f32
    %354 = vector.broadcast %cst_123 : f32 to vector<8x128xf32>
    %355 = arith.mulf %354, %353 : vector<8x128xf32>
    %cst_124 = arith.constant 5.000000e-01 : f32
    %356 = vector.broadcast %cst_124 : f32 to vector<8x128xf32>
    %357 = arith.addf %355, %356 : vector<8x128xf32>
    %358 = vector.extract_strided_slice %345 {offsets = [0, 128], sizes = [8, 128], strides = [1, 1]} : vector<8x384xf32> to vector<8x128xf32>
    %359 = vector.extract_strided_slice %347 {offsets = [0, 128], sizes = [8, 128], strides = [1, 1]} : vector<8x384xf32> to vector<8x128xf32>
    %360 = arith.addf %358, %359 : vector<8x128xf32>
    %cst_125 = arith.constant 5.000000e-01 : f32
    %361 = vector.broadcast %cst_125 : f32 to vector<8x128xf32>
    %362 = arith.mulf %361, %360 : vector<8x128xf32>
    %363 = math.tanh %362 : vector<8x128xf32>
    %cst_126 = arith.constant 5.000000e-01 : f32
    %364 = vector.broadcast %cst_126 : f32 to vector<8x128xf32>
    %365 = arith.mulf %364, %363 : vector<8x128xf32>
    %cst_127 = arith.constant 5.000000e-01 : f32
    %366 = vector.broadcast %cst_127 : f32 to vector<8x128xf32>
    %367 = arith.addf %365, %366 : vector<8x128xf32>
    %368 = vector.extract_strided_slice %345 {offsets = [0, 256], sizes = [8, 128], strides = [1, 1]} : vector<8x384xf32> to vector<8x128xf32>
    %369 = vector.extract_strided_slice %347 {offsets = [0, 256], sizes = [8, 128], strides = [1, 1]} : vector<8x384xf32> to vector<8x128xf32>
    %370 = arith.addf %369, %22 : vector<8x128xf32>
    %371 = arith.mulf %357, %370 : vector<8x128xf32>
    %372 = arith.addf %368, %371 : vector<8x128xf32>
    %373 = math.tanh %372 : vector<8x128xf32>
    %cst_128 = arith.constant 1.000000e+00 : f32
    %374 = vector.broadcast %cst_128 : f32 to vector<8x128xf32>
    %375 = arith.subf %374, %367 : vector<8x128xf32>
    %376 = arith.mulf %375, %373 : vector<8x128xf32>
    %377 = arith.mulf %367, %341 : vector<8x128xf32>
    %378 = arith.addf %376, %377 : vector<8x128xf32>
    %379 = arith.index_cast %c6_i32 : i32 to index
    %c0_129 = arith.constant 0 : index
    %c0_130 = arith.constant 0 : index
    %380 = vector.load %arg9[%379, %c0_129, %c0_130] : memref<8x8x128xf32, #tpu.memory_space<vmem>>, vector<1x8x128xf32>
    %381 = vector.shape_cast %380 : vector<1x8x128xf32> to vector<8x128xf32>
    %382 = arith.mulf %381, %378 : vector<8x128xf32>
    %cst_131 = arith.constant 1.000000e+00 : f32
    %383 = vector.broadcast %cst_131 : f32 to vector<8x128xf32>
    %384 = arith.subf %383, %381 : vector<8x128xf32>
    %385 = vector.broadcast %cst_15 : f32 to vector<8x128xf32>
    %386 = arith.mulf %384, %385 : vector<8x128xf32>
    %387 = arith.addf %382, %386 : vector<8x128xf32>
    %388 = arith.index_cast %c6_i32 : i32 to index
    %c0_132 = arith.constant 0 : index
    %c0_133 = arith.constant 0 : index
    %389 = vector.load %arg6[%388, %c0_132, %c0_133] : memref<8x8x128xf32, #tpu.memory_space<vmem>>, vector<1x8x128xf32>
    %390 = vector.shape_cast %389 : vector<1x8x128xf32> to vector<8x128xf32>
    %391 = vector.shape_cast %387 : vector<8x128xf32> to vector<1x8x128xf32>
    tpu.vector_store %arg6[%388, %c0_132, %c0_133], %391 {strides = array<i32>} : memref<8x8x128xf32, #tpu.memory_space<vmem>>, vector<1x8x128xf32>,
    %392 = arith.subf %378, %341 : vector<8x128xf32>
    %393 = arith.mulf %381, %392 : vector<8x128xf32>
    %394 = arith.addf %341, %393 : vector<8x128xf32>
    %c7_i32 = arith.constant 7 : i32
    %c8_i32_134 = arith.constant 8 : i32
    %395 = arith.muli %c7_i32, %c8_i32_134 : i32
    %396 = tpu.assume_multiple %395, 8 : i32
    %397 = arith.index_cast %396 : i32 to index
    %c0_135 = arith.constant 0 : index
    %398 = vector.load %arg8[%397, %c0_135] : memref<64x384xf32, #tpu.memory_space<vmem>>, vector<8x384xf32>
    %c0_136 = arith.constant 0 : index
    %c0_137 = arith.constant 0 : index
    %399 = vector.load %arg3[%c0_136, %c0_137] : memref<128x384xf32, #tpu.memory_space<vmem>>, vector<128x384xf32>
    %cst_138 = arith.constant dense<0.000000e+00> : vector<8x384xf32>
    %400 = tpu.matmul %394, %399, %cst_138 {dimension_numbers = #tpu.dot_dimension_numbers<[1], [0], [0], [1], [0, 0, 1, 1], [], []>} : vector<8x128xf32>, vector<128x384xf32>, vector<8x384xf32> -> vector<8x384xf32>
    %401 = vector.extract_strided_slice %398 {offsets = [0, 0], sizes = [8, 128], strides = [1, 1]} : vector<8x384xf32> to vector<8x128xf32>
    %402 = vector.extract_strided_slice %400 {offsets = [0, 0], sizes = [8, 128], strides = [1, 1]} : vector<8x384xf32> to vector<8x128xf32>
    %403 = arith.addf %401, %402 : vector<8x128xf32>
    %cst_139 = arith.constant 5.000000e-01 : f32
    %404 = vector.broadcast %cst_139 : f32 to vector<8x128xf32>
    %405 = arith.mulf %404, %403 : vector<8x128xf32>
    %406 = math.tanh %405 : vector<8x128xf32>
    %cst_140 = arith.constant 5.000000e-01 : f32
    %407 = vector.broadcast %cst_140 : f32 to vector<8x128xf32>
    %408 = arith.mulf %407, %406 : vector<8x128xf32>
    %cst_141 = arith.constant 5.000000e-01 : f32
    %409 = vector.broadcast %cst_141 : f32 to vector<8x128xf32>
    %410 = arith.addf %408, %409 : vector<8x128xf32>
    %411 = vector.extract_strided_slice %398 {offsets = [0, 128], sizes = [8, 128], strides = [1, 1]} : vector<8x384xf32> to vector<8x128xf32>
    %412 = vector.extract_strided_slice %400 {offsets = [0, 128], sizes = [8, 128], strides = [1, 1]} : vector<8x384xf32> to vector<8x128xf32>
    %413 = arith.addf %411, %412 : vector<8x128xf32>
    %cst_142 = arith.constant 5.000000e-01 : f32
    %414 = vector.broadcast %cst_142 : f32 to vector<8x128xf32>
    %415 = arith.mulf %414, %413 : vector<8x128xf32>
    %416 = math.tanh %415 : vector<8x128xf32>
    %cst_143 = arith.constant 5.000000e-01 : f32
    %417 = vector.broadcast %cst_143 : f32 to vector<8x128xf32>
    %418 = arith.mulf %417, %416 : vector<8x128xf32>
    %cst_144 = arith.constant 5.000000e-01 : f32
    %419 = vector.broadcast %cst_144 : f32 to vector<8x128xf32>
    %420 = arith.addf %418, %419 : vector<8x128xf32>
    %421 = vector.extract_strided_slice %398 {offsets = [0, 256], sizes = [8, 128], strides = [1, 1]} : vector<8x384xf32> to vector<8x128xf32>
    %422 = vector.extract_strided_slice %400 {offsets = [0, 256], sizes = [8, 128], strides = [1, 1]} : vector<8x384xf32> to vector<8x128xf32>
    %423 = arith.addf %422, %22 : vector<8x128xf32>
    %424 = arith.mulf %410, %423 : vector<8x128xf32>
    %425 = arith.addf %421, %424 : vector<8x128xf32>
    %426 = math.tanh %425 : vector<8x128xf32>
    %cst_145 = arith.constant 1.000000e+00 : f32
    %427 = vector.broadcast %cst_145 : f32 to vector<8x128xf32>
    %428 = arith.subf %427, %420 : vector<8x128xf32>
    %429 = arith.mulf %428, %426 : vector<8x128xf32>
    %430 = arith.mulf %420, %394 : vector<8x128xf32>
    %431 = arith.addf %429, %430 : vector<8x128xf32>
    %432 = arith.index_cast %c7_i32 : i32 to index
    %c0_146 = arith.constant 0 : index
    %c0_147 = arith.constant 0 : index
    %433 = vector.load %arg9[%432, %c0_146, %c0_147] : memref<8x8x128xf32, #tpu.memory_space<vmem>>, vector<1x8x128xf32>
    %434 = vector.shape_cast %433 : vector<1x8x128xf32> to vector<8x128xf32>
    %435 = arith.mulf %434, %431 : vector<8x128xf32>
    %cst_148 = arith.constant 1.000000e+00 : f32
    %436 = vector.broadcast %cst_148 : f32 to vector<8x128xf32>
    %437 = arith.subf %436, %434 : vector<8x128xf32>
    %438 = vector.broadcast %cst_15 : f32 to vector<8x128xf32>
    %439 = arith.mulf %437, %438 : vector<8x128xf32>
    %440 = arith.addf %435, %439 : vector<8x128xf32>
    %441 = arith.index_cast %c7_i32 : i32 to index
    %c0_149 = arith.constant 0 : index
    %c0_150 = arith.constant 0 : index
    %442 = vector.load %arg6[%441, %c0_149, %c0_150] : memref<8x8x128xf32, #tpu.memory_space<vmem>>, vector<1x8x128xf32>
    %443 = vector.shape_cast %442 : vector<1x8x128xf32> to vector<8x128xf32>
    %444 = vector.shape_cast %440 : vector<8x128xf32> to vector<1x8x128xf32>
    tpu.vector_store %arg6[%441, %c0_149, %c0_150], %444 {strides = array<i32>} : memref<8x8x128xf32, #tpu.memory_space<vmem>>, vector<1x8x128xf32>,
    %445 = arith.subf %431, %394 : vector<8x128xf32>
    %446 = arith.mulf %434, %445 : vector<8x128xf32>
    %447 = arith.addf %394, %446 : vector<8x128xf32>
    %c8_i32_151 = arith.constant 8 : i32
    %c0_152 = arith.constant 0 : index
    %c0_153 = arith.constant 0 : index
    %448 = vector.load %arg7[%c0_152, %c0_153] : memref<8x128xf32, #tpu.memory_space<vmem>>, vector<8x128xf32>
    tpu.vector_store %arg7[%c0_152, %c0_153], %447 {strides = array<i32>} : memref<8x128xf32, #tpu.memory_space<vmem>>, vector<8x128xf32>,
    return
  }
}

</mosaic_0001>

<llo_original>
// kernel: encoder_forward.1
$region0: #{encoder_forward.1}
  #allocation0 [shape = 'u32[]', space=smem, size = 0x4, offset = 0x4, fixed_abs, tag = 'smem constant byte address 0x4 - core index']
  #allocation1 [shape = 'u32[144,128]{1,0:T(1,128)}', space=vmem, size = 0x12000, scoped, tag = 'internal scratch']
  #allocation2 [shape = 'f32[64,384]{1,0:T(8,128)}', space=vmem, size = 0x18000, scoped, tag = 'scratch operand']
  #allocation3 [shape = 'f32[8,8,128]{2,1,0:T(8,128)}', space=vmem, size = 0x8000, scoped, tag = 'scratch operand']
  %s0 = inlined_call_operand.vmem [shape: s32[64,1], index: 0, kind: input, shape index: {}]
  %s1 = inlined_call_operand.vmem [shape: s32[8,1], index: 1, kind: input, shape index: {}]
  %s2 = inlined_call_operand.hbm [shape: f32[128,384], index: 2, kind: input, shape index: {}]
  %s3 = inlined_call_operand.hbm [shape: f32[128,384], index: 3, kind: input, shape index: {}]
  %s4 = inlined_call_operand.vmem [shape: f32[1,384], index: 4, kind: input, shape index: {}]
  %s5 = inlined_call_operand.vmem [shape: f32[1,128], index: 5, kind: input, shape index: {}]
  %s6 = inlined_call_operand.vmem [shape: f32[8,8,128], index: 6, kind: output, shape index: {0}]
  %s7 = inlined_call_operand.vmem [shape: f32[8,128], index: 7, kind: output, shape index: {1}]
  %8 = xla_tuple %s6, %s7
  %s9 = sld [smem:[#allocation0]]
  $region50: #{encoder_forward.1} parent=0
    _
  %s11 = ssub.s32 1, %s9
  %s12 = scalar_select 0, %s11, %s9
  $region1: #{encoder_forward.1} parent=0
    #allocation4 [shape = 'u8[196608]{0}', space=vmem, size = 0x30000, scoped, tag = 'input window, operand 2, single buffered']
    #allocation5 [shape = 's32[1]{0}', space=sflag, size = 0x4, scoped, tag = 'scoped memory for encoder_forward.1']
    #allocation6 [shape = 'u8[196608]{0}', space=vmem, size = 0x30000, scoped, tag = 'input window, operand 3, single buffered']
    #allocation7 [shape = 's32[1]{0}', space=sflag, size = 0x4, scoped, tag = 'scoped memory for encoder_forward.1']
    %13 = vsyncpa [#allocation5], 0
    %14 = vsyncpa [#allocation7], 0
    // Predicated region
    $region2: #{encoder_forward.1} parent=1 // pred_check
      _
    $region3: #{encoder_forward.1} parent=1 // pred_check_branch
      %16 = sbr.rel (0) target = $region5
    $region4: #{encoder_forward.1} parent=1 // pred_region
      _
    $region5: #{encoder_forward.1} parent=1 // pred_fallthru
      _
    // Predicated region
    $region6: #{encoder_forward.1} parent=1 // pred_check
      _
    $region7: #{encoder_forward.1} parent=1 // pred_check_branch
      %18 = sbr.rel (0) target = $region9
    $region8: #{encoder_forward.1} parent=1 // pred_region
      _
    $region9: #{encoder_forward.1} parent=1 // pred_fallthru
      _
    // Predicated region
    $region10: #{encoder_forward.1} parent=1 // pred_check
      _
    $region11: #{encoder_forward.1} parent=1 // pred_check_branch
      %20 = sbr.rel (0) target = $region13
    $region12: #{encoder_forward.1} parent=1 // pred_region
      %s22 = ssub.s32 6144, 6144
      %23 = vsyncadd [#allocation5], %s22
      %s24 = sshll.u32 [#allocation4], 4
      %s25 = int_to_ptr.vmem [resolvable:$true] %s24
      %30 = dma.hbm_to_vmem [thread:$0]  %s2, 6144, %s25, [#allocation5], 384, 384, 24
    $region13: #{encoder_forward.1} parent=1 // pred_fallthru
      _
    // Predicated region
    $region14: #{encoder_forward.1} parent=1 // pred_check
      _
    $region15: #{encoder_forward.1} parent=1 // pred_check_branch
      %32 = sbr.rel (0) target = $region17
    $region16: #{encoder_forward.1} parent=1 // pred_region
      %s34 = ssub.s32 6144, 6144
      %35 = vsyncadd [#allocation7], %s34
      %s36 = sshll.u32 [#allocation6], 4
      %s37 = int_to_ptr.vmem [resolvable:$true] %s36
      %42 = dma.hbm_to_vmem [thread:$0]  %s3, 6144, %s37, [#allocation7], 384, 384, 24
    $region17: #{encoder_forward.1} parent=1 // pred_fallthru
      _
    // Predicated region
    $region18: #{encoder_forward.1} parent=1 // pred_check
      _
    $region19: #{encoder_forward.1} parent=1 // pred_check_branch
      %44 = sbr.rel (0) target = $region21
    $region20: #{encoder_forward.1} parent=1 // pred_region
      _
    $region21: #{encoder_forward.1} parent=1 // pred_fallthru
      _
    // Predicated region
    $region22: #{encoder_forward.1} parent=1 // pred_check
      _
    $region23: #{encoder_forward.1} parent=1 // pred_check_branch
      %46 = sbr.rel (0) target = $region25
    $region24: #{encoder_forward.1} parent=1 // pred_region
      _
    $region25: #{encoder_forward.1} parent=1 // pred_fallthru
      _
    // Predicated region
    $region26: #{encoder_forward.1} parent=1 // pred_check
      _
    $region27: #{encoder_forward.1} parent=1 // pred_check_branch
      %48 = sbr.rel (0) target = $region29
    $region28: #{encoder_forward.1} parent=1 // pred_region
      %49 = dma.done [#allocation5], 6144
    $region29: #{encoder_forward.1} parent=1 // pred_fallthru
      _
    // Predicated region
    $region30: #{encoder_forward.1} parent=1 // pred_check
      _
    $region31: #{encoder_forward.1} parent=1 // pred_check_branch
      %51 = sbr.rel (0) target = $region33
    $region32: #{encoder_forward.1} parent=1 // pred_region
      %52 = dma.done [#allocation7], 6144
    $region33: #{encoder_forward.1} parent=1 // pred_fallthru
      _
    %v53 = vld [vmem:[%s0] sm:$0xff]
    %v54 = vld [vmem:[%s0 + $0x8] sm:$0xff]
    %v55 = vld [vmem:[%s0 + $0x10] sm:$0xff]
    %v56 = vld [vmem:[%s0 + $0x18] sm:$0xff]
    %v57 = vld [vmem:[%s0 + $0x20] sm:$0xff]
    %v58 = vld [vmem:[%s0 + $0x28] sm:$0xff]
    %v59 = vld [vmem:[%s0 + $0x30] sm:$0xff]
    %v60 = vld [vmem:[%s0 + $0x38] sm:$0xff]
    %v61 = vlaneseq
    %v62 = vand.u32 %v61, 127
    %63 = vset.pattern.permute.xlu0 0
    %64 = vperm.xlu0 %63, %v53
    %v65 = vpop.permute.xlu0 %64
    %66 = vset.pattern.permute.xlu0 0
    %67 = vperm.xlu0 %66, %v54
    %v68 = vpop.permute.xlu0 %67
    %69 = vset.pattern.permute.xlu0 0
    %70 = vperm.xlu0 %69, %v55
    %v71 = vpop.permute.xlu0 %70
    %72 = vset.pattern.permute.xlu0 0
    %73 = vperm.xlu0 %72, %v56
    %v74 = vpop.permute.xlu0 %73
    %75 = vset.pattern.permute.xlu0 0
    %76 = vperm.xlu0 %75, %v57
    %v77 = vpop.permute.xlu0 %76
    %78 = vset.pattern.permute.xlu0 0
    %79 = vperm.xlu0 %78, %v58
    %v80 = vpop.permute.xlu0 %79
    %81 = vset.pattern.permute.xlu0 0
    %82 = vperm.xlu0 %81, %v59
    %v83 = vpop.permute.xlu0 %82
    %84 = vset.pattern.permute.xlu0 0
    %85 = vperm.xlu0 %84, %v60
    %v86 = vpop.permute.xlu0 %85
    %vm87 = vcmp.eq.s32.totalorder %v65, %v62
    %vm88 = vcmp.eq.s32.totalorder %v68, %v62
    %vm89 = vcmp.eq.s32.totalorder %v71, %v62
    %vm90 = vcmp.eq.s32.totalorder %v74, %v62
    %vm91 = vcmp.eq.s32.totalorder %v77, %v62
    %vm92 = vcmp.eq.s32.totalorder %v80, %v62
    %vm93 = vcmp.eq.s32.totalorder %v83, %v62
    %vm94 = vcmp.eq.s32.totalorder %v86, %v62
    %v95 = vsel %vm87, 1, 0
    %v96 = vsel %vm88, 1, 0
    %v97 = vsel %vm89, 1, 0
    %v98 = vsel %vm90, 1, 0
    %v99 = vsel %vm91, 1, 0
    %v100 = vsel %vm92, 1, 0
    %v101 = vsel %vm93, 1, 0
    %v102 = vsel %vm94, 1, 0
    %v103 = vcvt.s32.f32 %v95
    %v104 = vcvt.s32.f32 %v96
    %v105 = vcvt.s32.f32 %v97
    %v106 = vcvt.s32.f32 %v98
    %v107 = vcvt.s32.f32 %v99
    %v108 = vcvt.s32.f32 %v100
    %v109 = vcvt.s32.f32 %v101
    %v110 = vcvt.s32.f32 %v102
    %v111 = vld [vmem:[#allocation4] sm:$0xff]
    %v112 = vld [vmem:[#allocation4 + $0x8] sm:$0xff]
    %v113 = vld [vmem:[#allocation4 + $0x10] sm:$0xff]
    %v114 = vld [vmem:[#allocation4 + $0x18] sm:$0xff]
    %v115 = vld [vmem:[#allocation4 + $0x20] sm:$0xff]
    %v116 = vld [vmem:[#allocation4 + $0x28] sm:$0xff]
    %v117 = vld [vmem:[#allocation4 + $0x30] sm:$0xff]
    %v118 = vld [vmem:[#allocation4 + $0x38] sm:$0xff]
    %v119 = vld [vmem:[#allocation4 + $0x40] sm:$0xff]
    %v120 = vld [vmem:[#allocation4 + $0x48] sm:$0xff]
    %v121 = vld [vmem:[#allocation4 + $0x50] sm:$0xff]
    %v122 = vld [vmem:[#allocation4 + $0x58] sm:$0xff]
    %v123 = vld [vmem:[#allocation4 + $0x60] sm:$0xff]
    %v124 = vld [vmem:[#allocation4 + $0x68] sm:$0xff]
    %v125 = vld [vmem:[#allocation4 + $0x70] sm:$0xff]
    %v126 = vld [vmem:[#allocation4 + $0x78] sm:$0xff]
    %v127 = vld [vmem:[#allocation4 + $0x80] sm:$0xff]
    %v128 = vld [vmem:[#allocation4 + $0x88] sm:$0xff]
    %v129 = vld [vmem:[#allocation4 + $0x90] sm:$0xff]
    %v130 = vld [vmem:[#allocation4 + $0x98] sm:$0xff]
    %v131 = vld [vmem:[#allocation4 + $0xa0] sm:$0xff]
    %v132 = vld [vmem:[#allocation4 + $0xa8] sm:$0xff]
    %v133 = vld [vmem:[#allocation4 + $0xb0] sm:$0xff]
    %v134 = vld [vmem:[#allocation4 + $0xb8] sm:$0xff]
    %v135 = vld [vmem:[#allocation4 + $0xc0] sm:$0xff]
    %v136 = vld [vmem:[#allocation4 + $0xc8] sm:$0xff]
    %v137 = vld [vmem:[#allocation4 + $0xd0] sm:$0xff]
    %v138 = vld [vmem:[#allocation4 + $0xd8] sm:$0xff]
    %v139 = vld [vmem:[#allocation4 + $0xe0] sm:$0xff]
    %v140 = vld [vmem:[#allocation4 + $0xe8] sm:$0xff]
    %v141 = vld [vmem:[#allocation4 + $0xf0] sm:$0xff]
    %v142 = vld [vmem:[#allocation4 + $0xf8] sm:$0xff]
    %v143 = vld [vmem:[#allocation4 + $0x100] sm:$0xff]
    %v144 = vld [vmem:[#allocation4 + $0x108] sm:$0xff]
    %v145 = vld [vmem:[#allocation4 + $0x110] sm:$0xff]
    %v146 = vld [vmem:[#allocation4 + $0x118] sm:$0xff]
    %v147 = vld [vmem:[#allocation4 + $0x120] sm:$0xff]
    %v148 = vld [vmem:[#allocation4 + $0x128] sm:$0xff]
    %v149 = vld [vmem:[#allocation4 + $0x130] sm:$0xff]
    %v150 = vld [vmem:[#allocation4 + $0x138] sm:$0xff]
    %v151 = vld [vmem:[#allocation4 + $0x140] sm:$0xff]
    %v152 = vld [vmem:[#allocation4 + $0x148] sm:$0xff]
    %v153 = vld [vmem:[#allocation4 + $0x150] sm:$0xff]
    %v154 = vld [vmem:[#allocation4 + $0x158] sm:$0xff]
    %v155 = vld [vmem:[#allocation4 + $0x160] sm:$0xff]
    %v156 = vld [vmem:[#allocation4 + $0x168] sm:$0xff]
    %v157 = vld [vmem:[#allocation4 + $0x170] sm:$0xff]
    %v158 = vld [vmem:[#allocation4 + $0x178] sm:$0xff]
    %v159 = vld [vmem:[%s4] sm:$0x7]
    %v161 = vlaneseq
    %v162 = vshrl.u32 %v161, 7
    %v163 = vsub.s32 0, %v162
    %v164 = vrot.slane %v159, %v163
    %v165 = vlaneseq
    %v166 = vshrl.u32 %v165, 7
    %v167 = vsub.s32 1, %v166
    %v168 = vrot.slane %v159, %v167
    %v169 = vlaneseq
    %v170 = vshrl.u32 %v169, 7
    %v171 = vsub.s32 2, %v170
    %v172 = vrot.slane %v159, %v171
    %176 = vmatprep.subr.mxu0 %v112
    %177 = vmatpush1.msra.mxu0 %v111
    %178 = vmatprep.subr.mxu0 %v115
    %179 = vmatpush1.msra.mxu0 %v114
    %180 = vmatprep.subr.mxu0 %v118
    %181 = vmatpush1.msra.mxu0 %v117
    %182 = vmatprep.subr.mxu0 %v121
    %183 = vmatpush1.msra.mxu0 %v120
    %184 = vmatprep.subr.mxu0 %v124
    %185 = vmatpush1.msra.mxu0 %v123
    %186 = vmatprep.subr.mxu0 %v127
    %187 = vmatpush1.msra.mxu0 %v126
    %188 = vmatprep.subr.mxu0 %v130
    %189 = vmatpush1.msra.mxu0 %v129
    %190 = vmatprep.subr.mxu0 %v133
    %191 = vmatpush1.msra.mxu0 %v132
    %192 = vmatprep.subr.mxu0 %v136
    %193 = vmatpush1.msra.mxu0 %v135
    %194 = vmatprep.subr.mxu0 %v139
    %195 = vmatpush1.msra.mxu0 %v138
    %196 = vmatprep.subr.mxu0 %v142
    %197 = vmatpush1.msra.mxu0 %v141
    %198 = vmatprep.subr.mxu0 %v145
    %199 = vmatpush1.msra.mxu0 %v144
    %200 = vmatprep.subr.mxu0 %v148
    %201 = vmatpush1.msra.mxu0 %v147
    %202 = vmatprep.subr.mxu0 %v151
    %203 = vmatpush1.msra.mxu0 %v150
    %204 = vmatprep.subr.mxu0 %v154
    %205 = vmatpush1.msra.mxu0 %v153
    %206 = vmatprep.subr.mxu0 %v157
    %207 = vmatpush1.msra.mxu0 %v156
    %208 = vmatprep.subr.mxu0 0.0
    %209 = vmatpush1.msra.mxu0 0.0
    %210 = vmatprep.subr.mxu0 0.0
    %211 = vmatpush1.msra.mxu0 0.0
    %212 = vmatprep.subr.mxu0 0.0
    %213 = vmatpush1.msra.mxu0 0.0
    %214 = vmatprep.subr.mxu0 0.0
    %215 = vmatpush1.msra.mxu0 0.0
    %216 = vmatprep.subr.mxu0 0.0
    %217 = vmatpush1.msra.mxu0 0.0
    %218 = vmatprep.subr.mxu0 0.0
    %219 = vmatpush1.msra.mxu0 0.0
    %220 = vmatprep.subr.mxu0 0.0
    %221 = vmatpush1.msra.mxu0 0.0
    %222 = vmatprep.subr.mxu0 0.0
    %223 = vmatpush1.msra.mxu0 0.0
    %224 = vmatprep.subr.mxu0 0.0
    %225 = vmatpush1.msra.mxu0 0.0
    %226 = vmatprep.subr.mxu0 0.0
    %227 = vmatpush1.msra.mxu0 0.0
    %228 = vmatprep.subr.mxu0 0.0
    %229 = vmatpush1.msra.mxu0 0.0
    %230 = vmatprep.subr.mxu0 0.0
    %231 = vmatpush1.msra.mxu0 0.0
    %232 = vmatprep.subr.mxu0 0.0
    %233 = vmatpush1.msra.mxu0 0.0
    %234 = vmatprep.subr.mxu0 0.0
    %235 = vmatpush1.msra.mxu0 0.0
    %236 = vmatprep.subr.mxu0 0.0
    %237 = vmatpush1.msra.mxu0 0.0
    %238 = vmatprep.subr.mxu0 0.0
    %239 = vmatpush1.msra.mxu0 0.0
    %240 = vmatprep.mubr.f32.mxu0 0.0
    %241 = vmatmul.mubr.f32.gmra.mrb[0].mxu0 %v103
    %v242 = vpop.f32.mrb[0].mxu0
    %v243 = vadd.f32 %v164, %v242
    %v244 = vpop.f32.mrb[0].mxu0
    %v245 = vadd.f32 %v168, %v244
    %246 = vmatprep.mubr.f32.mxu0 0.0
    %247 = vmatmul.mubr.f32.gmra.mrb[0].mxu0 %v104
    %v248 = vpop.f32.mrb[0].mxu0
    %v249 = vadd.f32 %v164, %v248
    %v250 = vpop.f32.mrb[0].mxu0
    %v251 = vadd.f32 %v168, %v250
    %252 = vmatprep.mubr.f32.mxu0 0.0
    %253 = vmatmul.mubr.f32.gmra.mrb[0].mxu0 %v105
    %v254 = vpop.f32.mrb[0].mxu0
    %v255 = vadd.f32 %v164, %v254
    %v256 = vpop.f32.mrb[0].mxu0
    %v257 = vadd.f32 %v168, %v256
    %258 = vmatprep.mubr.f32.mxu0 0.0
    %259 = vmatmul.mubr.f32.gmra.mrb[0].mxu0 %v106
    %v260 = vpop.f32.mrb[0].mxu0
    %v261 = vadd.f32 %v164, %v260
    %v262 = vpop.f32.mrb[0].mxu0
    %v263 = vadd.f32 %v168, %v262
    %264 = vmatprep.mubr.f32.mxu0 0.0
    %265 = vmatmul.mubr.f32.gmra.mrb[0].mxu0 %v107
    %v266 = vpop.f32.mrb[0].mxu0
    %v267 = vadd.f32 %v164, %v266
    %v268 = vpop.f32.mrb[0].mxu0
    %v269 = vadd.f32 %v168, %v268
    %270 = vmatprep.mubr.f32.mxu0 0.0
    %271 = vmatmul.mubr.f32.gmra.mrb[0].mxu0 %v108
    %v272 = vpop.f32.mrb[0].mxu0
    %v273 = vadd.f32 %v164, %v272
    %v274 = vpop.f32.mrb[0].mxu0
    %v275 = vadd.f32 %v168, %v274
    %276 = vmatprep.mubr.f32.mxu0 0.0
    %277 = vmatmul.mubr.f32.gmra.mrb[0].mxu0 %v109
    %v278 = vpop.f32.mrb[0].mxu0
    %v279 = vadd.f32 %v164, %v278
    %v280 = vpop.f32.mrb[0].mxu0
    %v281 = vadd.f32 %v168, %v280
    %282 = vmatprep.mubr.f32.mxu0 0.0
    %283 = vmatmul.mubr.f32.gmra.mrb[0].mxu0 %v110
    %v284 = vpop.f32.mrb[0].mxu0
    %v285 = vadd.f32 %v164, %v284
    %v286 = vpop.f32.mrb[0].mxu0
    %v287 = vadd.f32 %v168, %v286
    %288 = vdwg.mxu0
    %289 = vmatprep.subr.mxu0 0.0
    %290 = vmatpush1.msra.mxu0 %v113
    %291 = vmatprep.subr.mxu0 0.0
    %292 = vmatpush1.msra.mxu0 %v116
    %293 = vmatprep.subr.mxu0 0.0
    %294 = vmatpush1.msra.mxu0 %v119
    %295 = vmatprep.subr.mxu0 0.0
    %296 = vmatpush1.msra.mxu0 %v122
    %297 = vmatprep.subr.mxu0 0.0
    %298 = vmatpush1.msra.mxu0 %v125
    %299 = vmatprep.subr.mxu0 0.0
    %300 = vmatpush1.msra.mxu0 %v128
    %301 = vmatprep.subr.mxu0 0.0
    %302 = vmatpush1.msra.mxu0 %v131
    %303 = vmatprep.subr.mxu0 0.0
    %304 = vmatpush1.msra.mxu0 %v134
    %305 = vmatprep.subr.mxu0 0.0
    %306 = vmatpush1.msra.mxu0 %v137
    %307 = vmatprep.subr.mxu0 0.0
    %308 = vmatpush1.msra.mxu0 %v140
    %309 = vmatprep.subr.mxu0 0.0
    %310 = vmatpush1.msra.mxu0 %v143
    %311 = vmatprep.subr.mxu0 0.0
    %312 = vmatpush1.msra.mxu0 %v146
    %313 = vmatprep.subr.mxu0 0.0
    %314 = vmatpush1.msra.mxu0 %v149
    %315 = vmatprep.subr.mxu0 0.0
    %316 = vmatpush1.msra.mxu0 %v152
    %317 = vmatprep.subr.mxu0 0.0
    %318 = vmatpush1.msra.mxu0 %v155
    %319 = vmatprep.subr.mxu0 0.0
    %320 = vmatpush1.msra.mxu0 %v158
    %321 = vmatprep.subr.mxu0 0.0
    %322 = vmatpush1.msra.mxu0 0.0
    %323 = vmatprep.subr.mxu0 0.0
    %324 = vmatpush1.msra.mxu0 0.0
    %325 = vmatprep.subr.mxu0 0.0
    %326 = vmatpush1.msra.mxu0 0.0
    %327 = vmatprep.subr.mxu0 0.0
    %328 = vmatpush1.msra.mxu0 0.0
    %329 = vmatprep.subr.mxu0 0.0
    %330 = vmatpush1.msra.mxu0 0.0
    %331 = vmatprep.subr.mxu0 0.0
    %332 = vmatpush1.msra.mxu0 0.0
    %333 = vmatprep.subr.mxu0 0.0
    %334 = vmatpush1.msra.mxu0 0.0
    %335 = vmatprep.subr.mxu0 0.0
    %336 = vmatpush1.msra.mxu0 0.0
    %337 = vmatprep.subr.mxu0 0.0
    %338 = vmatpush1.msra.mxu0 0.0
    %339 = vmatprep.subr.mxu0 0.0
    %340 = vmatpush1.msra.mxu0 0.0
    %341 = vmatprep.subr.mxu0 0.0
    %342 = vmatpush1.msra.mxu0 0.0
    %343 = vmatprep.subr.mxu0 0.0
    %344 = vmatpush1.msra.mxu0 0.0
    %345 = vmatprep.subr.mxu0 0.0
    %346 = vmatpush1.msra.mxu0 0.0
    %347 = vmatprep.subr.mxu0 0.0
    %348 = vmatpush1.msra.mxu0 0.0
    %349 = vmatprep.subr.mxu0 0.0
    %350 = vmatpush1.msra.mxu0 0.0
    %351 = vmatprep.subr.mxu0 0.0
    %352 = vmatpush1.msra.mxu0 0.0
    %353 = vmatprep.mubr.f32.mxu0 0.0
    %354 = vmatmul.mubr.f32.gmra.mrb[0].mxu0 %v103
    %v355 = vpop.f32.mrb[0].mxu0
    %v356 = vadd.f32 %v172, %v355
    %v357 = vpop.f32.mrb[0].mxu0
    %358 = vmatprep.mubr.f32.mxu0 0.0
    %359 = vmatmul.mubr.f32.gmra.mrb[0].mxu0 %v104
    %v360 = vpop.f32.mrb[0].mxu0
    %v361 = vadd.f32 %v172, %v360
    %v362 = vpop.f32.mrb[0].mxu0
    %363 = vmatprep.mubr.f32.mxu0 0.0
    %364 = vmatmul.mubr.f32.gmra.mrb[0].mxu0 %v105
    %v365 = vpop.f32.mrb[0].mxu0
    %v366 = vadd.f32 %v172, %v365
    %v367 = vpop.f32.mrb[0].mxu0
    %368 = vmatprep.mubr.f32.mxu0 0.0
    %369 = vmatmul.mubr.f32.gmra.mrb[0].mxu0 %v106
    %v370 = vpop.f32.mrb[0].mxu0
    %v371 = vadd.f32 %v172, %v370
    %v372 = vpop.f32.mrb[0].mxu0
    %373 = vmatprep.mubr.f32.mxu0 0.0
    %374 = vmatmul.mubr.f32.gmra.mrb[0].mxu0 %v107
    %v375 = vpop.f32.mrb[0].mxu0
    %v376 = vadd.f32 %v172, %v375
    %v377 = vpop.f32.mrb[0].mxu0
    %378 = vmatprep.mubr.f32.mxu0 0.0
    %379 = vmatmul.mubr.f32.gmra.mrb[0].mxu0 %v108
    %v380 = vpop.f32.mrb[0].mxu0
    %v381 = vadd.f32 %v172, %v380
    %v382 = vpop.f32.mrb[0].mxu0
    %383 = vmatprep.mubr.f32.mxu0 0.0
    %384 = vmatmul.mubr.f32.gmra.mrb[0].mxu0 %v109
    %v385 = vpop.f32.mrb[0].mxu0
    %v386 = vadd.f32 %v172, %v385
    %v387 = vpop.f32.mrb[0].mxu0
    %388 = vmatprep.mubr.f32.mxu0 0.0
    %389 = vmatmul.mubr.f32.gmra.mrb[0].mxu0 %v110
    %v390 = vpop.f32.mrb[0].mxu0
    %v391 = vadd.f32 %v172, %v390
    %v392 = vpop.f32.mrb[0].mxu0
    %393 = vdwg.mxu0
    %394 = vst [vmem:[#allocation2] sm:$0xff] %v243
    %395 = vst [vmem:[#allocation2 + $0x8] sm:$0xff] %v245
    %396 = vst [vmem:[#allocation2 + $0x10] sm:$0xff] %v356
    %397 = vst [vmem:[#allocation2 + $0x18] sm:$0xff] %v249
    %398 = vst [vmem:[#allocation2 + $0x20] sm:$0xff] %v251
    %399 = vst [vmem:[#allocation2 + $0x28] sm:$0xff] %v361
    %400 = vst [vmem:[#allocation2 + $0x30] sm:$0xff] %v255
    %401 = vst [vmem:[#allocation2 + $0x38] sm:$0xff] %v257
    %402 = vst [vmem:[#allocation2 + $0x40] sm:$0xff] %v366
    %403 = vst [vmem:[#allocation2 + $0x48] sm:$0xff] %v261
    %404 = vst [vmem:[#allocation2 + $0x50] sm:$0xff] %v263
    %405 = vst [vmem:[#allocation2 + $0x58] sm:$0xff] %v371
    %406 = vst [vmem:[#allocation2 + $0x60] sm:$0xff] %v267
    %407 = vst [vmem:[#allocation2 + $0x68] sm:$0xff] %v269
    %408 = vst [vmem:[#allocation2 + $0x70] sm:$0xff] %v376
    %409 = vst [vmem:[#allocation2 + $0x78] sm:$0xff] %v273
    %410 = vst [vmem:[#allocation2 + $0x80] sm:$0xff] %v275
    %411 = vst [vmem:[#allocation2 + $0x88] sm:$0xff] %v381
    %412 = vst [vmem:[#allocation2 + $0x90] sm:$0xff] %v279
    %413 = vst [vmem:[#allocation2 + $0x98] sm:$0xff] %v281
    %414 = vst [vmem:[#allocation2 + $0xa0] sm:$0xff] %v386
    %415 = vst [vmem:[#allocation2 + $0xa8] sm:$0xff] %v285
    %416 = vst [vmem:[#allocation2 + $0xb0] sm:$0xff] %v287
    %417 = vst [vmem:[#allocation2 + $0xb8] sm:$0xff] %v391
    %v418 = vld [vmem:[%s1] sm:$0xff]
    %419 = vset.pattern.permute.xlu0 0
    %420 = vperm.xlu0 %419, %v418
    %v421 = vpop.permute.xlu0 %420
    %vm422 = vcmp.gt.s32.totalorder %v421, 0
    %vm423 = vcmp.gt.s32.totalorder %v421, 1
    %vm424 = vcmp.gt.s32.totalorder %v421, 2
    %vm425 = vcmp.gt.s32.totalorder %v421, 3
    %vm426 = vcmp.gt.s32.totalorder %v421, 4
    %vm427 = vcmp.gt.s32.totalorder %v421, 5
    %vm428 = vcmp.gt.s32.totalorder %v421, 6
    %vm429 = vcmp.gt.s32.totalorder %v421, 7
    %v430 = vsel %vm422, 1, 0
    %v431 = vsel %vm423, 1, 0
    %v432 = vsel %vm424, 1, 0
    %v433 = vsel %vm425, 1, 0
    %v434 = vsel %vm426, 1, 0
    %v435 = vsel %vm427, 1, 0
    %v436 = vsel %vm428, 1, 0
    %v437 = vsel %vm429, 1, 0
    %v438 = vcvt.s32.f32 %v430
    %v439 = vcvt.s32.f32 %v431
    %v440 = vcvt.s32.f32 %v432
    %v441 = vcvt.s32.f32 %v433
    %v442 = vcvt.s32.f32 %v434
    %v443 = vcvt.s32.f32 %v435
    %v444 = vcvt.s32.f32 %v436
    %v445 = vcvt.s32.f32 %v437
    %446 = vst [vmem:[#allocation3] sm:$0xff] %v438
    %447 = vst [vmem:[#allocation3 + $0x8] sm:$0xff] %v439
    %448 = vst [vmem:[#allocation3 + $0x10] sm:$0xff] %v440
    %449 = vst [vmem:[#allocation3 + $0x18] sm:$0xff] %v441
    %450 = vst [vmem:[#allocation3 + $0x20] sm:$0xff] %v442
    %451 = vst [vmem:[#allocation3 + $0x28] sm:$0xff] %v443
    %452 = vst [vmem:[#allocation3 + $0x30] sm:$0xff] %v444
    %453 = vst [vmem:[#allocation3 + $0x38] sm:$0xff] %v445
    %v454 = vld [vmem:[%s5] sm:$0x1]
    %v456 = vlaneseq
    %v457 = vshrl.u32 %v456, 7
    %v458 = vsub.s32 0, %v457
    %v459 = vrot.slane %v454, %v458
    %s461 = smul.u32 0, 3
    %s462 = smul.addr %s461, 8
    %s463 = scalar_lea.vmem [#allocation2], %s462
    %v464 = vld [vmem:[%s463] sm:$0xff]
    %v465 = vld [vmem:[%s463 + $0x8] sm:$0xff]
    %v466 = vld [vmem:[%s463 + $0x10] sm:$0xff]
    %v467 = vld [vmem:[#allocation6] sm:$0xff]
    %v468 = vld [vmem:[#allocation6 + $0x8] sm:$0xff]
    %v469 = vld [vmem:[#allocation6 + $0x10] sm:$0xff]
    %v470 = vld [vmem:[#allocation6 + $0x18] sm:$0xff]
    %v471 = vld [vmem:[#allocation6 + $0x20] sm:$0xff]
    %v472 = vld [vmem:[#allocation6 + $0x28] sm:$0xff]
    %v473 = vld [vmem:[#allocation6 + $0x30] sm:$0xff]
    %v474 = vld [vmem:[#allocation6 + $0x38] sm:$0xff]
    %v475 = vld [vmem:[#allocation6 + $0x40] sm:$0xff]
    %v476 = vld [vmem:[#allocation6 + $0x48] sm:$0xff]
    %v477 = vld [vmem:[#allocation6 + $0x50] sm:$0xff]
    %v478 = vld [vmem:[#allocation6 + $0x58] sm:$0xff]
    %v479 = vld [vmem:[#allocation6 + $0x60] sm:$0xff]
    %v480 = vld [vmem:[#allocation6 + $0x68] sm:$0xff]
    %v481 = vld [vmem:[#allocation6 + $0x70] sm:$0xff]
    %v482 = vld [vmem:[#allocation6 + $0x78] sm:$0xff]
    %v483 = vld [vmem:[#allocation6 + $0x80] sm:$0xff]
    %v484 = vld [vmem:[#allocation6 + $0x88] sm:$0xff]
    %v485 = vld [vmem:[#allocation6 + $0x90] sm:$0xff]
    %v486 = vld [vmem:[#allocation6 + $0x98] sm:$0xff]
    %v487 = vld [vmem:[#allocation6 + $0xa0] sm:$0xff]
    %v488 = vld [vmem:[#allocation6 + $0xa8] sm:$0xff]
    %v489 = vld [vmem:[#allocation6 + $0xb0] sm:$0xff]
    %v490 = vld [vmem:[#allocation6 + $0xb8] sm:$0xff]
    %v491 = vld [vmem:[#allocation6 + $0xc0] sm:$0xff]
    %v492 = vld [vmem:[#allocation6 + $0xc8] sm:$0xff]
    %v493 = vld [vmem:[#allocation6 + $0xd0] sm:$0xff]
    %v494 = vld [vmem:[#allocation6 + $0xd8] sm:$0xff]
    %v495 = vld [vmem:[#allocation6 + $0xe0] sm:$0xff]
    %v496 = vld [vmem:[#allocation6 + $0xe8] sm:$0xff]
    %v497 = vld [vmem:[#allocation6 + $0xf0] sm:$0xff]
    %v498 = vld [vmem:[#allocation6 + $0xf8] sm:$0xff]
    %v499 = vld [vmem:[#allocation6 + $0x100] sm:$0xff]
    %v500 = vld [vmem:[#allocation6 + $0x108] sm:$0xff]
    %v501 = vld [vmem:[#allocation6 + $0x110] sm:$0xff]
    %v502 = vld [vmem:[#allocation6 + $0x118] sm:$0xff]
    %v503 = vld [vmem:[#allocation6 + $0x120] sm:$0xff]
    %v504 = vld [vmem:[#allocation6 + $0x128] sm:$0xff]
    %v505 = vld [vmem:[#allocation6 + $0x130] sm:$0xff]
    %v506 = vld [vmem:[#allocation6 + $0x138] sm:$0xff]
    %v507 = vld [vmem:[#allocation6 + $0x140] sm:$0xff]
    %v508 = vld [vmem:[#allocation6 + $0x148] sm:$0xff]
    %v509 = vld [vmem:[#allocation6 + $0x150] sm:$0xff]
    %v510 = vld [vmem:[#allocation6 + $0x158] sm:$0xff]
    %v511 = vld [vmem:[#allocation6 + $0x160] sm:$0xff]
    %v512 = vld [vmem:[#allocation6 + $0x168] sm:$0xff]
    %v513 = vld [vmem:[#allocation6 + $0x170] sm:$0xff]
    %v514 = vld [vmem:[#allocation6 + $0x178] sm:$0xff]
    %515 = vmatprep.subr.mxu0 %v468
    %516 = vmatpush1.msra.mxu0 %v467
    %517 = vmatprep.subr.mxu0 %v471
    %518 = vmatpush1.msra.mxu0 %v470
    %519 = vmatprep.subr.mxu0 %v474
    %520 = vmatpush1.msra.mxu0 %v473
    %521 = vmatprep.subr.mxu0 %v477
    %522 = vmatpush1.msra.mxu0 %v476
    %523 = vmatprep.subr.mxu0 %v480
    %524 = vmatpush1.msra.mxu0 %v479
    %525 = vmatprep.subr.mxu0 %v483
    %526 = vmatpush1.msra.mxu0 %v482
    %527 = vmatprep.subr.mxu0 %v486
    %528 = vmatpush1.msra.mxu0 %v485
    %529 = vmatprep.subr.mxu0 %v489
    %530 = vmatpush1.msra.mxu0 %v488
    %531 = vmatprep.subr.mxu0 %v492
    %532 = vmatpush1.msra.mxu0 %v491
    %533 = vmatprep.subr.mxu0 %v495
    %534 = vmatpush1.msra.mxu0 %v494
    %535 = vmatprep.subr.mxu0 %v498
    %536 = vmatpush1.msra.mxu0 %v497
    %537 = vmatprep.subr.mxu0 %v501
    %538 = vmatpush1.msra.mxu0 %v500
    %539 = vmatprep.subr.mxu0 %v504
    %540 = vmatpush1.msra.mxu0 %v503
    %541 = vmatprep.subr.mxu0 %v507
    %542 = vmatpush1.msra.mxu0 %v506
    %543 = vmatprep.subr.mxu0 %v510
    %544 = vmatpush1.msra.mxu0 %v509
    %545 = vmatprep.subr.mxu0 %v513
    %546 = vmatpush1.msra.mxu0 %v512
    %547 = vmatprep.subr.mxu0 0.0
    %548 = vmatpush1.msra.mxu0 0.0
    %549 = vmatprep.subr.mxu0 0.0
    %550 = vmatpush1.msra.mxu0 0.0
    %551 = vmatprep.subr.mxu0 0.0
    %552 = vmatpush1.msra.mxu0 0.0
    %553 = vmatprep.subr.mxu0 0.0
    %554 = vmatpush1.msra.mxu0 0.0
    %555 = vmatprep.subr.mxu0 0.0
    %556 = vmatpush1.msra.mxu0 0.0
    %557 = vmatprep.subr.mxu0 0.0
    %558 = vmatpush1.msra.mxu0 0.0
    %559 = vmatprep.subr.mxu0 0.0
    %560 = vmatpush1.msra.mxu0 0.0
    %561 = vmatprep.subr.mxu0 0.0
    %562 = vmatpush1.msra.mxu0 0.0
    %563 = vmatprep.subr.mxu0 0.0
    %564 = vmatpush1.msra.mxu0 0.0
    %565 = vmatprep.subr.mxu0 0.0
    %566 = vmatpush1.msra.mxu0 0.0
    %567 = vmatprep.subr.mxu0 0.0
    %568 = vmatpush1.msra.mxu0 0.0
    %569 = vmatprep.subr.mxu0 0.0
    %570 = vmatpush1.msra.mxu0 0.0
    %571 = vmatprep.subr.mxu0 0.0
    %572 = vmatpush1.msra.mxu0 0.0
    %573 = vmatprep.subr.mxu0 0.0
    %574 = vmatpush1.msra.mxu0 0.0
    %575 = vmatprep.subr.mxu0 0.0
    %576 = vmatpush1.msra.mxu0 0.0
    %577 = vmatprep.subr.mxu0 0.0
    %578 = vmatpush1.msra.mxu0 0.0
    %579 = vmatprep.mubr.f32.mxu0 0.0
    %580 = vmatmul.mubr.f32.gmra.mrb[0].mxu0 0.0
    %v581 = vpop.f32.mrb[0].mxu0
    %v582 = vadd.f32 0.0, %v581
    %v583 = vpop.f32.mrb[0].mxu0
    %v584 = vadd.f32 0.0, %v583
    %585 = vdwg.mxu0
    %586 = vmatprep.subr.mxu0 0.0
    %587 = vmatpush1.msra.mxu0 %v469
    %588 = vmatprep.subr.mxu0 0.0
    %589 = vmatpush1.msra.mxu0 %v472
    %590 = vmatprep.subr.mxu0 0.0
    %591 = vmatpush1.msra.mxu0 %v475
    %592 = vmatprep.subr.mxu0 0.0
    %593 = vmatpush1.msra.mxu0 %v478
    %594 = vmatprep.subr.mxu0 0.0
    %595 = vmatpush1.msra.mxu0 %v481
    %596 = vmatprep.subr.mxu0 0.0
    %597 = vmatpush1.msra.mxu0 %v484
    %598 = vmatprep.subr.mxu0 0.0
    %599 = vmatpush1.msra.mxu0 %v487
    %600 = vmatprep.subr.mxu0 0.0
    %601 = vmatpush1.msra.mxu0 %v490
    %602 = vmatprep.subr.mxu0 0.0
    %603 = vmatpush1.msra.mxu0 %v493
    %604 = vmatprep.subr.mxu0 0.0
    %605 = vmatpush1.msra.mxu0 %v496
    %606 = vmatprep.subr.mxu0 0.0
    %607 = vmatpush1.msra.mxu0 %v499
    %608 = vmatprep.subr.mxu0 0.0
    %609 = vmatpush1.msra.mxu0 %v502
    %610 = vmatprep.subr.mxu0 0.0
    %611 = vmatpush1.msra.mxu0 %v505
    %612 = vmatprep.subr.mxu0 0.0
    %613 = vmatpush1.msra.mxu0 %v508
    %614 = vmatprep.subr.mxu0 0.0
    %615 = vmatpush1.msra.mxu0 %v511
    %616 = vmatprep.subr.mxu0 0.0
    %617 = vmatpush1.msra.mxu0 %v514
    %618 = vmatprep.subr.mxu0 0.0
    %619 = vmatpush1.msra.mxu0 0.0
    %620 = vmatprep.subr.mxu0 0.0
    %621 = vmatpush1.msra.mxu0 0.0
    %622 = vmatprep.subr.mxu0 0.0
    %623 = vmatpush1.msra.mxu0 0.0
    %624 = vmatprep.subr.mxu0 0.0
    %625 = vmatpush1.msra.mxu0 0.0
    %626 = vmatprep.subr.mxu0 0.0
    %627 = vmatpush1.msra.mxu0 0.0
    %628 = vmatprep.subr.mxu0 0.0
    %629 = vmatpush1.msra.mxu0 0.0
    %630 = vmatprep.subr.mxu0 0.0
    %631 = vmatpush1.msra.mxu0 0.0
    %632 = vmatprep.subr.mxu0 0.0
    %633 = vmatpush1.msra.mxu0 0.0
    %634 = vmatprep.subr.mxu0 0.0
    %635 = vmatpush1.msra.mxu0 0.0
    %636 = vmatprep.subr.mxu0 0.0
    %637 = vmatpush1.msra.mxu0 0.0
    %638 = vmatprep.subr.mxu0 0.0
    %639 = vmatpush1.msra.mxu0 0.0
    %640 = vmatprep.subr.mxu0 0.0
    %641 = vmatpush1.msra.mxu0 0.0
    %642 = vmatprep.subr.mxu0 0.0
    %643 = vmatpush1.msra.mxu0 0.0
    %644 = vmatprep.subr.mxu0 0.0
    %645 = vmatpush1.msra.mxu0 0.0
    %646 = vmatprep.subr.mxu0 0.0
    %647 = vmatpush1.msra.mxu0 0.0
    %648 = vmatprep.subr.mxu0 0.0
    %649 = vmatpush1.msra.mxu0 0.0
    %650 = vmatprep.mubr.f32.mxu0 0.0
    %651 = vmatmul.mubr.f32.gmra.mrb[0].mxu0 0.0
    %v652 = vpop.f32.mrb[0].mxu0
    %v653 = vadd.f32 0.0, %v652
    %v654 = vpop.f32.mrb[0].mxu0
    %655 = vdwg.mxu0
    %v656 = vadd.f32 %v464, %v582
    %v657 = vmul.f32 %v656, 0.5
    %v658 = vtanh.pop %v657
    %v659 = vmul.f32 %v658, 0.5
    %v660 = vadd.f32 %v659, 0.5
    %v661 = vadd.f32 %v465, %v584
    %v662 = vmul.f32 %v661, 0.5
    %v663 = vtanh.pop %v662
    %v664 = vmul.f32 %v663, 0.5
    %v665 = vadd.f32 %v664, 0.5
    %v666 = vadd.f32 %v653, %v459
    %v667 = vmul.f32 %v660, %v666
    %v668 = vadd.f32 %v466, %v667
    %v669 = vtanh.pop %v668
    %v670 = vsub.f32 1.0, %v665
    %v671 = vmul.f32 %v670, %v669
    %v672 = vmul.f32 %v665, 0.0
    %v673 = vadd.f32 %v671, %v672
    %v674 = vld [vmem:[#allocation3] sm:$0xff]
    %v675 = vmul.f32 %v674, %v673
    %v676 = vsub.f32 1.0, %v674
    %v677 = vmul.f32 %v676, 0.0
    %v678 = vadd.f32 %v675, %v677
    %679 = vst [vmem:[%s6] sm:$0xff] %v678
    %v680 = vadd.f32 %v675, 0.0
    %s681 = smul.u32 1, 3
    %s682 = smul.addr %s681, 8
    %s683 = scalar_lea.vmem [#allocation2], %s682
    %v684 = vld [vmem:[%s683] sm:$0xff]
    %v685 = vld [vmem:[%s683 + $0x8] sm:$0xff]
    %v686 = vld [vmem:[%s683 + $0x10] sm:$0xff]
    %v687 = vld [vmem:[#allocation6] sm:$0xff]
    %v688 = vld [vmem:[#allocation6 + $0x8] sm:$0xff]
    %v689 = vld [vmem:[#allocation6 + $0x10] sm:$0xff]
    %v690 = vld [vmem:[#allocation6 + $0x18] sm:$0xff]
    %v691 = vld [vmem:[#allocation6 + $0x20] sm:$0xff]
    %v692 = vld [vmem:[#allocation6 + $0x28] sm:$0xff]
    %v693 = vld [vmem:[#allocation6 + $0x30] sm:$0xff]
    %v694 = vld [vmem:[#allocation6 + $0x38] sm:$0xff]
    %v695 = vld [vmem:[#allocation6 + $0x40] sm:$0xff]
    %v696 = vld [vmem:[#allocation6 + $0x48] sm:$0xff]
    %v697 = vld [vmem:[#allocation6 + $0x50] sm:$0xff]
    %v698 = vld [vmem:[#allocation6 + $0x58] sm:$0xff]
    %v699 = vld [vmem:[#allocation6 + $0x60] sm:$0xff]
    %v700 = vld [vmem:[#allocation6 + $0x68] sm:$0xff]
    %v701 = vld [vmem:[#allocation6 + $0x70] sm:$0xff]
    %v702 = vld [vmem:[#allocation6 + $0x78] sm:$0xff]
    %v703 = vld [vmem:[#allocation6 + $0x80] sm:$0xff]
    %v704 = vld [vmem:[#allocation6 + $0x88] sm:$0xff]
    %v705 = vld [vmem:[#allocation6 + $0x90] sm:$0xff]
    %v706 = vld [vmem:[#allocation6 + $0x98] sm:$0xff]
    %v707 = vld [vmem:[#allocation6 + $0xa0] sm:$0xff]
    %v708 = vld [vmem:[#allocation6 + $0xa8] sm:$0xff]
    %v709 = vld [vmem:[#allocation6 + $0xb0] sm:$0xff]
    %v710 = vld [vmem:[#allocation6 + $0xb8] sm:$0xff]
    %v711 = vld [vmem:[#allocation6 + $0xc0] sm:$0xff]
    %v712 = vld [vmem:[#allocation6 + $0xc8] sm:$0xff]
    %v713 = vld [vmem:[#allocation6 + $0xd0] sm:$0xff]
    %v714 = vld [vmem:[#allocation6 + $0xd8] sm:$0xff]
    %v715 = vld [vmem:[#allocation6 + $0xe0] sm:$0xff]
    %v716 = vld [vmem:[#allocation6 + $0xe8] sm:$0xff]
    %v717 = vld [vmem:[#allocation6 + $0xf0] sm:$0xff]
    %v718 = vld [vmem:[#allocation6 + $0xf8] sm:$0xff]
    %v719 = vld [vmem:[#allocation6 + $0x100] sm:$0xff]
    %v720 = vld [vmem:[#allocation6 + $0x108] sm:$0xff]
    %v721 = vld [vmem:[#allocation6 + $0x110] sm:$0xff]
    %v722 = vld [vmem:[#allocation6 + $0x118] sm:$0xff]
    %v723 = vld [vmem:[#allocation6 + $0x120] sm:$0xff]
    %v724 = vld [vmem:[#allocation6 + $0x128] sm:$0xff]
    %v725 = vld [vmem:[#allocation6 + $0x130] sm:$0xff]
    %v726 = vld [vmem:[#allocation6 + $0x138] sm:$0xff]
    %v727 = vld [vmem:[#allocation6 + $0x140] sm:$0xff]
    %v728 = vld [vmem:[#allocation6 + $0x148] sm:$0xff]
    %v729 = vld [vmem:[#allocation6 + $0x150] sm:$0xff]
    %v730 = vld [vmem:[#allocation6 + $0x158] sm:$0xff]
    %v731 = vld [vmem:[#allocation6 + $0x160] sm:$0xff]
    %v732 = vld [vmem:[#allocation6 + $0x168] sm:$0xff]
    %v733 = vld [vmem:[#allocation6 + $0x170] sm:$0xff]
    %v734 = vld [vmem:[#allocation6 + $0x178] sm:$0xff]
    %735 = vmatprep.subr.mxu0 %v688
    %736 = vmatpush1.msra.mxu0 %v687
    %737 = vmatprep.subr.mxu0 %v691
    %738 = vmatpush1.msra.mxu0 %v690
    %739 = vmatprep.subr.mxu0 %v694
    %740 = vmatpush1.msra.mxu0 %v693
    %741 = vmatprep.subr.mxu0 %v697
    %742 = vmatpush1.msra.mxu0 %v696
    %743 = vmatprep.subr.mxu0 %v700
    %744 = vmatpush1.msra.mxu0 %v699
    %745 = vmatprep.subr.mxu0 %v703
    %746 = vmatpush1.msra.mxu0 %v702
    %747 = vmatprep.subr.mxu0 %v706
    %748 = vmatpush1.msra.mxu0 %v705
    %749 = vmatprep.subr.mxu0 %v709
    %750 = vmatpush1.msra.mxu0 %v708
    %751 = vmatprep.subr.mxu0 %v712
    %752 = vmatpush1.msra.mxu0 %v711
    %753 = vmatprep.subr.mxu0 %v715
    %754 = vmatpush1.msra.mxu0 %v714
    %755 = vmatprep.subr.mxu0 %v718
    %756 = vmatpush1.msra.mxu0 %v717
    %757 = vmatprep.subr.mxu0 %v721
    %758 = vmatpush1.msra.mxu0 %v720
    %759 = vmatprep.subr.mxu0 %v724
    %760 = vmatpush1.msra.mxu0 %v723
    %761 = vmatprep.subr.mxu0 %v727
    %762 = vmatpush1.msra.mxu0 %v726
    %763 = vmatprep.subr.mxu0 %v730
    %764 = vmatpush1.msra.mxu0 %v729
    %765 = vmatprep.subr.mxu0 %v733
    %766 = vmatpush1.msra.mxu0 %v732
    %767 = vmatprep.subr.mxu0 0.0
    %768 = vmatpush1.msra.mxu0 0.0
    %769 = vmatprep.subr.mxu0 0.0
    %770 = vmatpush1.msra.mxu0 0.0
    %771 = vmatprep.subr.mxu0 0.0
    %772 = vmatpush1.msra.mxu0 0.0
    %773 = vmatprep.subr.mxu0 0.0
    %774 = vmatpush1.msra.mxu0 0.0
    %775 = vmatprep.subr.mxu0 0.0
    %776 = vmatpush1.msra.mxu0 0.0
    %777 = vmatprep.subr.mxu0 0.0
    %778 = vmatpush1.msra.mxu0 0.0
    %779 = vmatprep.subr.mxu0 0.0
    %780 = vmatpush1.msra.mxu0 0.0
    %781 = vmatprep.subr.mxu0 0.0
    %782 = vmatpush1.msra.mxu0 0.0
    %783 = vmatprep.subr.mxu0 0.0
    %784 = vmatpush1.msra.mxu0 0.0
    %785 = vmatprep.subr.mxu0 0.0
    %786 = vmatpush1.msra.mxu0 0.0
    %787 = vmatprep.subr.mxu0 0.0
    %788 = vmatpush1.msra.mxu0 0.0
    %789 = vmatprep.subr.mxu0 0.0
    %790 = vmatpush1.msra.mxu0 0.0
    %791 = vmatprep.subr.mxu0 0.0
    %792 = vmatpush1.msra.mxu0 0.0
    %793 = vmatprep.subr.mxu0 0.0
    %794 = vmatpush1.msra.mxu0 0.0
    %795 = vmatprep.subr.mxu0 0.0
    %796 = vmatpush1.msra.mxu0 0.0
    %797 = vmatprep.subr.mxu0 0.0
    %798 = vmatpush1.msra.mxu0 0.0
    %799 = vmatprep.mubr.f32.mxu0 0.0
    %800 = vmatmul.mubr.f32.gmra.mrb[0].mxu0 %v680
    %v801 = vpop.f32.mrb[0].mxu0
    %v802 = vadd.f32 0.0, %v801
    %v803 = vpop.f32.mrb[0].mxu0
    %v804 = vadd.f32 0.0, %v803
    %805 = vdwg.mxu0
    %806 = vmatprep.subr.mxu0 0.0
    %807 = vmatpush1.msra.mxu0 %v689
    %808 = vmatprep.subr.mxu0 0.0
    %809 = vmatpush1.msra.mxu0 %v692
    %810 = vmatprep.subr.mxu0 0.0
    %811 = vmatpush1.msra.mxu0 %v695
    %812 = vmatprep.subr.mxu0 0.0
    %813 = vmatpush1.msra.mxu0 %v698
    %814 = vmatprep.subr.mxu0 0.0
    %815 = vmatpush1.msra.mxu0 %v701
    %816 = vmatprep.subr.mxu0 0.0
    %817 = vmatpush1.msra.mxu0 %v704
    %818 = vmatprep.subr.mxu0 0.0
    %819 = vmatpush1.msra.mxu0 %v707
    %820 = vmatprep.subr.mxu0 0.0
    %821 = vmatpush1.msra.mxu0 %v710
    %822 = vmatprep.subr.mxu0 0.0
    %823 = vmatpush1.msra.mxu0 %v713
    %824 = vmatprep.subr.mxu0 0.0
    %825 = vmatpush1.msra.mxu0 %v716
    %826 = vmatprep.subr.mxu0 0.0
    %827 = vmatpush1.msra.mxu0 %v719
    %828 = vmatprep.subr.mxu0 0.0
    %829 = vmatpush1.msra.mxu0 %v722
    %830 = vmatprep.subr.mxu0 0.0
    %831 = vmatpush1.msra.mxu0 %v725
    %832 = vmatprep.subr.mxu0 0.0
    %833 = vmatpush1.msra.mxu0 %v728
    %834 = vmatprep.subr.mxu0 0.0
    %835 = vmatpush1.msra.mxu0 %v731
    %836 = vmatprep.subr.mxu0 0.0
    %837 = vmatpush1.msra.mxu0 %v734
    %838 = vmatprep.subr.mxu0 0.0
    %839 = vmatpush1.msra.mxu0 0.0
    %840 = vmatprep.subr.mxu0 0.0
    %841 = vmatpush1.msra.mxu0 0.0
    %842 = vmatprep.subr.mxu0 0.0
    %843 = vmatpush1.msra.mxu0 0.0
    %844 = vmatprep.subr.mxu0 0.0
    %845 = vmatpush1.msra.mxu0 0.0
    %846 = vmatprep.subr.mxu0 0.0
    %847 = vmatpush1.msra.mxu0 0.0
    %848 = vmatprep.subr.mxu0 0.0
    %849 = vmatpush1.msra.mxu0 0.0
    %850 = vmatprep.subr.mxu0 0.0
    %851 = vmatpush1.msra.mxu0 0.0
    %852 = vmatprep.subr.mxu0 0.0
    %853 = vmatpush1.msra.mxu0 0.0
    %854 = vmatprep.subr.mxu0 0.0
    %855 = vmatpush1.msra.mxu0 0.0
    %856 = vmatprep.subr.mxu0 0.0
    %857 = vmatpush1.msra.mxu0 0.0
    %858 = vmatprep.subr.mxu0 0.0
    %859 = vmatpush1.msra.mxu0 0.0
    %860 = vmatprep.subr.mxu0 0.0
    %861 = vmatpush1.msra.mxu0 0.0
    %862 = vmatprep.subr.mxu0 0.0
    %863 = vmatpush1.msra.mxu0 0.0
    %864 = vmatprep.subr.mxu0 0.0
    %865 = vmatpush1.msra.mxu0 0.0
    %866 = vmatprep.subr.mxu0 0.0
    %867 = vmatpush1.msra.mxu0 0.0
    %868 = vmatprep.subr.mxu0 0.0
    %869 = vmatpush1.msra.mxu0 0.0
    %870 = vmatprep.mubr.f32.mxu0 0.0
    %871 = vmatmul.mubr.f32.gmra.mrb[0].mxu0 %v680
    %v872 = vpop.f32.mrb[0].mxu0
    %v873 = vadd.f32 0.0, %v872
    %v874 = vpop.f32.mrb[0].mxu0
    %875 = vdwg.mxu0
    %v876 = vadd.f32 %v684, %v802
    %v877 = vmul.f32 %v876, 0.5
    %v878 = vtanh.pop %v877
    %v879 = vmul.f32 %v878, 0.5
    %v880 = vadd.f32 %v879, 0.5
    %v881 = vadd.f32 %v685, %v804
    %v882 = vmul.f32 %v881, 0.5
    %v883 = vtanh.pop %v882
    %v884 = vmul.f32 %v883, 0.5
    %v885 = vadd.f32 %v884, 0.5
    %v886 = vadd.f32 %v873, %v459
    %v887 = vmul.f32 %v880, %v886
    %v888 = vadd.f32 %v686, %v887
    %v889 = vtanh.pop %v888
    %v890 = vsub.f32 1.0, %v885
    %v891 = vmul.f32 %v890, %v889
    %v892 = vmul.f32 %v885, %v680
    %v893 = vadd.f32 %v891, %v892
    %s894 = scalar_lea.vmem [#allocation3], 8
    %v895 = vld [vmem:[%s894] sm:$0xff]
    %v896 = vmul.f32 %v895, %v893
    %v897 = vsub.f32 1.0, %v895
    %v898 = vmul.f32 %v897, 0.0
    %v899 = vadd.f32 %v896, %v898
    %s900 = scalar_lea.vmem %s6, 8
    %901 = vst [vmem:[%s900] sm:$0xff] %v899
    %v902 = vsub.f32 %v893, %v680
    %v903 = vmul.f32 %v895, %v902
    %v904 = vadd.f32 %v680, %v903
    %s905 = smul.u32 2, 3
    %s906 = smul.addr %s905, 8
    %s907 = scalar_lea.vmem [#allocation2], %s906
    %v908 = vld [vmem:[%s907] sm:$0xff]
    %v909 = vld [vmem:[%s907 + $0x8] sm:$0xff]
    %v910 = vld [vmem:[%s907 + $0x10] sm:$0xff]
    %v911 = vld [vmem:[#allocation6] sm:$0xff]
    %v912 = vld [vmem:[#allocation6 + $0x8] sm:$0xff]
    %v913 = vld [vmem:[#allocation6 + $0x10] sm:$0xff]
    %v914 = vld [vmem:[#allocation6 + $0x18] sm:$0xff]
    %v915 = vld [vmem:[#allocation6 + $0x20] sm:$0xff]
    %v916 = vld [vmem:[#allocation6 + $0x28] sm:$0xff]
    %v917 = vld [vmem:[#allocation6 + $0x30] sm:$0xff]
    %v918 = vld [vmem:[#allocation6 + $0x38] sm:$0xff]
    %v919 = vld [vmem:[#allocation6 + $0x40] sm:$0xff]
    %v920 = vld [vmem:[#allocation6 + $0x48] sm:$0xff]
    %v921 = vld [vmem:[#allocation6 + $0x50] sm:$0xff]
    %v922 = vld [vmem:[#allocation6 + $0x58] sm:$0xff]
    %v923 = vld [vmem:[#allocation6 + $0x60] sm:$0xff]
    %v924 = vld [vmem:[#allocation6 + $0x68] sm:$0xff]
    %v925 = vld [vmem:[#allocation6 + $0x70] sm:$0xff]
    %v926 = vld [vmem:[#allocation6 + $0x78] sm:$0xff]
    %v927 = vld [vmem:[#allocation6 + $0x80] sm:$0xff]
    %v928 = vld [vmem:[#allocation6 + $0x88] sm:$0xff]
    %v929 = vld [vmem:[#allocation6 + $0x90] sm:$0xff]
    %v930 = vld [vmem:[#allocation6 + $0x98] sm:$0xff]
    %v931 = vld [vmem:[#allocation6 + $0xa0] sm:$0xff]
    %v932 = vld [vmem:[#allocation6 + $0xa8] sm:$0xff]
    %v933 = vld [vmem:[#allocation6 + $0xb0] sm:$0xff]
    %v934 = vld [vmem:[#allocation6 + $0xb8] sm:$0xff]
    %v935 = vld [vmem:[#allocation6 + $0xc0] sm:$0xff]
    %v936 = vld [vmem:[#allocation6 + $0xc8] sm:$0xff]
    %v937 = vld [vmem:[#allocation6 + $0xd0] sm:$0xff]
    %v938 = vld [vmem:[#allocation6 + $0xd8] sm:$0xff]
    %v939 = vld [vmem:[#allocation6 + $0xe0] sm:$0xff]
    %v940 = vld [vmem:[#allocation6 + $0xe8] sm:$0xff]
    %v941 = vld [vmem:[#allocation6 + $0xf0] sm:$0xff]
    %v942 = vld [vmem:[#allocation6 + $0xf8] sm:$0xff]
    %v943 = vld [vmem:[#allocation6 + $0x100] sm:$0xff]
    %v944 = vld [vmem:[#allocation6 + $0x108] sm:$0xff]
    %v945 = vld [vmem:[#allocation6 + $0x110] sm:$0xff]
    %v946 = vld [vmem:[#allocation6 + $0x118] sm:$0xff]
    %v947 = vld [vmem:[#allocation6 + $0x120] sm:$0xff]
    %v948 = vld [vmem:[#allocation6 + $0x128] sm:$0xff]
    %v949 = vld [vmem:[#allocation6 + $0x130] sm:$0xff]
    %v950 = vld [vmem:[#allocation6 + $0x138] sm:$0xff]
    %v951 = vld [vmem:[#allocation6 + $0x140] sm:$0xff]
    %v952 = vld [vmem:[#allocation6 + $0x148] sm:$0xff]
    %v953 = vld [vmem:[#allocation6 + $0x150] sm:$0xff]
    %v954 = vld [vmem:[#allocation6 + $0x158] sm:$0xff]
    %v955 = vld [vmem:[#allocation6 + $0x160] sm:$0xff]
    %v956 = vld [vmem:[#allocation6 + $0x168] sm:$0xff]
    %v957 = vld [vmem:[#allocation6 + $0x170] sm:$0xff]
    %v958 = vld [vmem:[#allocation6 + $0x178] sm:$0xff]
    %959 = vmatprep.subr.mxu0 %v912
    %960 = vmatpush1.msra.mxu0 %v911
    %961 = vmatprep.subr.mxu0 %v915
    %962 = vmatpush1.msra.mxu0 %v914
    %963 = vmatprep.subr.mxu0 %v918
    %964 = vmatpush1.msra.mxu0 %v917
    %965 = vmatprep.subr.mxu0 %v921
    %966 = vmatpush1.msra.mxu0 %v920
    %967 = vmatprep.subr.mxu0 %v924
    %968 = vmatpush1.msra.mxu0 %v923
    %969 = vmatprep.subr.mxu0 %v927
    %970 = vmatpush1.msra.mxu0 %v926
    %971 = vmatprep.subr.mxu0 %v930
    %972 = vmatpush1.msra.mxu0 %v929
    %973 = vmatprep.subr.mxu0 %v933
    %974 = vmatpush1.msra.mxu0 %v932
    %975 = vmatprep.subr.mxu0 %v936
    %976 = vmatpush1.msra.mxu0 %v935
    %977 = vmatprep.subr.mxu0 %v939
    %978 = vmatpush1.msra.mxu0 %v938
    %979 = vmatprep.subr.mxu0 %v942
    %980 = vmatpush1.msra.mxu0 %v941
    %981 = vmatprep.subr.mxu0 %v945
    %982 = vmatpush1.msra.mxu0 %v944
    %983 = vmatprep.subr.mxu0 %v948
    %984 = vmatpush1.msra.mxu0 %v947
    %985 = vmatprep.subr.mxu0 %v951
    %986 = vmatpush1.msra.mxu0 %v950
    %987 = vmatprep.subr.mxu0 %v954
    %988 = vmatpush1.msra.mxu0 %v953
    %989 = vmatprep.subr.mxu0 %v957
    %990 = vmatpush1.msra.mxu0 %v956
    %991 = vmatprep.subr.mxu0 0.0
    %992 = vmatpush1.msra.mxu0 0.0
    %993 = vmatprep.subr.mxu0 0.0
    %994 = vmatpush1.msra.mxu0 0.0
    %995 = vmatprep.subr.mxu0 0.0
    %996 = vmatpush1.msra.mxu0 0.0
    %997 = vmatprep.subr.mxu0 0.0
    %998 = vmatpush1.msra.mxu0 0.0
    %999 = vmatprep.subr.mxu0 0.0
    %1000 = vmatpush1.msra.mxu0 0.0
    %1001 = vmatprep.subr.mxu0 0.0
    %1002 = vmatpush1.msra.mxu0 0.0
    %1003 = vmatprep.subr.mxu0 0.0
    %1004 = vmatpush1.msra.mxu0 0.0
    %1005 = vmatprep.subr.mxu0 0.0
    %1006 = vmatpush1.msra.mxu0 0.0
    %1007 = vmatprep.subr.mxu0 0.0
    %1008 = vmatpush1.msra.mxu0 0.0
    %1009 = vmatprep.subr.mxu0 0.0
    %1010 = vmatpush1.msra.mxu0 0.0
    %1011 = vmatprep.subr.mxu0 0.0
    %1012 = vmatpush1.msra.mxu0 0.0
    %1013 = vmatprep.subr.mxu0 0.0
    %1014 = vmatpush1.msra.mxu0 0.0
    %1015 = vmatprep.subr.mxu0 0.0
    %1016 = vmatpush1.msra.mxu0 0.0
    %1017 = vmatprep.subr.mxu0 0.0
    %1018 = vmatpush1.msra.mxu0 0.0
    %1019 = vmatprep.subr.mxu0 0.0
    %1020 = vmatpush1.msra.mxu0 0.0
    %1021 = vmatprep.subr.mxu0 0.0
    %1022 = vmatpush1.msra.mxu0 0.0
    %1023 = vmatprep.mubr.f32.mxu0 0.0
    %1024 = vmatmul.mubr.f32.gmra.mrb[0].mxu0 %v904
    %v1025 = vpop.f32.mrb[0].mxu0
    %v1026 = vadd.f32 0.0, %v1025
    %v1027 = vpop.f32.mrb[0].mxu0
    %v1028 = vadd.f32 0.0, %v1027
    %1029 = vdwg.mxu0
    %1030 = vmatprep.subr.mxu0 0.0
    %1031 = vmatpush1.msra.mxu0 %v913
    %1032 = vmatprep.subr.mxu0 0.0
    %1033 = vmatpush1.msra.mxu0 %v916
    %1034 = vmatprep.subr.mxu0 0.0
    %1035 = vmatpush1.msra.mxu0 %v919
    %1036 = vmatprep.subr.mxu0 0.0
    %1037 = vmatpush1.msra.mxu0 %v922
    %1038 = vmatprep.subr.mxu0 0.0
    %1039 = vmatpush1.msra.mxu0 %v925
    %1040 = vmatprep.subr.mxu0 0.0
    %1041 = vmatpush1.msra.mxu0 %v928
    %1042 = vmatprep.subr.mxu0 0.0
    %1043 = vmatpush1.msra.mxu0 %v931
    %1044 = vmatprep.subr.mxu0 0.0
    %1045 = vmatpush1.msra.mxu0 %v934
    %1046 = vmatprep.subr.mxu0 0.0
    %1047 = vmatpush1.msra.mxu0 %v937
    %1048 = vmatprep.subr.mxu0 0.0
    %1049 = vmatpush1.msra.mxu0 %v940
    %1050 = vmatprep.subr.mxu0 0.0
    %1051 = vmatpush1.msra.mxu0 %v943
    %1052 = vmatprep.subr.mxu0 0.0
    %1053 = vmatpush1.msra.mxu0 %v946
    %1054 = vmatprep.subr.mxu0 0.0
    %1055 = vmatpush1.msra.mxu0 %v949
    %1056 = vmatprep.subr.mxu0 0.0
    %1057 = vmatpush1.msra.mxu0 %v952
    %1058 = vmatprep.subr.mxu0 0.0
    %1059 = vmatpush1.msra.mxu0 %v955
    %1060 = vmatprep.subr.mxu0 0.0
    %1061 = vmatpush1.msra.mxu0 %v958
    %1062 = vmatprep.subr.mxu0 0.0
    %1063 = vmatpush1.msra.mxu0 0.0
    %1064 = vmatprep.subr.mxu0 0.0
    %1065 = vmatpush1.msra.mxu0 0.0
    %1066 = vmatprep.subr.mxu0 0.0
    %1067 = vmatpush1.msra.mxu0 0.0
    %1068 = vmatprep.subr.mxu0 0.0
    %1069 = vmatpush1.msra.mxu0 0.0
    %1070 = vmatprep.subr.mxu0 0.0
    %1071 = vmatpush1.msra.mxu0 0.0
    %1072 = vmatprep.subr.mxu0 0.0
    %1073 = vmatpush1.msra.mxu0 0.0
    %1074 = vmatprep.subr.mxu0 0.0
    %1075 = vmatpush1.msra.mxu0 0.0
    %1076 = vmatprep.subr.mxu0 0.0
    %1077 = vmatpush1.msra.mxu0 0.0
    %1078 = vmatprep.subr.mxu0 0.0
    %1079 = vmatpush1.msra.mxu0 0.0
    %1080 = vmatprep.subr.mxu0 0.0
    %1081 = vmatpush1.msra.mxu0 0.0
    %1082 = vmatprep.subr.mxu0 0.0
    %1083 = vmatpush1.msra.mxu0 0.0
    %1084 = vmatprep.subr.mxu0 0.0
    %1085 = vmatpush1.msra.mxu0 0.0
    %1086 = vmatprep.subr.mxu0 0.0
    %1087 = vmatpush1.msra.mxu0 0.0
    %1088 = vmatprep.subr.mxu0 0.0
    %1089 = vmatpush1.msra.mxu0 0.0
    %1090 = vmatprep.subr.mxu0 0.0
    %1091 = vmatpush1.msra.mxu0 0.0
    %1092 = vmatprep.subr.mxu0 0.0
    %1093 = vmatpush1.msra.mxu0 0.0
    %1094 = vmatprep.mubr.f32.mxu0 0.0
    %1095 = vmatmul.mubr.f32.gmra.mrb[0].mxu0 %v904
    %v1096 = vpop.f32.mrb[0].mxu0
    %v1097 = vadd.f32 0.0, %v1096
    %v1098 = vpop.f32.mrb[0].mxu0
    %1099 = vdwg.mxu0
    %v1100 = vadd.f32 %v908, %v1026
    %v1101 = vmul.f32 %v1100, 0.5
    %v1102 = vtanh.pop %v1101
    %v1103 = vmul.f32 %v1102, 0.5
    %v1104 = vadd.f32 %v1103, 0.5
    %v1105 = vadd.f32 %v909, %v1028
    %v1106 = vmul.f32 %v1105, 0.5
    %v1107 = vtanh.pop %v1106
    %v1108 = vmul.f32 %v1107, 0.5
    %v1109 = vadd.f32 %v1108, 0.5
    %v1110 = vadd.f32 %v1097, %v459
    %v1111 = vmul.f32 %v1104, %v1110
    %v1112 = vadd.f32 %v910, %v1111
    %v1113 = vtanh.pop %v1112
    %v1114 = vsub.f32 1.0, %v1109
    %v1115 = vmul.f32 %v1114, %v1113
    %v1116 = vmul.f32 %v1109, %v904
    %v1117 = vadd.f32 %v1115, %v1116
    %s1118 = scalar_lea.vmem [#allocation3], 16
    %v1119 = vld [vmem:[%s1118] sm:$0xff]
    %v1120 = vmul.f32 %v1119, %v1117
    %v1121 = vsub.f32 1.0, %v1119
    %v1122 = vmul.f32 %v1121, 0.0
    %v1123 = vadd.f32 %v1120, %v1122
    %s1124 = scalar_lea.vmem %s6, 16
    %1125 = vst [vmem:[%s1124] sm:$0xff] %v1123
    %v1126 = vsub.f32 %v1117, %v904
    %v1127 = vmul.f32 %v1119, %v1126
    %v1128 = vadd.f32 %v904, %v1127
    %s1129 = smul.u32 3, 3
    %s1130 = smul.addr %s1129, 8
    %s1131 = scalar_lea.vmem [#allocation2], %s1130
    %v1132 = vld [vmem:[%s1131] sm:$0xff]
    %v1133 = vld [vmem:[%s1131 + $0x8] sm:$0xff]
    %v1134 = vld [vmem:[%s1131 + $0x10] sm:$0xff]
    %v1135 = vld [vmem:[#allocation6] sm:$0xff]
    %v1136 = vld [vmem:[#allocation6 + $0x8] sm:$0xff]
    %v1137 = vld [vmem:[#allocation6 + $0x10] sm:$0xff]
    %v1138 = vld [vmem:[#allocation6 + $0x18] sm:$0xff]
    %v1139 = vld [vmem:[#allocation6 + $0x20] sm:$0xff]
    %v1140 = vld [vmem:[#allocation6 + $0x28] sm:$0xff]
    %v1141 = vld [vmem:[#allocation6 + $0x30] sm:$0xff]
    %v1142 = vld [vmem:[#allocation6 + $0x38] sm:$0xff]
    %v1143 = vld [vmem:[#allocation6 + $0x40] sm:$0xff]
    %v1144 = vld [vmem:[#allocation6 + $0x48] sm:$0xff]
    %v1145 = vld [vmem:[#allocation6 + $0x50] sm:$0xff]
    %v1146 = vld [vmem:[#allocation6 + $0x58] sm:$0xff]
    %v1147 = vld [vmem:[#allocation6 + $0x60] sm:$0xff]
    %v1148 = vld [vmem:[#allocation6 + $0x68] sm:$0xff]
    %v1149 = vld [vmem:[#allocation6 + $0x70] sm:$0xff]
    %v1150 = vld [vmem:[#allocation6 + $0x78] sm:$0xff]
    %v1151 = vld [vmem:[#allocation6 + $0x80] sm:$0xff]
    %v1152 = vld [vmem:[#allocation6 + $0x88] sm:$0xff]
    %v1153 = vld [vmem:[#allocation6 + $0x90] sm:$0xff]
    %v1154 = vld [vmem:[#allocation6 + $0x98] sm:$0xff]
    %v1155 = vld [vmem:[#allocation6 + $0xa0] sm:$0xff]
    %v1156 = vld [vmem:[#allocation6 + $0xa8] sm:$0xff]
    %v1157 = vld [vmem:[#allocation6 + $0xb0] sm:$0xff]
    %v1158 = vld [vmem:[#allocation6 + $0xb8] sm:$0xff]
    %v1159 = vld [vmem:[#allocation6 + $0xc0] sm:$0xff]
    %v1160 = vld [vmem:[#allocation6 + $0xc8] sm:$0xff]
    %v1161 = vld [vmem:[#allocation6 + $0xd0] sm:$0xff]
    %v1162 = vld [vmem:[#allocation6 + $0xd8] sm:$0xff]
    %v1163 = vld [vmem:[#allocation6 + $0xe0] sm:$0xff]
    %v1164 = vld [vmem:[#allocation6 + $0xe8] sm:$0xff]
    %v1165 = vld [vmem:[#allocation6 + $0xf0] sm:$0xff]
    %v1166 = vld [vmem:[#allocation6 + $0xf8] sm:$0xff]
    %v1167 = vld [vmem:[#allocation6 + $0x100] sm:$0xff]
    %v1168 = vld [vmem:[#allocation6 + $0x108] sm:$0xff]
    %v1169 = vld [vmem:[#allocation6 + $0x110] sm:$0xff]
    %v1170 = vld [vmem:[#allocation6 + $0x118] sm:$0xff]
    %v1171 = vld [vmem:[#allocation6 + $0x120] sm:$0xff]
    %v1172 = vld [vmem:[#allocation6 + $0x128] sm:$0xff]
    %v1173 = vld [vmem:[#allocation6 + $0x130] sm:$0xff]
    %v1174 = vld [vmem:[#allocation6 + $0x138] sm:$0xff]
    %v1175 = vld [vmem:[#allocation6 + $0x140] sm:$0xff]
    %v1176 = vld [vmem:[#allocation6 + $0x148] sm:$0xff]
    %v1177 = vld [vmem:[#allocation6 + $0x150] sm:$0xff]
    %v1178 = vld [vmem:[#allocation6 + $0x158] sm:$0xff]
    %v1179 = vld [vmem:[#allocation6 + $0x160] sm:$0xff]
    %v1180 = vld [vmem:[#allocation6 + $0x168] sm:$0xff]
    %v1181 = vld [vmem:[#allocation6 + $0x170] sm:$0xff]
    %v1182 = vld [vmem:[#allocation6 + $0x178] sm:$0xff]
    %1183 = vmatprep.subr.mxu0 %v1136
    %1184 = vmatpush1.msra.mxu0 %v1135
    %1185 = vmatprep.subr.mxu0 %v1139
    %1186 = vmatpush1.msra.mxu0 %v1138
    %1187 = vmatprep.subr.mxu0 %v1142
    %1188 = vmatpush1.msra.mxu0 %v1141
    %1189 = vmatprep.subr.mxu0 %v1145
    %1190 = vmatpush1.msra.mxu0 %v1144
    %1191 = vmatprep.subr.mxu0 %v1148
    %1192 = vmatpush1.msra.mxu0 %v1147
    %1193 = vmatprep.subr.mxu0 %v1151
    %1194 = vmatpush1.msra.mxu0 %v1150
    %1195 = vmatprep.subr.mxu0 %v1154
    %1196 = vmatpush1.msra.mxu0 %v1153
    %1197 = vmatprep.subr.mxu0 %v1157
    %1198 = vmatpush1.msra.mxu0 %v1156
    %1199 = vmatprep.subr.mxu0 %v1160
    %1200 = vmatpush1.msra.mxu0 %v1159
    %1201 = vmatprep.subr.mxu0 %v1163
    %1202 = vmatpush1.msra.mxu0 %v1162
    %1203 = vmatprep.subr.mxu0 %v1166
    %1204 = vmatpush1.msra.mxu0 %v1165
    %1205 = vmatprep.subr.mxu0 %v1169
    %1206 = vmatpush1.msra.mxu0 %v1168
    %1207 = vmatprep.subr.mxu0 %v1172
    %1208 = vmatpush1.msra.mxu0 %v1171
    %1209 = vmatprep.subr.mxu0 %v1175
    %1210 = vmatpush1.msra.mxu0 %v1174
    %1211 = vmatprep.subr.mxu0 %v1178
    %1212 = vmatpush1.msra.mxu0 %v1177
    %1213 = vmatprep.subr.mxu0 %v1181
    %1214 = vmatpush1.msra.mxu0 %v1180
    %1215 = vmatprep.subr.mxu0 0.0
    %1216 = vmatpush1.msra.mxu0 0.0
    %1217 = vmatprep.subr.mxu0 0.0
    %1218 = vmatpush1.msra.mxu0 0.0
    %1219 = vmatprep.subr.mxu0 0.0
    %1220 = vmatpush1.msra.mxu0 0.0
    %1221 = vmatprep.subr.mxu0 0.0
    %1222 = vmatpush1.msra.mxu0 0.0
    %1223 = vmatprep.subr.mxu0 0.0
    %1224 = vmatpush1.msra.mxu0 0.0
    %1225 = vmatprep.subr.mxu0 0.0
    %1226 = vmatpush1.msra.mxu0 0.0
    %1227 = vmatprep.subr.mxu0 0.0
    %1228 = vmatpush1.msra.mxu0 0.0
    %1229 = vmatprep.subr.mxu0 0.0
    %1230 = vmatpush1.msra.mxu0 0.0
    %1231 = vmatprep.subr.mxu0 0.0
    %1232 = vmatpush1.msra.mxu0 0.0
    %1233 = vmatprep.subr.mxu0 0.0
    %1234 = vmatpush1.msra.mxu0 0.0
    %1235 = vmatprep.subr.mxu0 0.0
    %1236 = vmatpush1.msra.mxu0 0.0
    %1237 = vmatprep.subr.mxu0 0.0
    %1238 = vmatpush1.msra.mxu0 0.0
    %1239 = vmatprep.subr.mxu0 0.0
    %1240 = vmatpush1.msra.mxu0 0.0
    %1241 = vmatprep.subr.mxu0 0.0
    %1242 = vmatpush1.msra.mxu0 0.0
    %1243 = vmatprep.subr.mxu0 0.0
    %1244 = vmatpush1.msra.mxu0 0.0
    %1245 = vmatprep.subr.mxu0 0.0
    %1246 = vmatpush1.msra.mxu0 0.0
    %1247 = vmatprep.mubr.f32.mxu0 0.0
    %1248 = vmatmul.mubr.f32.gmra.mrb[0].mxu0 %v1128
    %v1249 = vpop.f32.mrb[0].mxu0
    %v1250 = vadd.f32 0.0, %v1249
    %v1251 = vpop.f32.mrb[0].mxu0
    %v1252 = vadd.f32 0.0, %v1251
    %1253 = vdwg.mxu0
    %1254 = vmatprep.subr.mxu0 0.0
    %1255 = vmatpush1.msra.mxu0 %v1137
    %1256 = vmatprep.subr.mxu0 0.0
    %1257 = vmatpush1.msra.mxu0 %v1140
    %1258 = vmatprep.subr.mxu0 0.0
    %1259 = vmatpush1.msra.mxu0 %v1143
    %1260 = vmatprep.subr.mxu0 0.0
    %1261 = vmatpush1.msra.mxu0 %v1146
    %1262 = vmatprep.subr.mxu0 0.0
    %1263 = vmatpush1.msra.mxu0 %v1149
    %1264 = vmatprep.subr.mxu0 0.0
    %1265 = vmatpush1.msra.mxu0 %v1152
    %1266 = vmatprep.subr.mxu0 0.0
    %1267 = vmatpush1.msra.mxu0 %v1155
    %1268 = vmatprep.subr.mxu0 0.0
    %1269 = vmatpush1.msra.mxu0 %v1158
    %1270 = vmatprep.subr.mxu0 0.0
    %1271 = vmatpush1.msra.mxu0 %v1161
    %1272 = vmatprep.subr.mxu0 0.0
    %1273 = vmatpush1.msra.mxu0 %v1164
    %1274 = vmatprep.subr.mxu0 0.0
    %1275 = vmatpush1.msra.mxu0 %v1167
    %1276 = vmatprep.subr.mxu0 0.0
    %1277 = vmatpush1.msra.mxu0 %v1170
    %1278 = vmatprep.subr.mxu0 0.0
    %1279 = vmatpush1.msra.mxu0 %v1173
    %1280 = vmatprep.subr.mxu0 0.0
    %1281 = vmatpush1.msra.mxu0 %v1176
    %1282 = vmatprep.subr.mxu0 0.0
    %1283 = vmatpush1.msra.mxu0 %v1179
    %1284 = vmatprep.subr.mxu0 0.0
    %1285 = vmatpush1.msra.mxu0 %v1182
    %1286 = vmatprep.subr.mxu0 0.0
    %1287 = vmatpush1.msra.mxu0 0.0
    %1288 = vmatprep.subr.mxu0 0.0
    %1289 = vmatpush1.msra.mxu0 0.0
    %1290 = vmatprep.subr.mxu0 0.0
    %1291 = vmatpush1.msra.mxu0 0.0
    %1292 = vmatprep.subr.mxu0 0.0
    %1293 = vmatpush1.msra.mxu0 0.0
    %1294 = vmatprep.subr.mxu0 0.0
    %1295 = vmatpush1.msra.mxu0 0.0
    %1296 = vmatprep.subr.mxu0 0.0
    %1297 = vmatpush1.msra.mxu0 0.0
    %1298 = vmatprep.subr.mxu0 0.0
    %1299 = vmatpush1.msra.mxu0 0.0
    %1300 = vmatprep.subr.mxu0 0.0
    %1301 = vmatpush1.msra.mxu0 0.0
    %1302 = vmatprep.subr.mxu0 0.0
    %1303 = vmatpush1.msra.mxu0 0.0
    %1304 = vmatprep.subr.mxu0 0.0
    %1305 = vmatpush1.msra.mxu0 0.0
    %1306 = vmatprep.subr.mxu0 0.0
    %1307 = vmatpush1.msra.mxu0 0.0
    %1308 = vmatprep.subr.mxu0 0.0
    %1309 = vmatpush1.msra.mxu0 0.0
    %1310 = vmatprep.subr.mxu0 0.0
    %1311 = vmatpush1.msra.mxu0 0.0
    %1312 = vmatprep.subr.mxu0 0.0
    %1313 = vmatpush1.msra.mxu0 0.0
    %1314 = vmatprep.subr.mxu0 0.0
    %1315 = vmatpush1.msra.mxu0 0.0
    %1316 = vmatprep.subr.mxu0 0.0
    %1317 = vmatpush1.msra.mxu0 0.0
    %1318 = vmatprep.mubr.f32.mxu0 0.0
    %1319 = vmatmul.mubr.f32.gmra.mrb[0].mxu0 %v1128
    %v1320 = vpop.f32.mrb[0].mxu0
    %v1321 = vadd.f32 0.0, %v1320
    %v1322 = vpop.f32.mrb[0].mxu0
    %1323 = vdwg.mxu0
    %v1324 = vadd.f32 %v1132, %v1250
    %v1325 = vmul.f32 %v1324, 0.5
    %v1326 = vtanh.pop %v1325
    %v1327 = vmul.f32 %v1326, 0.5
    %v1328 = vadd.f32 %v1327, 0.5
    %v1329 = vadd.f32 %v1133, %v1252
    %v1330 = vmul.f32 %v1329, 0.5
    %v1331 = vtanh.pop %v1330
    %v1332 = vmul.f32 %v1331, 0.5
    %v1333 = vadd.f32 %v1332, 0.5
    %v1334 = vadd.f32 %v1321, %v459
    %v1335 = vmul.f32 %v1328, %v1334
    %v1336 = vadd.f32 %v1134, %v1335
    %v1337 = vtanh.pop %v1336
    %v1338 = vsub.f32 1.0, %v1333
    %v1339 = vmul.f32 %v1338, %v1337
    %v1340 = vmul.f32 %v1333, %v1128
    %v1341 = vadd.f32 %v1339, %v1340
    %s1342 = scalar_lea.vmem [#allocation3], 24
    %v1343 = vld [vmem:[%s1342] sm:$0xff]
    %v1344 = vmul.f32 %v1343, %v1341
    %v1345 = vsub.f32 1.0, %v1343
    %v1346 = vmul.f32 %v1345, 0.0
    %v1347 = vadd.f32 %v1344, %v1346
    %s1348 = scalar_lea.vmem %s6, 24
    %1349 = vst [vmem:[%s1348] sm:$0xff] %v1347
    %v1350 = vsub.f32 %v1341, %v1128
    %v1351 = vmul.f32 %v1343, %v1350
    %v1352 = vadd.f32 %v1128, %v1351
    %s1353 = smul.u32 4, 3
    %s1354 = smul.addr %s1353, 8
    %s1355 = scalar_lea.vmem [#allocation2], %s1354
    %v1356 = vld [vmem:[%s1355] sm:$0xff]
    %v1357 = vld [vmem:[%s1355 + $0x8] sm:$0xff]
    %v1358 = vld [vmem:[%s1355 + $0x10] sm:$0xff]
    %v1359 = vld [vmem:[#allocation6] sm:$0xff]
    %v1360 = vld [vmem:[#allocation6 + $0x8] sm:$0xff]
    %v1361 = vld [vmem:[#allocation6 + $0x10] sm:$0xff]
    %v1362 = vld [vmem:[#allocation6 + $0x18] sm:$0xff]
    %v1363 = vld [vmem:[#allocation6 + $0x20] sm:$0xff]
    %v1364 = vld [vmem:[#allocation6 + $0x28] sm:$0xff]
    %v1365 = vld [vmem:[#allocation6 + $0x30] sm:$0xff]
    %v1366 = vld [vmem:[#allocation6 + $0x38] sm:$0xff]
    %v1367 = vld [vmem:[#allocation6 + $0x40] sm:$0xff]
    %v1368 = vld [vmem:[#allocation6 + $0x48] sm:$0xff]
    %v1369 = vld [vmem:[#allocation6 + $0x50] sm:$0xff]
    %v1370 = vld [vmem:[#allocation6 + $0x58] sm:$0xff]
    %v1371 = vld [vmem:[#allocation6 + $0x60] sm:$0xff]
    %v1372 = vld [vmem:[#allocation6 + $0x68] sm:$0xff]
    %v1373 = vld [vmem:[#allocation6 + $0x70] sm:$0xff]
    %v1374 = vld [vmem:[#allocation6 + $0x78] sm:$0xff]
    %v1375 = vld [vmem:[#allocation6 + $0x80] sm:$0xff]
    %v1376 = vld [vmem:[#allocation6 + $0x88] sm:$0xff]
    %v1377 = vld [vmem:[#allocation6 + $0x90] sm:$0xff]
    %v1378 = vld [vmem:[#allocation6 + $0x98] sm:$0xff]
    %v1379 = vld [vmem:[#allocation6 + $0xa0] sm:$0xff]
    %v1380 = vld [vmem:[#allocation6 + $0xa8] sm:$0xff]
    %v1381 = vld [vmem:[#allocation6 + $0xb0] sm:$0xff]
    %v1382 = vld [vmem:[#allocation6 + $0xb8] sm:$0xff]
    %v1383 = vld [vmem:[#allocation6 + $0xc0] sm:$0xff]
    %v1384 = vld [vmem:[#allocation6 + $0xc8] sm:$0xff]
    %v1385 = vld [vmem:[#allocation6 + $0xd0] sm:$0xff]
    %v1386 = vld [vmem:[#allocation6 + $0xd8] sm:$0xff]
    %v1387 = vld [vmem:[#allocation6 + $0xe0] sm:$0xff]
    %v1388 = vld [vmem:[#allocation6 + $0xe8] sm:$0xff]
    %v1389 = vld [vmem:[#allocation6 + $0xf0] sm:$0xff]
    %v1390 = vld [vmem:[#allocation6 + $0xf8] sm:$0xff]
    %v1391 = vld [vmem:[#allocation6 + $0x100] sm:$0xff]
    %v1392 = vld [vmem:[#allocation6 + $0x108] sm:$0xff]
    %v1393 = vld [vmem:[#allocation6 + $0x110] sm:$0xff]
    %v1394 = vld [vmem:[#allocation6 + $0x118] sm:$0xff]
    %v1395 = vld [vmem:[#allocation6 + $0x120] sm:$0xff]
    %v1396 = vld [vmem:[#allocation6 + $0x128] sm:$0xff]
    %v1397 = vld [vmem:[#allocation6 + $0x130] sm:$0xff]
    %v1398 = vld [vmem:[#allocation6 + $0x138] sm:$0xff]
    %v1399 = vld [vmem:[#allocation6 + $0x140] sm:$0xff]
    %v1400 = vld [vmem:[#allocation6 + $0x148] sm:$0xff]
    %v1401 = vld [vmem:[#allocation6 + $0x150] sm:$0xff]
    %v1402 = vld [vmem:[#allocation6 + $0x158] sm:$0xff]
    %v1403 = vld [vmem:[#allocation6 + $0x160] sm:$0xff]
    %v1404 = vld [vmem:[#allocation6 + $0x168] sm:$0xff]
    %v1405 = vld [vmem:[#allocation6 + $0x170] sm:$0xff]
    %v1406 = vld [vmem:[#allocation6 + $0x178] sm:$0xff]
    %1407 = vmatprep.subr.mxu0 %v1360
    %1408 = vmatpush1.msra.mxu0 %v1359
    %1409 = vmatprep.subr.mxu0 %v1363
    %1410 = vmatpush1.msra.mxu0 %v1362
    %1411 = vmatprep.subr.mxu0 %v1366
    %1412 = vmatpush1.msra.mxu0 %v1365
    %1413 = vmatprep.subr.mxu0 %v1369
    %1414 = vmatpush1.msra.mxu0 %v1368
    %1415 = vmatprep.subr.mxu0 %v1372
    %1416 = vmatpush1.msra.mxu0 %v1371
    %1417 = vmatprep.subr.mxu0 %v1375
    %1418 = vmatpush1.msra.mxu0 %v1374
    %1419 = vmatprep.subr.mxu0 %v1378
    %1420 = vmatpush1.msra.mxu0 %v1377
    %1421 = vmatprep.subr.mxu0 %v1381
    %1422 = vmatpush1.msra.mxu0 %v1380
    %1423 = vmatprep.subr.mxu0 %v1384
    %1424 = vmatpush1.msra.mxu0 %v1383
    %1425 = vmatprep.subr.mxu0 %v1387
    %1426 = vmatpush1.msra.mxu0 %v1386
    %1427 = vmatprep.subr.mxu0 %v1390
    %1428 = vmatpush1.msra.mxu0 %v1389
    %1429 = vmatprep.subr.mxu0 %v1393
    %1430 = vmatpush1.msra.mxu0 %v1392
    %1431 = vmatprep.subr.mxu0 %v1396
    %1432 = vmatpush1.msra.mxu0 %v1395
    %1433 = vmatprep.subr.mxu0 %v1399
    %1434 = vmatpush1.msra.mxu0 %v1398
    %1435 = vmatprep.subr.mxu0 %v1402
    %1436 = vmatpush1.msra.mxu0 %v1401
    %1437 = vmatprep.subr.mxu0 %v1405
    %1438 = vmatpush1.msra.mxu0 %v1404
    %1439 = vmatprep.subr.mxu0 0.0
    %1440 = vmatpush1.msra.mxu0 0.0
    %1441 = vmatprep.subr.mxu0 0.0
    %1442 = vmatpush1.msra.mxu0 0.0
    %1443 = vmatprep.subr.mxu0 0.0
    %1444 = vmatpush1.msra.mxu0 0.0
    %1445 = vmatprep.subr.mxu0 0.0
    %1446 = vmatpush1.msra.mxu0 0.0
    %1447 = vmatprep.subr.mxu0 0.0
    %1448 = vmatpush1.msra.mxu0 0.0
    %1449 = vmatprep.subr.mxu0 0.0
    %1450 = vmatpush1.msra.mxu0 0.0
    %1451 = vmatprep.subr.mxu0 0.0
    %1452 = vmatpush1.msra.mxu0 0.0
    %1453 = vmatprep.subr.mxu0 0.0
    %1454 = vmatpush1.msra.mxu0 0.0
    %1455 = vmatprep.subr.mxu0 0.0
    %1456 = vmatpush1.msra.mxu0 0.0
    %1457 = vmatprep.subr.mxu0 0.0
    %1458 = vmatpush1.msra.mxu0 0.0
    %1459 = vmatprep.subr.mxu0 0.0
    %1460 = vmatpush1.msra.mxu0 0.0
    %1461 = vmatprep.subr.mxu0 0.0
    %1462 = vmatpush1.msra.mxu0 0.0
    %1463 = vmatprep.subr.mxu0 0.0
    %1464 = vmatpush1.msra.mxu0 0.0
    %1465 = vmatprep.subr.mxu0 0.0
    %1466 = vmatpush1.msra.mxu0 0.0
    %1467 = vmatprep.subr.mxu0 0.0
    %1468 = vmatpush1.msra.mxu0 0.0
    %1469 = vmatprep.subr.mxu0 0.0
    %1470 = vmatpush1.msra.mxu0 0.0
    %1471 = vmatprep.mubr.f32.mxu0 0.0
    %1472 = vmatmul.mubr.f32.gmra.mrb[0].mxu0 %v1352
    %v1473 = vpop.f32.mrb[0].mxu0
    %v1474 = vadd.f32 0.0, %v1473
    %v1475 = vpop.f32.mrb[0].mxu0
    %v1476 = vadd.f32 0.0, %v1475
    %1477 = vdwg.mxu0
    %1478 = vmatprep.subr.mxu0 0.0
    %1479 = vmatpush1.msra.mxu0 %v1361
    %1480 = vmatprep.subr.mxu0 0.0
    %1481 = vmatpush1.msra.mxu0 %v1364
    %1482 = vmatprep.subr.mxu0 0.0
    %1483 = vmatpush1.msra.mxu0 %v1367
    %1484 = vmatprep.subr.mxu0 0.0
    %1485 = vmatpush1.msra.mxu0 %v1370
    %1486 = vmatprep.subr.mxu0 0.0
    %1487 = vmatpush1.msra.mxu0 %v1373
    %1488 = vmatprep.subr.mxu0 0.0
    %1489 = vmatpush1.msra.mxu0 %v1376
    %1490 = vmatprep.subr.mxu0 0.0
    %1491 = vmatpush1.msra.mxu0 %v1379
    %1492 = vmatprep.subr.mxu0 0.0
    %1493 = vmatpush1.msra.mxu0 %v1382
    %1494 = vmatprep.subr.mxu0 0.0
    %1495 = vmatpush1.msra.mxu0 %v1385
    %1496 = vmatprep.subr.mxu0 0.0
    %1497 = vmatpush1.msra.mxu0 %v1388
    %1498 = vmatprep.subr.mxu0 0.0
    %1499 = vmatpush1.msra.mxu0 %v1391
    %1500 = vmatprep.subr.mxu0 0.0
    %1501 = vmatpush1.msra.mxu0 %v1394
    %1502 = vmatprep.subr.mxu0 0.0
    %1503 = vmatpush1.msra.mxu0 %v1397
    %1504 = vmatprep.subr.mxu0 0.0
    %1505 = vmatpush1.msra.mxu0 %v1400
    %1506 = vmatprep.subr.mxu0 0.0
    %1507 = vmatpush1.msra.mxu0 %v1403
    %1508 = vmatprep.subr.mxu0 0.0
    %1509 = vmatpush1.msra.mxu0 %v1406
    %1510 = vmatprep.subr.mxu0 0.0
    %1511 = vmatpush1.msra.mxu0 0.0
    %1512 = vmatprep.subr.mxu0 0.0
    %1513 = vmatpush1.msra.mxu0 0.0
    %1514 = vmatprep.subr.mxu0 0.0
    %1515 = vmatpush1.msra.mxu0 0.0
    %1516 = vmatprep.subr.mxu0 0.0
    %1517 = vmatpush1.msra.mxu0 0.0
    %1518 = vmatprep.subr.mxu0 0.0
    %1519 = vmatpush1.msra.mxu0 0.0
    %1520 = vmatprep.subr.mxu0 0.0
    %1521 = vmatpush1.msra.mxu0 0.0
    %1522 = vmatprep.subr.mxu0 0.0
    %1523 = vmatpush1.msra.mxu0 0.0
    %1524 = vmatprep.subr.mxu0 0.0
    %1525 = vmatpush1.msra.mxu0 0.0
    %1526 = vmatprep.subr.mxu0 0.0
    %1527 = vmatpush1.msra.mxu0 0.0
    %1528 = vmatprep.subr.mxu0 0.0
    %1529 = vmatpush1.msra.mxu0 0.0
    %1530 = vmatprep.subr.mxu0 0.0
    %1531 = vmatpush1.msra.mxu0 0.0
    %1532 = vmatprep.subr.mxu0 0.0
    %1533 = vmatpush1.msra.mxu0 0.0
    %1534 = vmatprep.subr.mxu0 0.0
    %1535 = vmatpush1.msra.mxu0 0.0
    %1536 = vmatprep.subr.mxu0 0.0
    %1537 = vmatpush1.msra.mxu0 0.0
    %1538 = vmatprep.subr.mxu0 0.0
    %1539 = vmatpush1.msra.mxu0 0.0
    %1540 = vmatprep.subr.mxu0 0.0
    %1541 = vmatpush1.msra.mxu0 0.0
    %1542 = vmatprep.mubr.f32.mxu0 0.0
    %1543 = vmatmul.mubr.f32.gmra.mrb[0].mxu0 %v1352
    %v1544 = vpop.f32.mrb[0].mxu0
    %v1545 = vadd.f32 0.0, %v1544
    %v1546 = vpop.f32.mrb[0].mxu0
    %1547 = vdwg.mxu0
    %v1548 = vadd.f32 %v1356, %v1474
    %v1549 = vmul.f32 %v1548, 0.5
    %v1550 = vtanh.pop %v1549
    %v1551 = vmul.f32 %v1550, 0.5
    %v1552 = vadd.f32 %v1551, 0.5
    %v1553 = vadd.f32 %v1357, %v1476
    %v1554 = vmul.f32 %v1553, 0.5
    %v1555 = vtanh.pop %v1554
    %v1556 = vmul.f32 %v1555, 0.5
    %v1557 = vadd.f32 %v1556, 0.5
    %v1558 = vadd.f32 %v1545, %v459
    %v1559 = vmul.f32 %v1552, %v1558
    %v1560 = vadd.f32 %v1358, %v1559
    %v1561 = vtanh.pop %v1560
    %v1562 = vsub.f32 1.0, %v1557
    %v1563 = vmul.f32 %v1562, %v1561
    %v1564 = vmul.f32 %v1557, %v1352
    %v1565 = vadd.f32 %v1563, %v1564
    %s1566 = scalar_lea.vmem [#allocation3], 32
    %v1567 = vld [vmem:[%s1566] sm:$0xff]
    %v1568 = vmul.f32 %v1567, %v1565
    %v1569 = vsub.f32 1.0, %v1567
    %v1570 = vmul.f32 %v1569, 0.0
    %v1571 = vadd.f32 %v1568, %v1570
    %s1572 = scalar_lea.vmem %s6, 32
    %1573 = vst [vmem:[%s1572] sm:$0xff] %v1571
    %v1574 = vsub.f32 %v1565, %v1352
    %v1575 = vmul.f32 %v1567, %v1574
    %v1576 = vadd.f32 %v1352, %v1575
    %s1577 = smul.u32 5, 3
    %s1578 = smul.addr %s1577, 8
    %s1579 = scalar_lea.vmem [#allocation2], %s1578
    %v1580 = vld [vmem:[%s1579] sm:$0xff]
    %v1581 = vld [vmem:[%s1579 + $0x8] sm:$0xff]
    %v1582 = vld [vmem:[%s1579 + $0x10] sm:$0xff]
    %v1583 = vld [vmem:[#allocation6] sm:$0xff]
    %v1584 = vld [vmem:[#allocation6 + $0x8] sm:$0xff]
    %v1585 = vld [vmem:[#allocation6 + $0x10] sm:$0xff]
    %v1586 = vld [vmem:[#allocation6 + $0x18] sm:$0xff]
    %v1587 = vld [vmem:[#allocation6 + $0x20] sm:$0xff]
    %v1588 = vld [vmem:[#allocation6 + $0x28] sm:$0xff]
    %v1589 = vld [vmem:[#allocation6 + $0x30] sm:$0xff]
    %v1590 = vld [vmem:[#allocation6 + $0x38] sm:$0xff]
    %v1591 = vld [vmem:[#allocation6 + $0x40] sm:$0xff]
    %v1592 = vld [vmem:[#allocation6 + $0x48] sm:$0xff]
    %v1593 = vld [vmem:[#allocation6 + $0x50] sm:$0xff]
    %v1594 = vld [vmem:[#allocation6 + $0x58] sm:$0xff]
    %v1595 = vld [vmem:[#allocation6 + $0x60] sm:$0xff]
    %v1596 = vld [vmem:[#allocation6 + $0x68] sm:$0xff]
    %v1597 = vld [vmem:[#allocation6 + $0x70] sm:$0xff]
    %v1598 = vld [vmem:[#allocation6 + $0x78] sm:$0xff]
    %v1599 = vld [vmem:[#allocation6 + $0x80] sm:$0xff]
    %v1600 = vld [vmem:[#allocation6 + $0x88] sm:$0xff]
    %v1601 = vld [vmem:[#allocation6 + $0x90] sm:$0xff]
    %v1602 = vld [vmem:[#allocation6 + $0x98] sm:$0xff]
    %v1603 = vld [vmem:[#allocation6 + $0xa0] sm:$0xff]
    %v1604 = vld [vmem:[#allocation6 + $0xa8] sm:$0xff]
    %v1605 = vld [vmem:[#allocation6 + $0xb0] sm:$0xff]
    %v1606 = vld [vmem:[#allocation6 + $0xb8] sm:$0xff]
    %v1607 = vld [vmem:[#allocation6 + $0xc0] sm:$0xff]
    %v1608 = vld [vmem:[#allocation6 + $0xc8] sm:$0xff]
    %v1609 = vld [vmem:[#allocation6 + $0xd0] sm:$0xff]
    %v1610 = vld [vmem:[#allocation6 + $0xd8] sm:$0xff]
    %v1611 = vld [vmem:[#allocation6 + $0xe0] sm:$0xff]
    %v1612 = vld [vmem:[#allocation6 + $0xe8] sm:$0xff]
    %v1613 = vld [vmem:[#allocation6 + $0xf0] sm:$0xff]
    %v1614 = vld [vmem:[#allocation6 + $0xf8] sm:$0xff]
    %v1615 = vld [vmem:[#allocation6 + $0x100] sm:$0xff]
    %v1616 = vld [vmem:[#allocation6 + $0x108] sm:$0xff]
    %v1617 = vld [vmem:[#allocation6 + $0x110] sm:$0xff]
    %v1618 = vld [vmem:[#allocation6 + $0x118] sm:$0xff]
    %v1619 = vld [vmem:[#allocation6 + $0x120] sm:$0xff]
    %v1620 = vld [vmem:[#allocation6 + $0x128] sm:$0xff]
    %v1621 = vld [vmem:[#allocation6 + $0x130] sm:$0xff]
    %v1622 = vld [vmem:[#allocation6 + $0x138] sm:$0xff]
    %v1623 = vld [vmem:[#allocation6 + $0x140] sm:$0xff]
    %v1624 = vld [vmem:[#allocation6 + $0x148] sm:$0xff]
    %v1625 = vld [vmem:[#allocation6 + $0x150] sm:$0xff]
    %v1626 = vld [vmem:[#allocation6 + $0x158] sm:$0xff]
    %v1627 = vld [vmem:[#allocation6 + $0x160] sm:$0xff]
    %v1628 = vld [vmem:[#allocation6 + $0x168] sm:$0xff]
    %v1629 = vld [vmem:[#allocation6 + $0x170] sm:$0xff]
    %v1630 = vld [vmem:[#allocation6 + $0x178] sm:$0xff]
    %1631 = vmatprep.subr.mxu0 %v1584
    %1632 = vmatpush1.msra.mxu0 %v1583
    %1633 = vmatprep.subr.mxu0 %v1587
    %1634 = vmatpush1.msra.mxu0 %v1586
    %1635 = vmatprep.subr.mxu0 %v1590
    %1636 = vmatpush1.msra.mxu0 %v1589
    %1637 = vmatprep.subr.mxu0 %v1593
    %1638 = vmatpush1.msra.mxu0 %v1592
    %1639 = vmatprep.subr.mxu0 %v1596
    %1640 = vmatpush1.msra.mxu0 %v1595
    %1641 = vmatprep.subr.mxu0 %v1599
    %1642 = vmatpush1.msra.mxu0 %v1598
    %1643 = vmatprep.subr.mxu0 %v1602
    %1644 = vmatpush1.msra.mxu0 %v1601
    %1645 = vmatprep.subr.mxu0 %v1605
    %1646 = vmatpush1.msra.mxu0 %v1604
    %1647 = vmatprep.subr.mxu0 %v1608
    %1648 = vmatpush1.msra.mxu0 %v1607
    %1649 = vmatprep.subr.mxu0 %v1611
    %1650 = vmatpush1.msra.mxu0 %v1610
    %1651 = vmatprep.subr.mxu0 %v1614
    %1652 = vmatpush1.msra.mxu0 %v1613
    %1653 = vmatprep.subr.mxu0 %v1617
    %1654 = vmatpush1.msra.mxu0 %v1616
    %1655 = vmatprep.subr.mxu0 %v1620
    %1656 = vmatpush1.msra.mxu0 %v1619
    %1657 = vmatprep.subr.mxu0 %v1623
    %1658 = vmatpush1.msra.mxu0 %v1622
    %1659 = vmatprep.subr.mxu0 %v1626
    %1660 = vmatpush1.msra.mxu0 %v1625
    %1661 = vmatprep.subr.mxu0 %v1629
    %1662 = vmatpush1.msra.mxu0 %v1628
    %1663 = vmatprep.subr.mxu0 0.0
    %1664 = vmatpush1.msra.mxu0 0.0
    %1665 = vmatprep.subr.mxu0 0.0
    %1666 = vmatpush1.msra.mxu0 0.0
    %1667 = vmatprep.subr.mxu0 0.0
    %1668 = vmatpush1.msra.mxu0 0.0
    %1669 = vmatprep.subr.mxu0 0.0
    %1670 = vmatpush1.msra.mxu0 0.0
    %1671 = vmatprep.subr.mxu0 0.0
    %1672 = vmatpush1.msra.mxu0 0.0
    %1673 = vmatprep.subr.mxu0 0.0
    %1674 = vmatpush1.msra.mxu0 0.0
    %1675 = vmatprep.subr.mxu0 0.0
    %1676 = vmatpush1.msra.mxu0 0.0
    %1677 = vmatprep.subr.mxu0 0.0
    %1678 = vmatpush1.msra.mxu0 0.0
    %1679 = vmatprep.subr.mxu0 0.0
    %1680 = vmatpush1.msra.mxu0 0.0
    %1681 = vmatprep.subr.mxu0 0.0
    %1682 = vmatpush1.msra.mxu0 0.0
    %1683 = vmatprep.subr.mxu0 0.0
    %1684 = vmatpush1.msra.mxu0 0.0
    %1685 = vmatprep.subr.mxu0 0.0
    %1686 = vmatpush1.msra.mxu0 0.0
    %1687 = vmatprep.subr.mxu0 0.0
    %1688 = vmatpush1.msra.mxu0 0.0
    %1689 = vmatprep.subr.mxu0 0.0
    %1690 = vmatpush1.msra.mxu0 0.0
    %1691 = vmatprep.subr.mxu0 0.0
    %1692 = vmatpush1.msra.mxu0 0.0
    %1693 = vmatprep.subr.mxu0 0.0
    %1694 = vmatpush1.msra.mxu0 0.0
    %1695 = vmatprep.mubr.f32.mxu0 0.0
    %1696 = vmatmul.mubr.f32.gmra.mrb[0].mxu0 %v1576
    %v1697 = vpop.f32.mrb[0].mxu0
    %v1698 = vadd.f32 0.0, %v1697
    %v1699 = vpop.f32.mrb[0].mxu0
    %v1700 = vadd.f32 0.0, %v1699
    %1701 = vdwg.mxu0
    %1702 = vmatprep.subr.mxu0 0.0
    %1703 = vmatpush1.msra.mxu0 %v1585
    %1704 = vmatprep.subr.mxu0 0.0
    %1705 = vmatpush1.msra.mxu0 %v1588
    %1706 = vmatprep.subr.mxu0 0.0
    %1707 = vmatpush1.msra.mxu0 %v1591
    %1708 = vmatprep.subr.mxu0 0.0
    %1709 = vmatpush1.msra.mxu0 %v1594
    %1710 = vmatprep.subr.mxu0 0.0
    %1711 = vmatpush1.msra.mxu0 %v1597
    %1712 = vmatprep.subr.mxu0 0.0
    %1713 = vmatpush1.msra.mxu0 %v1600
    %1714 = vmatprep.subr.mxu0 0.0
    %1715 = vmatpush1.msra.mxu0 %v1603
    %1716 = vmatprep.subr.mxu0 0.0
    %1717 = vmatpush1.msra.mxu0 %v1606
    %1718 = vmatprep.subr.mxu0 0.0
    %1719 = vmatpush1.msra.mxu0 %v1609
    %1720 = vmatprep.subr.mxu0 0.0
    %1721 = vmatpush1.msra.mxu0 %v1612
    %1722 = vmatprep.subr.mxu0 0.0
    %1723 = vmatpush1.msra.mxu0 %v1615
    %1724 = vmatprep.subr.mxu0 0.0
    %1725 = vmatpush1.msra.mxu0 %v1618
    %1726 = vmatprep.subr.mxu0 0.0
    %1727 = vmatpush1.msra.mxu0 %v1621
    %1728 = vmatprep.subr.mxu0 0.0
    %1729 = vmatpush1.msra.mxu0 %v1624
    %1730 = vmatprep.subr.mxu0 0.0
    %1731 = vmatpush1.msra.mxu0 %v1627
    %1732 = vmatprep.subr.mxu0 0.0
    %1733 = vmatpush1.msra.mxu0 %v1630
    %1734 = vmatprep.subr.mxu0 0.0
    %1735 = vmatpush1.msra.mxu0 0.0
    %1736 = vmatprep.subr.mxu0 0.0
    %1737 = vmatpush1.msra.mxu0 0.0
    %1738 = vmatprep.subr.mxu0 0.0
    %1739 = vmatpush1.msra.mxu0 0.0
    %1740 = vmatprep.subr.mxu0 0.0
    %1741 = vmatpush1.msra.mxu0 0.0
    %1742 = vmatprep.subr.mxu0 0.0
    %1743 = vmatpush1.msra.mxu0 0.0
    %1744 = vmatprep.subr.mxu0 0.0
    %1745 = vmatpush1.msra.mxu0 0.0
    %1746 = vmatprep.subr.mxu0 0.0
    %1747 = vmatpush1.msra.mxu0 0.0
    %1748 = vmatprep.subr.mxu0 0.0
    %1749 = vmatpush1.msra.mxu0 0.0
    %1750 = vmatprep.subr.mxu0 0.0
    %1751 = vmatpush1.msra.mxu0 0.0
    %1752 = vmatprep.subr.mxu0 0.0
    %1753 = vmatpush1.msra.mxu0 0.0
    %1754 = vmatprep.subr.mxu0 0.0
    %1755 = vmatpush1.msra.mxu0 0.0
    %1756 = vmatprep.subr.mxu0 0.0
    %1757 = vmatpush1.msra.mxu0 0.0
    %1758 = vmatprep.subr.mxu0 0.0
    %1759 = vmatpush1.msra.mxu0 0.0
    %1760 = vmatprep.subr.mxu0 0.0
    %1761 = vmatpush1.msra.mxu0 0.0
    %1762 = vmatprep.subr.mxu0 0.0
    %1763 = vmatpush1.msra.mxu0 0.0
    %1764 = vmatprep.subr.mxu0 0.0
    %1765 = vmatpush1.msra.mxu0 0.0
    %1766 = vmatprep.mubr.f32.mxu0 0.0
    %1767 = vmatmul.mubr.f32.gmra.mrb[0].mxu0 %v1576
    %v1768 = vpop.f32.mrb[0].mxu0
    %v1769 = vadd.f32 0.0, %v1768
    %v1770 = vpop.f32.mrb[0].mxu0
    %1771 = vdwg.mxu0
    %v1772 = vadd.f32 %v1580, %v1698
    %v1773 = vmul.f32 %v1772, 0.5
    %v1774 = vtanh.pop %v1773
    %v1775 = vmul.f32 %v1774, 0.5
    %v1776 = vadd.f32 %v1775, 0.5
    %v1777 = vadd.f32 %v1581, %v1700
    %v1778 = vmul.f32 %v1777, 0.5
    %v1779 = vtanh.pop %v1778
    %v1780 = vmul.f32 %v1779, 0.5
    %v1781 = vadd.f32 %v1780, 0.5
    %v1782 = vadd.f32 %v1769, %v459
    %v1783 = vmul.f32 %v1776, %v1782
    %v1784 = vadd.f32 %v1582, %v1783
    %v1785 = vtanh.pop %v1784
    %v1786 = vsub.f32 1.0, %v1781
    %v1787 = vmul.f32 %v1786, %v1785
    %v1788 = vmul.f32 %v1781, %v1576
    %v1789 = vadd.f32 %v1787, %v1788
    %s1790 = scalar_lea.vmem [#allocation3], 40
    %v1791 = vld [vmem:[%s1790] sm:$0xff]
    %v1792 = vmul.f32 %v1791, %v1789
    %v1793 = vsub.f32 1.0, %v1791
    %v1794 = vmul.f32 %v1793, 0.0
    %v1795 = vadd.f32 %v1792, %v1794
    %s1796 = scalar_lea.vmem %s6, 40
    %1797 = vst [vmem:[%s1796] sm:$0xff] %v1795
    %v1798 = vsub.f32 %v1789, %v1576
    %v1799 = vmul.f32 %v1791, %v1798
    %v1800 = vadd.f32 %v1576, %v1799
    %s1801 = smul.u32 6, 3
    %s1802 = smul.addr %s1801, 8
    %s1803 = scalar_lea.vmem [#allocation2], %s1802
    %v1804 = vld [vmem:[%s1803] sm:$0xff]
    %v1805 = vld [vmem:[%s1803 + $0x8] sm:$0xff]
    %v1806 = vld [vmem:[%s1803 + $0x10] sm:$0xff]
    %v1807 = vld [vmem:[#allocation6] sm:$0xff]
    %v1808 = vld [vmem:[#allocation6 + $0x8] sm:$0xff]
    %v1809 = vld [vmem:[#allocation6 + $0x10] sm:$0xff]
    %v1810 = vld [vmem:[#allocation6 + $0x18] sm:$0xff]
    %v1811 = vld [vmem:[#allocation6 + $0x20] sm:$0xff]
    %v1812 = vld [vmem:[#allocation6 + $0x28] sm:$0xff]
    %v1813 = vld [vmem:[#allocation6 + $0x30] sm:$0xff]
    %v1814 = vld [vmem:[#allocation6 + $0x38] sm:$0xff]
    %v1815 = vld [vmem:[#allocation6 + $0x40] sm:$0xff]
    %v1816 = vld [vmem:[#allocation6 + $0x48] sm:$0xff]
    %v1817 = vld [vmem:[#allocation6 + $0x50] sm:$0xff]
    %v1818 = vld [vmem:[#allocation6 + $0x58] sm:$0xff]
    %v1819 = vld [vmem:[#allocation6 + $0x60] sm:$0xff]
    %v1820 = vld [vmem:[#allocation6 + $0x68] sm:$0xff]
    %v1821 = vld [vmem:[#allocation6 + $0x70] sm:$0xff]
    %v1822 = vld [vmem:[#allocation6 + $0x78] sm:$0xff]
    %v1823 = vld [vmem:[#allocation6 + $0x80] sm:$0xff]
    %v1824 = vld [vmem:[#allocation6 + $0x88] sm:$0xff]
    %v1825 = vld [vmem:[#allocation6 + $0x90] sm:$0xff]
    %v1826 = vld [vmem:[#allocation6 + $0x98] sm:$0xff]
    %v1827 = vld [vmem:[#allocation6 + $0xa0] sm:$0xff]
    %v1828 = vld [vmem:[#allocation6 + $0xa8] sm:$0xff]
    %v1829 = vld [vmem:[#allocation6 + $0xb0] sm:$0xff]
    %v1830 = vld [vmem:[#allocation6 + $0xb8] sm:$0xff]
    %v1831 = vld [vmem:[#allocation6 + $0xc0] sm:$0xff]
    %v1832 = vld [vmem:[#allocation6 + $0xc8] sm:$0xff]
    %v1833 = vld [vmem:[#allocation6 + $0xd0] sm:$0xff]
    %v1834 = vld [vmem:[#allocation6 + $0xd8] sm:$0xff]
    %v1835 = vld [vmem:[#allocation6 + $0xe0] sm:$0xff]
    %v1836 = vld [vmem:[#allocation6 + $0xe8] sm:$0xff]
    %v1837 = vld [vmem:[#allocation6 + $0xf0] sm:$0xff]
    %v1838 = vld [vmem:[#allocation6 + $0xf8] sm:$0xff]
    %v1839 = vld [vmem:[#allocation6 + $0x100] sm:$0xff]
    %v1840 = vld [vmem:[#allocation6 + $0x108] sm:$0xff]
    %v1841 = vld [vmem:[#allocation6 + $0x110] sm:$0xff]
    %v1842 = vld [vmem:[#allocation6 + $0x118] sm:$0xff]
    %v1843 = vld [vmem:[#allocation6 + $0x120] sm:$0xff]
    %v1844 = vld [vmem:[#allocation6 + $0x128] sm:$0xff]
    %v1845 = vld [vmem:[#allocation6 + $0x130] sm:$0xff]
    %v1846 = vld [vmem:[#allocation6 + $0x138] sm:$0xff]
    %v1847 = vld [vmem:[#allocation6 + $0x140] sm:$0xff]
    %v1848 = vld [vmem:[#allocation6 + $0x148] sm:$0xff]
    %v1849 = vld [vmem:[#allocation6 + $0x150] sm:$0xff]
    %v1850 = vld [vmem:[#allocation6 + $0x158] sm:$0xff]
    %v1851 = vld [vmem:[#allocation6 + $0x160] sm:$0xff]
    %v1852 = vld [vmem:[#allocation6 + $0x168] sm:$0xff]
    %v1853 = vld [vmem:[#allocation6 + $0x170] sm:$0xff]
    %v1854 = vld [vmem:[#allocation6 + $0x178] sm:$0xff]
    %1855 = vmatprep.subr.mxu0 %v1808
    %1856 = vmatpush1.msra.mxu0 %v1807
    %1857 = vmatprep.subr.mxu0 %v1811
    %1858 = vmatpush1.msra.mxu0 %v1810
    %1859 = vmatprep.subr.mxu0 %v1814
    %1860 = vmatpush1.msra.mxu0 %v1813
    %1861 = vmatprep.subr.mxu0 %v1817
    %1862 = vmatpush1.msra.mxu0 %v1816
    %1863 = vmatprep.subr.mxu0 %v1820
    %1864 = vmatpush1.msra.mxu0 %v1819
    %1865 = vmatprep.subr.mxu0 %v1823
    %1866 = vmatpush1.msra.mxu0 %v1822
    %1867 = vmatprep.subr.mxu0 %v1826
    %1868 = vmatpush1.msra.mxu0 %v1825
    %1869 = vmatprep.subr.mxu0 %v1829
    %1870 = vmatpush1.msra.mxu0 %v1828
    %1871 = vmatprep.subr.mxu0 %v1832
    %1872 = vmatpush1.msra.mxu0 %v1831
    %1873 = vmatprep.subr.mxu0 %v1835
    %1874 = vmatpush1.msra.mxu0 %v1834
    %1875 = vmatprep.subr.mxu0 %v1838
    %1876 = vmatpush1.msra.mxu0 %v1837
    %1877 = vmatprep.subr.mxu0 %v1841
    %1878 = vmatpush1.msra.mxu0 %v1840
    %1879 = vmatprep.subr.mxu0 %v1844
    %1880 = vmatpush1.msra.mxu0 %v1843
    %1881 = vmatprep.subr.mxu0 %v1847
    %1882 = vmatpush1.msra.mxu0 %v1846
    %1883 = vmatprep.subr.mxu0 %v1850
    %1884 = vmatpush1.msra.mxu0 %v1849
    %1885 = vmatprep.subr.mxu0 %v1853
    %1886 = vmatpush1.msra.mxu0 %v1852
    %1887 = vmatprep.subr.mxu0 0.0
    %1888 = vmatpush1.msra.mxu0 0.0
    %1889 = vmatprep.subr.mxu0 0.0
    %1890 = vmatpush1.msra.mxu0 0.0
    %1891 = vmatprep.subr.mxu0 0.0
    %1892 = vmatpush1.msra.mxu0 0.0
    %1893 = vmatprep.subr.mxu0 0.0
    %1894 = vmatpush1.msra.mxu0 0.0
    %1895 = vmatprep.subr.mxu0 0.0
    %1896 = vmatpush1.msra.mxu0 0.0
    %1897 = vmatprep.subr.mxu0 0.0
    %1898 = vmatpush1.msra.mxu0 0.0
    %1899 = vmatprep.subr.mxu0 0.0
    %1900 = vmatpush1.msra.mxu0 0.0
    %1901 = vmatprep.subr.mxu0 0.0
    %1902 = vmatpush1.msra.mxu0 0.0
    %1903 = vmatprep.subr.mxu0 0.0
    %1904 = vmatpush1.msra.mxu0 0.0
    %1905 = vmatprep.subr.mxu0 0.0
    %1906 = vmatpush1.msra.mxu0 0.0
    %1907 = vmatprep.subr.mxu0 0.0
    %1908 = vmatpush1.msra.mxu0 0.0
    %1909 = vmatprep.subr.mxu0 0.0
    %1910 = vmatpush1.msra.mxu0 0.0
    %1911 = vmatprep.subr.mxu0 0.0
    %1912 = vmatpush1.msra.mxu0 0.0
    %1913 = vmatprep.subr.mxu0 0.0
    %1914 = vmatpush1.msra.mxu0 0.0
    %1915 = vmatprep.subr.mxu0 0.0
    %1916 = vmatpush1.msra.mxu0 0.0
    %1917 = vmatprep.subr.mxu0 0.0
    %1918 = vmatpush1.msra.mxu0 0.0
    %1919 = vmatprep.mubr.f32.mxu0 0.0
    %1920 = vmatmul.mubr.f32.gmra.mrb[0].mxu0 %v1800
    %v1921 = vpop.f32.mrb[0].mxu0
    %v1922 = vadd.f32 0.0, %v1921
    %v1923 = vpop.f32.mrb[0].mxu0
    %v1924 = vadd.f32 0.0, %v1923
    %1925 = vdwg.mxu0
    %1926 = vmatprep.subr.mxu0 0.0
    %1927 = vmatpush1.msra.mxu0 %v1809
    %1928 = vmatprep.subr.mxu0 0.0
    %1929 = vmatpush1.msra.mxu0 %v1812
    %1930 = vmatprep.subr.mxu0 0.0
    %1931 = vmatpush1.msra.mxu0 %v1815
    %1932 = vmatprep.subr.mxu0 0.0
    %1933 = vmatpush1.msra.mxu0 %v1818
    %1934 = vmatprep.subr.mxu0 0.0
    %1935 = vmatpush1.msra.mxu0 %v1821
    %1936 = vmatprep.subr.mxu0 0.0
    %1937 = vmatpush1.msra.mxu0 %v1824
    %1938 = vmatprep.subr.mxu0 0.0
    %1939 = vmatpush1.msra.mxu0 %v1827
    %1940 = vmatprep.subr.mxu0 0.0
    %1941 = vmatpush1.msra.mxu0 %v1830
    %1942 = vmatprep.subr.mxu0 0.0
    %1943 = vmatpush1.msra.mxu0 %v1833
    %1944 = vmatprep.subr.mxu0 0.0
    %1945 = vmatpush1.msra.mxu0 %v1836
    %1946 = vmatprep.subr.mxu0 0.0
    %1947 = vmatpush1.msra.mxu0 %v1839
    %1948 = vmatprep.subr.mxu0 0.0
    %1949 = vmatpush1.msra.mxu0 %v1842
    %1950 = vmatprep.subr.mxu0 0.0
    %1951 = vmatpush1.msra.mxu0 %v1845
    %1952 = vmatprep.subr.mxu0 0.0
    %1953 = vmatpush1.msra.mxu0 %v1848
    %1954 = vmatprep.subr.mxu0 0.0
    %1955 = vmatpush1.msra.mxu0 %v1851
    %1956 = vmatprep.subr.mxu0 0.0
    %1957 = vmatpush1.msra.mxu0 %v1854
    %1958 = vmatprep.subr.mxu0 0.0
    %1959 = vmatpush1.msra.mxu0 0.0
    %1960 = vmatprep.subr.mxu0 0.0
    %1961 = vmatpush1.msra.mxu0 0.0
    %1962 = vmatprep.subr.mxu0 0.0
    %1963 = vmatpush1.msra.mxu0 0.0
    %1964 = vmatprep.subr.mxu0 0.0
    %1965 = vmatpush1.msra.mxu0 0.0
    %1966 = vmatprep.subr.mxu0 0.0
    %1967 = vmatpush1.msra.mxu0 0.0
    %1968 = vmatprep.subr.mxu0 0.0
    %1969 = vmatpush1.msra.mxu0 0.0
    %1970 = vmatprep.subr.mxu0 0.0
    %1971 = vmatpush1.msra.mxu0 0.0
    %1972 = vmatprep.subr.mxu0 0.0
    %1973 = vmatpush1.msra.mxu0 0.0
    %1974 = vmatprep.subr.mxu0 0.0
    %1975 = vmatpush1.msra.mxu0 0.0
    %1976 = vmatprep.subr.mxu0 0.0
    %1977 = vmatpush1.msra.mxu0 0.0
    %1978 = vmatprep.subr.mxu0 0.0
    %1979 = vmatpush1.msra.mxu0 0.0
    %1980 = vmatprep.subr.mxu0 0.0
    %1981 = vmatpush1.msra.mxu0 0.0
    %1982 = vmatprep.subr.mxu0 0.0
    %1983 = vmatpush1.msra.mxu0 0.0
    %1984 = vmatprep.subr.mxu0 0.0
    %1985 = vmatpush1.msra.mxu0 0.0
    %1986 = vmatprep.subr.mxu0 0.0
    %1987 = vmatpush1.msra.mxu0 0.0
    %1988 = vmatprep.subr.mxu0 0.0
    %1989 = vmatpush1.msra.mxu0 0.0
    %1990 = vmatprep.mubr.f32.mxu0 0.0
    %1991 = vmatmul.mubr.f32.gmra.mrb[0].mxu0 %v1800
    %v1992 = vpop.f32.mrb[0].mxu0
    %v1993 = vadd.f32 0.0, %v1992
    %v1994 = vpop.f32.mrb[0].mxu0
    %1995 = vdwg.mxu0
    %v1996 = vadd.f32 %v1804, %v1922
    %v1997 = vmul.f32 %v1996, 0.5
    %v1998 = vtanh.pop %v1997
    %v1999 = vmul.f32 %v1998, 0.5
    %v2000 = vadd.f32 %v1999, 0.5
    %v2001 = vadd.f32 %v1805, %v1924
    %v2002 = vmul.f32 %v2001, 0.5
    %v2003 = vtanh.pop %v2002
    %v2004 = vmul.f32 %v2003, 0.5
    %v2005 = vadd.f32 %v2004, 0.5
    %v2006 = vadd.f32 %v1993, %v459
    %v2007 = vmul.f32 %v2000, %v2006
    %v2008 = vadd.f32 %v1806, %v2007
    %v2009 = vtanh.pop %v2008
    %v2010 = vsub.f32 1.0, %v2005
    %v2011 = vmul.f32 %v2010, %v2009
    %v2012 = vmul.f32 %v2005, %v1800
    %v2013 = vadd.f32 %v2011, %v2012
    %s2014 = scalar_lea.vmem [#allocation3], 48
    %v2015 = vld [vmem:[%s2014] sm:$0xff]
    %v2016 = vmul.f32 %v2015, %v2013
    %v2017 = vsub.f32 1.0, %v2015
    %v2018 = vmul.f32 %v2017, 0.0
    %v2019 = vadd.f32 %v2016, %v2018
    %s2020 = scalar_lea.vmem %s6, 48
    %2021 = vst [vmem:[%s2020] sm:$0xff] %v2019
    %v2022 = vsub.f32 %v2013, %v1800
    %v2023 = vmul.f32 %v2015, %v2022
    %v2024 = vadd.f32 %v1800, %v2023
    %s2025 = smul.u32 7, 3
    %s2026 = smul.addr %s2025, 8
    %s2027 = scalar_lea.vmem [#allocation2], %s2026
    %v2028 = vld [vmem:[%s2027] sm:$0xff]
    %v2029 = vld [vmem:[%s2027 + $0x8] sm:$0xff]
    %v2030 = vld [vmem:[%s2027 + $0x10] sm:$0xff]
    %v2031 = vld [vmem:[#allocation6] sm:$0xff]
    %v2032 = vld [vmem:[#allocation6 + $0x8] sm:$0xff]
    %v2033 = vld [vmem:[#allocation6 + $0x10] sm:$0xff]
    %v2034 = vld [vmem:[#allocation6 + $0x18] sm:$0xff]
    %v2035 = vld [vmem:[#allocation6 + $0x20] sm:$0xff]
    %v2036 = vld [vmem:[#allocation6 + $0x28] sm:$0xff]
    %v2037 = vld [vmem:[#allocation6 + $0x30] sm:$0xff]
    %v2038 = vld [vmem:[#allocation6 + $0x38] sm:$0xff]
    %v2039 = vld [vmem:[#allocation6 + $0x40] sm:$0xff]
    %v2040 = vld [vmem:[#allocation6 + $0x48] sm:$0xff]
    %v2041 = vld [vmem:[#allocation6 + $0x50] sm:$0xff]
    %v2042 = vld [vmem:[#allocation6 + $0x58] sm:$0xff]
    %v2043 = vld [vmem:[#allocation6 + $0x60] sm:$0xff]
    %v2044 = vld [vmem:[#allocation6 + $0x68] sm:$0xff]
    %v2045 = vld [vmem:[#allocation6 + $0x70] sm:$0xff]
    %v2046 = vld [vmem:[#allocation6 + $0x78] sm:$0xff]
    %v2047 = vld [vmem:[#allocation6 + $0x80] sm:$0xff]
    %v2048 = vld [vmem:[#allocation6 + $0x88] sm:$0xff]
    %v2049 = vld [vmem:[#allocation6 + $0x90] sm:$0xff]
    %v2050 = vld [vmem:[#allocation6 + $0x98] sm:$0xff]
    %v2051 = vld [vmem:[#allocation6 + $0xa0] sm:$0xff]
    %v2052 = vld [vmem:[#allocation6 + $0xa8] sm:$0xff]
    %v2053 = vld [vmem:[#allocation6 + $0xb0] sm:$0xff]
    %v2054 = vld [vmem:[#allocation6 + $0xb8] sm:$0xff]
    %v2055 = vld [vmem:[#allocation6 + $0xc0] sm:$0xff]
    %v2056 = vld [vmem:[#allocation6 + $0xc8] sm:$0xff]
    %v2057 = vld [vmem:[#allocation6 + $0xd0] sm:$0xff]
    %v2058 = vld [vmem:[#allocation6 + $0xd8] sm:$0xff]
    %v2059 = vld [vmem:[#allocation6 + $0xe0] sm:$0xff]
    %v2060 = vld [vmem:[#allocation6 + $0xe8] sm:$0xff]
    %v2061 = vld [vmem:[#allocation6 + $0xf0] sm:$0xff]
    %v2062 = vld [vmem:[#allocation6 + $0xf8] sm:$0xff]
    %v2063 = vld [vmem:[#allocation6 + $0x100] sm:$0xff]
    %v2064 = vld [vmem:[#allocation6 + $0x108] sm:$0xff]
    %v2065 = vld [vmem:[#allocation6 + $0x110] sm:$0xff]
    %v2066 = vld [vmem:[#allocation6 + $0x118] sm:$0xff]
    %v2067 = vld [vmem:[#allocation6 + $0x120] sm:$0xff]
    %v2068 = vld [vmem:[#allocation6 + $0x128] sm:$0xff]
    %v2069 = vld [vmem:[#allocation6 + $0x130] sm:$0xff]
    %v2070 = vld [vmem:[#allocation6 + $0x138] sm:$0xff]
    %v2071 = vld [vmem:[#allocation6 + $0x140] sm:$0xff]
    %v2072 = vld [vmem:[#allocation6 + $0x148] sm:$0xff]
    %v2073 = vld [vmem:[#allocation6 + $0x150] sm:$0xff]
    %v2074 = vld [vmem:[#allocation6 + $0x158] sm:$0xff]
    %v2075 = vld [vmem:[#allocation6 + $0x160] sm:$0xff]
    %v2076 = vld [vmem:[#allocation6 + $0x168] sm:$0xff]
    %v2077 = vld [vmem:[#allocation6 + $0x170] sm:$0xff]
    %v2078 = vld [vmem:[#allocation6 + $0x178] sm:$0xff]
    %2079 = vmatprep.subr.mxu0 %v2032
    %2080 = vmatpush1.msra.mxu0 %v2031
    %2081 = vmatprep.subr.mxu0 %v2035
    %2082 = vmatpush1.msra.mxu0 %v2034
    %2083 = vmatprep.subr.mxu0 %v2038
    %2084 = vmatpush1.msra.mxu0 %v2037
    %2085 = vmatprep.subr.mxu0 %v2041
    %2086 = vmatpush1.msra.mxu0 %v2040
    %2087 = vmatprep.subr.mxu0 %v2044
    %2088 = vmatpush1.msra.mxu0 %v2043
    %2089 = vmatprep.subr.mxu0 %v2047
    %2090 = vmatpush1.msra.mxu0 %v2046
    %2091 = vmatprep.subr.mxu0 %v2050
    %2092 = vmatpush1.msra.mxu0 %v2049
    %2093 = vmatprep.subr.mxu0 %v2053
    %2094 = vmatpush1.msra.mxu0 %v2052
    %2095 = vmatprep.subr.mxu0 %v2056
    %2096 = vmatpush1.msra.mxu0 %v2055
    %2097 = vmatprep.subr.mxu0 %v2059
    %2098 = vmatpush1.msra.mxu0 %v2058
    %2099 = vmatprep.subr.mxu0 %v2062
    %2100 = vmatpush1.msra.mxu0 %v2061
    %2101 = vmatprep.subr.mxu0 %v2065
    %2102 = vmatpush1.msra.mxu0 %v2064
    %2103 = vmatprep.subr.mxu0 %v2068
    %2104 = vmatpush1.msra.mxu0 %v2067
    %2105 = vmatprep.subr.mxu0 %v2071
    %2106 = vmatpush1.msra.mxu0 %v2070
    %2107 = vmatprep.subr.mxu0 %v2074
    %2108 = vmatpush1.msra.mxu0 %v2073
    %2109 = vmatprep.subr.mxu0 %v2077
    %2110 = vmatpush1.msra.mxu0 %v2076
    %2111 = vmatprep.subr.mxu0 0.0
    %2112 = vmatpush1.msra.mxu0 0.0
    %2113 = vmatprep.subr.mxu0 0.0
    %2114 = vmatpush1.msra.mxu0 0.0
    %2115 = vmatprep.subr.mxu0 0.0
    %2116 = vmatpush1.msra.mxu0 0.0
    %2117 = vmatprep.subr.mxu0 0.0
    %2118 = vmatpush1.msra.mxu0 0.0
    %2119 = vmatprep.subr.mxu0 0.0
    %2120 = vmatpush1.msra.mxu0 0.0
    %2121 = vmatprep.subr.mxu0 0.0
    %2122 = vmatpush1.msra.mxu0 0.0
    %2123 = vmatprep.subr.mxu0 0.0
    %2124 = vmatpush1.msra.mxu0 0.0
    %2125 = vmatprep.subr.mxu0 0.0
    %2126 = vmatpush1.msra.mxu0 0.0
    %2127 = vmatprep.subr.mxu0 0.0
    %2128 = vmatpush1.msra.mxu0 0.0
    %2129 = vmatprep.subr.mxu0 0.0
    %2130 = vmatpush1.msra.mxu0 0.0
    %2131 = vmatprep.subr.mxu0 0.0
    %2132 = vmatpush1.msra.mxu0 0.0
    %2133 = vmatprep.subr.mxu0 0.0
    %2134 = vmatpush1.msra.mxu0 0.0
    %2135 = vmatprep.subr.mxu0 0.0
    %2136 = vmatpush1.msra.mxu0 0.0
    %2137 = vmatprep.subr.mxu0 0.0
    %2138 = vmatpush1.msra.mxu0 0.0
    %2139 = vmatprep.subr.mxu0 0.0
    %2140 = vmatpush1.msra.mxu0 0.0
    %2141 = vmatprep.subr.mxu0 0.0
    %2142 = vmatpush1.msra.mxu0 0.0
    %2143 = vmatprep.mubr.f32.mxu0 0.0
    %2144 = vmatmul.mubr.f32.gmra.mrb[0].mxu0 %v2024
    %v2145 = vpop.f32.mrb[0].mxu0
    %v2146 = vadd.f32 0.0, %v2145
    %v2147 = vpop.f32.mrb[0].mxu0
    %v2148 = vadd.f32 0.0, %v2147
    %2149 = vdwg.mxu0
    %2150 = vmatprep.subr.mxu0 0.0
    %2151 = vmatpush1.msra.mxu0 %v2033
    %2152 = vmatprep.subr.mxu0 0.0
    %2153 = vmatpush1.msra.mxu0 %v2036
    %2154 = vmatprep.subr.mxu0 0.0
    %2155 = vmatpush1.msra.mxu0 %v2039
    %2156 = vmatprep.subr.mxu0 0.0
    %2157 = vmatpush1.msra.mxu0 %v2042
    %2158 = vmatprep.subr.mxu0 0.0
    %2159 = vmatpush1.msra.mxu0 %v2045
    %2160 = vmatprep.subr.mxu0 0.0
    %2161 = vmatpush1.msra.mxu0 %v2048
    %2162 = vmatprep.subr.mxu0 0.0
    %2163 = vmatpush1.msra.mxu0 %v2051
    %2164 = vmatprep.subr.mxu0 0.0
    %2165 = vmatpush1.msra.mxu0 %v2054
    %2166 = vmatprep.subr.mxu0 0.0
    %2167 = vmatpush1.msra.mxu0 %v2057
    %2168 = vmatprep.subr.mxu0 0.0
    %2169 = vmatpush1.msra.mxu0 %v2060
    %2170 = vmatprep.subr.mxu0 0.0
    %2171 = vmatpush1.msra.mxu0 %v2063
    %2172 = vmatprep.subr.mxu0 0.0
    %2173 = vmatpush1.msra.mxu0 %v2066
    %2174 = vmatprep.subr.mxu0 0.0
    %2175 = vmatpush1.msra.mxu0 %v2069
    %2176 = vmatprep.subr.mxu0 0.0
    %2177 = vmatpush1.msra.mxu0 %v2072
    %2178 = vmatprep.subr.mxu0 0.0
    %2179 = vmatpush1.msra.mxu0 %v2075
    %2180 = vmatprep.subr.mxu0 0.0
    %2181 = vmatpush1.msra.mxu0 %v2078
    %2182 = vmatprep.subr.mxu0 0.0
    %2183 = vmatpush1.msra.mxu0 0.0
    %2184 = vmatprep.subr.mxu0 0.0
    %2185 = vmatpush1.msra.mxu0 0.0
    %2186 = vmatprep.subr.mxu0 0.0
    %2187 = vmatpush1.msra.mxu0 0.0
    %2188 = vmatprep.subr.mxu0 0.0
    %2189 = vmatpush1.msra.mxu0 0.0
    %2190 = vmatprep.subr.mxu0 0.0
    %2191 = vmatpush1.msra.mxu0 0.0
    %2192 = vmatprep.subr.mxu0 0.0
    %2193 = vmatpush1.msra.mxu0 0.0
    %2194 = vmatprep.subr.mxu0 0.0
    %2195 = vmatpush1.msra.mxu0 0.0
    %2196 = vmatprep.subr.mxu0 0.0
    %2197 = vmatpush1.msra.mxu0 0.0
    %2198 = vmatprep.subr.mxu0 0.0
    %2199 = vmatpush1.msra.mxu0 0.0
    %2200 = vmatprep.subr.mxu0 0.0
    %2201 = vmatpush1.msra.mxu0 0.0
    %2202 = vmatprep.subr.mxu0 0.0
    %2203 = vmatpush1.msra.mxu0 0.0
    %2204 = vmatprep.subr.mxu0 0.0
    %2205 = vmatpush1.msra.mxu0 0.0
    %2206 = vmatprep.subr.mxu0 0.0
    %2207 = vmatpush1.msra.mxu0 0.0
    %2208 = vmatprep.subr.mxu0 0.0
    %2209 = vmatpush1.msra.mxu0 0.0
    %2210 = vmatprep.subr.mxu0 0.0
    %2211 = vmatpush1.msra.mxu0 0.0
    %2212 = vmatprep.subr.mxu0 0.0
    %2213 = vmatpush1.msra.mxu0 0.0
    %2214 = vmatprep.mubr.f32.mxu0 0.0
    %2215 = vmatmul.mubr.f32.gmra.mrb[0].mxu0 %v2024
    %v2216 = vpop.f32.mrb[0].mxu0
    %v2217 = vadd.f32 0.0, %v2216
    %v2218 = vpop.f32.mrb[0].mxu0
    %2219 = vdwg.mxu0
    %v2220 = vadd.f32 %v2028, %v2146
    %v2221 = vmul.f32 %v2220, 0.5
    %v2222 = vtanh.pop %v2221
    %v2223 = vmul.f32 %v2222, 0.5
    %v2224 = vadd.f32 %v2223, 0.5
    %v2225 = vadd.f32 %v2029, %v2148
    %v2226 = vmul.f32 %v2225, 0.5
    %v2227 = vtanh.pop %v2226
    %v2228 = vmul.f32 %v2227, 0.5
    %v2229 = vadd.f32 %v2228, 0.5
    %v2230 = vadd.f32 %v2217, %v459
    %v2231 = vmul.f32 %v2224, %v2230
    %v2232 = vadd.f32 %v2030, %v2231
    %v2233 = vtanh.pop %v2232
    %v2234 = vsub.f32 1.0, %v2229
    %v2235 = vmul.f32 %v2234, %v2233
    %v2236 = vmul.f32 %v2229, %v2024
    %v2237 = vadd.f32 %v2235, %v2236
    %s2238 = scalar_lea.vmem [#allocation3], 56
    %v2239 = vld [vmem:[%s2238] sm:$0xff]
    %v2240 = vmul.f32 %v2239, %v2237
    %v2241 = vsub.f32 1.0, %v2239
    %v2242 = vmul.f32 %v2241, 0.0
    %v2243 = vadd.f32 %v2240, %v2242
    %s2244 = scalar_lea.vmem %s6, 56
    %2245 = vst [vmem:[%s2244] sm:$0xff] %v2243
    %v2246 = vsub.f32 %v2237, %v2024
    %v2247 = vmul.f32 %v2239, %v2246
    %v2248 = vadd.f32 %v2024, %v2247
    %2249 = vst [vmem:[%s7] sm:$0xff] %v2248
    // Predicated region
    $region34: #{encoder_forward.1} parent=1 // pred_check
      _
    $region35: #{encoder_forward.1} parent=1 // pred_check_branch
      %2251 = sbr.rel (0) target = $region37
    $region36: #{encoder_forward.1} parent=1 // pred_region
      _
    $region37: #{encoder_forward.1} parent=1 // pred_fallthru
      _
    // Predicated region
    $region38: #{encoder_forward.1} parent=1 // pred_check
      _
    $region39: #{encoder_forward.1} parent=1 // pred_check_branch
      %2253 = sbr.rel (0) target = $region41
    $region40: #{encoder_forward.1} parent=1 // pred_region
      _
    $region41: #{encoder_forward.1} parent=1 // pred_fallthru
      _
    // Predicated region
    $region42: #{encoder_forward.1} parent=1 // pred_check
      _
    $region43: #{encoder_forward.1} parent=1 // pred_check_branch
      %2255 = sbr.rel (0) target = $region45
    $region44: #{encoder_forward.1} parent=1 // pred_region
      _
    $region45: #{encoder_forward.1} parent=1 // pred_fallthru
      _
    // Predicated region
    $region46: #{encoder_forward.1} parent=1 // pred_check
      _
    $region47: #{encoder_forward.1} parent=1 // pred_check_branch
      %2257 = sbr.rel (0) target = $region49
    $region48: #{encoder_forward.1} parent=1 // pred_region
      _
    $region49: #{encoder_forward.1} parent=1 // pred_fallthru
      _
    %2258 = vsyncpa [#allocation5], 1
    %2259 = vsyncpa [#allocation7], 1

</llo_original>
